<compile_context>
chip_gen: v7x
topology: tpu7x:2x2x1
jax: 0.10.0
libtpu: 0.0.40
codegen_flags: <defaults>
</compile_context>

<pallas_src>
import functools

import jax
import jax.numpy as jnp
from jax import lax
from jax.experimental import pallas as pl
from jax.experimental.pallas import tpu as pltpu


def _lstm_kernel(xp_ref, wh_ref, h0_ref, c0_ref,
                 out_ref, hN_ref, cN_ref,
                 h_scr, c_scr,
                 *, hidden, t_chunk, disabled_gate):
    """One grid step = one (batch_tile, t_chunk) block of the recurrence.

    xp_ref : (TB, T_CHUNK, 4H)  precomputed x-projection (+bias), batch-major
    wh_ref : (H, 4H)            fused recurrent weights (resident)
    h0/c0  : (TB, H)            initial state for this batch tile
    out_ref: (TB, T_CHUNK, H)   hidden states for this block (batch-major)
    hN/cN  : (TB, H)            final state (written on the last time chunk)
    h_scr/c_scr: (TB, H) VMEM   carry across time chunks
    """
    H = hidden
    ct = pl.program_id(1)

    @pl.when(ct == 0)
    def _():
        h_scr[...] = h0_ref[...]
        c_scr[...] = c0_ref[...]

    wh = wh_ref[...]          # (H, 4H), hoisted out of the unrolled loop
    h = h_scr[...]            # (TB, H)
    c = c_scr[...]            # (TB, H)

    # Statically unrolled time loop: all indices are Python ints, so every
    # load/store is a static sublane slice (no dynamic-index lowering risk).
    for s in range(t_chunk):
        # Single fused gate matmul: (TB,H) @ (H,4H) -> (TB,4H), f32 accumulate.
        z = xp_ref[:, s, :] + jnp.dot(h, wh, preferred_element_type=jnp.float32)

        # Gate order matches the PyTorch module: input, forget, cell, output.
        i = 1.0 if disabled_gate == 'input' else jax.nn.sigmoid(z[:, 0 * H:1 * H])
        f = 1.0 if disabled_gate == 'forget' else jax.nn.sigmoid(z[:, 1 * H:2 * H])
        g = 1.0 if disabled_gate == 'cell' else jnp.tanh(z[:, 2 * H:3 * H])
        o = 1.0 if disabled_gate == 'output' else jax.nn.sigmoid(z[:, 3 * H:4 * H])

        c = f * c + i * g
        h = o * jnp.tanh(c)

        out_ref[:, s, :] = h.astype(out_ref.dtype)

    h_scr[...] = h
    c_scr[...] = c

    @pl.when(ct == pl.num_programs(1) - 1)
    def _():
        hN_ref[...] = h
        cN_ref[...] = c


def _pick_time_chunk(T, max_chunk=64):
    """Largest multiple-of-8 divisor of T up to max_chunk; else full T."""
    best = None
    for cand in range(8, max_chunk + 1, 8):
        if T % cand == 0:
            best = cand
    return best if best is not None else T


def my_lstm_pallas(x, wx, wh, b, h0=None, c0=None, *,
                   disabled_gate=None, t_chunk=None, batch_tile=None):
    """x: (B, T, I).  wx: (4, I, H), wh: (4, H, H), b: (4, 1, H).

    Returns (output (B, T, H), (h_T (B, H), c_T (B, H))) — same semantics as
    MyLSTM.forward.  Gate order: 0=input, 1=forget, 2=cell, 3=output.
    """
    assert disabled_gate in ('input', 'forget', 'cell', 'output', None)
    B, T, I = x.shape
    H = wh.shape[-1]
    dtype = jnp.float32

    if h0 is None:
        h0 = jnp.zeros((B, H), dtype)
    if c0 is None:
        c0 = jnp.zeros((B, H), dtype)
    h0 = h0.astype(dtype)
    c0 = c0.astype(dtype)

    # ---- Fuse per-gate weights into lane-dense (.,4H) operands --------------
    # Column block k of the fused matrices corresponds to gate k.
    wxf = jnp.transpose(wx, (1, 0, 2)).reshape(I, 4 * H).astype(dtype)   # (I, 4H)
    whf = jnp.transpose(wh, (1, 0, 2)).reshape(H, 4 * H).astype(dtype)   # (H, 4H)
    bf = jnp.transpose(b, (1, 0, 2)).reshape(1, 4 * H).astype(dtype)     # (1, 4H)

    # ---- Hoist the time-independent input projection into one big GEMM ------
    # (batch-major output, so no HBM transpose passes anywhere).
    xproj = jnp.einsum('bti,ik->btk', x.astype(dtype), wxf,
                       precision=lax.Precision.HIGHEST) + bf             # (B, T, 4H)

    # ---- Grid / tiling -------------------------------------------------------
    if t_chunk is None:
        t_chunk = _pick_time_chunk(T)
    assert T % t_chunk == 0, (T, t_chunk)
    if batch_tile is None:
        batch_tile = B          # set to B//2 on v7x with large B to use both TCs
    assert B % batch_tile == 0, (B, batch_tile)
    n_b = B // batch_tile
    n_c = T // t_chunk

    kernel = functools.partial(_lstm_kernel, hidden=H, t_chunk=t_chunk,
                               disabled_gate=disabled_gate)

    out, h_T, c_T = pl.pallas_call(
        kernel,
        out_shape=(
            jax.ShapeDtypeStruct((B, T, H), dtype),   # output (batch-major)
            jax.ShapeDtypeStruct((B, H), dtype),      # final h
            jax.ShapeDtypeStruct((B, H), dtype),      # final c
        ),
        grid_spec=pltpu.PrefetchScalarGridSpec(
            num_scalar_prefetch=0,
            grid=(n_b, n_c),
            in_specs=[
                pl.BlockSpec((batch_tile, t_chunk, 4 * H),
                             lambda bi, ct: (bi, ct, 0)),                 # xproj block
                pl.BlockSpec((H, 4 * H), lambda bi, ct: (0, 0)),          # WhF (resident)
                pl.BlockSpec((batch_tile, H), lambda bi, ct: (bi, 0)),    # h0
                pl.BlockSpec((batch_tile, H), lambda bi, ct: (bi, 0)),    # c0
            ],
            out_specs=[
                pl.BlockSpec((batch_tile, t_chunk, H),
                             lambda bi, ct: (bi, ct, 0)),                 # output block
                pl.BlockSpec((batch_tile, H), lambda bi, ct: (bi, 0)),    # final h
                pl.BlockSpec((batch_tile, H), lambda bi, ct: (bi, 0)),    # final c
            ],
            scratch_shapes=[
                pltpu.VMEM((batch_tile, H), jnp.float32),   # h carry
                pltpu.VMEM((batch_tile, H), jnp.float32),   # c carry
            ],
        ),
        compiler_params=pltpu.CompilerParams(
            dimension_semantics=("parallel", "arbitrary")),
    )(xproj, whf, h0, c0)

    return out, (h_T, c_T)


def my_lstm_ref(x, wx, wh, b, h0, c0, disabled_gate=None):
    """Pure-JAX reference mirroring the PyTorch loop."""
    def step(carry, x_t):
        h, c = carry

        def gate(k):
            return (jnp.dot(x_t, wx[k], precision=lax.Precision.HIGHEST)
                    + jnp.dot(h, wh[k], precision=lax.Precision.HIGHEST)
                    + b[k])
        i = 1.0 if disabled_gate == 'input' else jax.nn.sigmoid(gate(0))
        f = 1.0 if disabled_gate == 'forget' else jax.nn.sigmoid(gate(1))
        g = 1.0 if disabled_gate == 'cell' else jnp.tanh(gate(2))
        o = 1.0 if disabled_gate == 'output' else jax.nn.sigmoid(gate(3))
        c = f * c + i * g
        h = o * jnp.tanh(c)
        return (h, c), h

    (h, c), out = jax.lax.scan(step, (h0, c0), jnp.transpose(x, (1, 0, 2)))
    return jnp.transpose(out, (1, 0, 2)), (h, c)


if __name__ == "__main__":
    B, T, I, H = 2, 16, 4, 32   # T=16 with T_CHUNK=8 exercises the cross-chunk carry

    key = jax.random.PRNGKey(0)
    kx, kwx, kwh, kbx, kbh, kh, kc = jax.random.split(key, 7)

    x = jax.random.normal(kx, (B, T, I), jnp.float32)

    # Per-gate weights stacked as (4, I, H) / (4, H, H); the PyTorch module's
    # Linear(input)+Linear(hidden) bias pair collapses into a single bias.
    wx = jax.random.normal(kwx, (4, I, H), jnp.float32) * (1.0 / jnp.sqrt(I))
    wh = jax.random.normal(kwh, (4, H, H), jnp.float32) * (1.0 / jnp.sqrt(H))
    b = (jax.random.normal(kbx, (4, 1, H), jnp.float32)
         + jax.random.normal(kbh, (4, 1, H), jnp.float32)) * 0.1

    h0 = jax.random.normal(kh, (B, H), jnp.float32) * 0.1
    c0 = jax.random.normal(kc, (B, H), jnp.float32) * 0.1

    for dg in (None, 'forget'):
        out, (h_T, c_T) = my_lstm_pallas(x, wx, wh, b, h0, c0, disabled_gate=dg)
        out = jax.block_until_ready(out)

        out_ref, (h_ref, c_ref) = my_lstm_ref(x, wx, wh, b, h0, c0, dg)

        assert out.shape == (B, T, H) and h_T.shape == (B, H) and c_T.shape == (B, H)
        assert jnp.allclose(out, out_ref, atol=1e-4, rtol=1e-4), f"output mismatch (dg={dg})"
        assert jnp.allclose(h_T, h_ref, atol=1e-4, rtol=1e-4), f"h_T mismatch (dg={dg})"
        assert jnp.allclose(c_T, c_ref, atol=1e-4, rtol=1e-4), f"c_T mismatch (dg={dg})"

    print("KERNEL_OK")
</pallas_src>

<mosaic_0001>
module attributes {stable_mosaic.version = 11 : i64} {
  func.func @_lstm_kernel(%arg0: i32, %arg1: i32, %arg2: memref<2x16x128xf32, #tpu.memory_space<vmem>>, %arg3: memref<32x128xf32, #tpu.memory_space<vmem>>, %arg4: memref<2x32xf32, #tpu.memory_space<vmem>>, %arg5: memref<2x32xf32, #tpu.memory_space<vmem>>, %arg6: memref<2x16x32xf32, #tpu.memory_space<vmem>>, %arg7: memref<2x32xf32, #tpu.memory_space<vmem>>, %arg8: memref<2x32xf32, #tpu.memory_space<vmem>>, %arg9: memref<2x32xf32, #tpu.memory_space<vmem>>, %arg10: memref<2x32xf32, #tpu.memory_space<vmem>>) attributes {dimension_semantics = [#tpu.dimension_semantics<parallel>, #tpu.dimension_semantics<arbitrary>], iteration_bounds = array<i64: 1, 1>, scalar_prefetch = 0 : i64, scratch_operands = 2 : i64, tpu.core_type = #tpu.core_type<tc>, window_params = [{transform_indices = @transform_0, window_bounds = array<i64: 2, 16, 128>}, {pipeline_mode = #tpu.pipeline_mode<synchronous>, transform_indices = @transform_1, window_bounds = array<i64: 32, 128>}, {transform_indices = @transform_2, window_bounds = array<i64: 2, 32>}, {transform_indices = @transform_3, window_bounds = array<i64: 2, 32>}, {transform_indices = @transform_4, window_bounds = array<i64: 2, 16, 32>}, {transform_indices = @transform_5, window_bounds = array<i64: 2, 32>}, {transform_indices = @transform_6, window_bounds = array<i64: 2, 32>}]} {
    %c0_i32 = arith.constant 0 : i32
    %0 = arith.cmpi eq, %arg1, %c0_i32 : i32
    %1 = arith.extui %0 : i1 to i32
    %c0_i32_0 = arith.constant 0 : i32
    %2 = arith.cmpi ne, %1, %c0_i32_0 : i32
    scf.if %2 {
      %c0_156 = arith.constant 0 : index
      %c0_157 = arith.constant 0 : index
      %523 = vector.load %arg4[%c0_156, %c0_157] : memref<2x32xf32, #tpu.memory_space<vmem>>, vector<2x32xf32>
      %c0_158 = arith.constant 0 : index
      %c0_159 = arith.constant 0 : index
      %524 = vector.load %arg9[%c0_158, %c0_159] : memref<2x32xf32, #tpu.memory_space<vmem>>, vector<2x32xf32>
      tpu.vector_store %arg9[%c0_158, %c0_159], %523 {strides = array<i32>} : memref<2x32xf32, #tpu.memory_space<vmem>>, vector<2x32xf32>,
      %c0_160 = arith.constant 0 : index
      %c0_161 = arith.constant 0 : index
      %525 = vector.load %arg5[%c0_160, %c0_161] : memref<2x32xf32, #tpu.memory_space<vmem>>, vector<2x32xf32>
      %c0_162 = arith.constant 0 : index
      %c0_163 = arith.constant 0 : index
      %526 = vector.load %arg10[%c0_162, %c0_163] : memref<2x32xf32, #tpu.memory_space<vmem>>, vector<2x32xf32>
      tpu.vector_store %arg10[%c0_162, %c0_163], %525 {strides = array<i32>} : memref<2x32xf32, #tpu.memory_space<vmem>>, vector<2x32xf32>,
    } else {
    }
    %c0 = arith.constant 0 : index
    %c0_1 = arith.constant 0 : index
    %3 = vector.load %arg3[%c0, %c0_1] : memref<32x128xf32, #tpu.memory_space<vmem>>, vector<32x128xf32>
    %c0_2 = arith.constant 0 : index
    %c0_3 = arith.constant 0 : index
    %4 = vector.load %arg9[%c0_2, %c0_3] : memref<2x32xf32, #tpu.memory_space<vmem>>, vector<2x32xf32>
    %c0_4 = arith.constant 0 : index
    %c0_5 = arith.constant 0 : index
    %5 = vector.load %arg10[%c0_4, %c0_5] : memref<2x32xf32, #tpu.memory_space<vmem>>, vector<2x32xf32>
    %c0_6 = arith.constant 0 : index
    %c0_7 = arith.constant 0 : index
    %c0_8 = arith.constant 0 : index
    %6 = vector.load %arg2[%c0_6, %c0_7, %c0_8] : memref<2x16x128xf32, #tpu.memory_space<vmem>>, vector<2x1x128xf32>
    %7 = vector.shape_cast %6 : vector<2x1x128xf32> to vector<2x128xf32>
    %cst = arith.constant dense<0.000000e+00> : vector<2x128xf32>
    %8 = tpu.matmul %4, %3, %cst {dimension_numbers = #tpu.dot_dimension_numbers<[1], [0], [0], [1], [0, 0, 1, 1], [], []>} : vector<2x32xf32>, vector<32x128xf32>, vector<2x128xf32> -> vector<2x128xf32>
    %9 = arith.addf %7, %8 : vector<2x128xf32>
    %10 = vector.extract_strided_slice %9 {offsets = [0, 0], sizes = [2, 32], strides = [1, 1]} : vector<2x128xf32> to vector<2x32xf32>
    %11 = arith.negf %10 : vector<2x32xf32>
    %12 = math.exp %11 : vector<2x32xf32>
    %cst_9 = arith.constant 1.000000e+00 : f32
    %13 = vector.broadcast %cst_9 : f32 to vector<2x32xf32>
    %14 = arith.addf %13, %12 : vector<2x32xf32>
    %15 = arith.divf %13, %14 : vector<2x32xf32>
    %16 = vector.extract_strided_slice %9 {offsets = [0, 32], sizes = [2, 32], strides = [1, 1]} : vector<2x128xf32> to vector<2x32xf32>
    %17 = arith.negf %16 : vector<2x32xf32>
    %18 = math.exp %17 : vector<2x32xf32>
    %cst_10 = arith.constant 1.000000e+00 : f32
    %19 = vector.broadcast %cst_10 : f32 to vector<2x32xf32>
    %20 = arith.addf %19, %18 : vector<2x32xf32>
    %21 = arith.divf %19, %20 : vector<2x32xf32>
    %22 = vector.extract_strided_slice %9 {offsets = [0, 64], sizes = [2, 32], strides = [1, 1]} : vector<2x128xf32> to vector<2x32xf32>
    %23 = math.tanh %22 : vector<2x32xf32>
    %24 = vector.extract_strided_slice %9 {offsets = [0, 96], sizes = [2, 32], strides = [1, 1]} : vector<2x128xf32> to vector<2x32xf32>
    %25 = arith.negf %24 : vector<2x32xf32>
    %26 = math.exp %25 : vector<2x32xf32>
    %cst_11 = arith.constant 1.000000e+00 : f32
    %27 = vector.broadcast %cst_11 : f32 to vector<2x32xf32>
    %28 = arith.addf %27, %26 : vector<2x32xf32>
    %29 = arith.divf %27, %28 : vector<2x32xf32>
    %30 = arith.mulf %21, %5 : vector<2x32xf32>
    %31 = arith.mulf %15, %23 : vector<2x32xf32>
    %32 = arith.addf %30, %31 : vector<2x32xf32>
    %33 = math.tanh %32 : vector<2x32xf32>
    %34 = arith.mulf %29, %33 : vector<2x32xf32>
    %c0_12 = arith.constant 0 : index
    %c0_13 = arith.constant 0 : index
    %c0_14 = arith.constant 0 : index
    %35 = vector.load %arg6[%c0_12, %c0_13, %c0_14] : memref<2x16x32xf32, #tpu.memory_space<vmem>>, vector<2x1x32xf32>
    %36 = vector.shape_cast %35 : vector<2x1x32xf32> to vector<2x32xf32>
    %37 = vector.shape_cast %34 : vector<2x32xf32> to vector<2x1x32xf32>
    tpu.vector_store %arg6[%c0_12, %c0_13, %c0_14], %37 {strides = array<i32>} : memref<2x16x32xf32, #tpu.memory_space<vmem>>, vector<2x1x32xf32>,
    %c0_15 = arith.constant 0 : index
    %c1 = arith.constant 1 : index
    %c0_16 = arith.constant 0 : index
    %38 = vector.load %arg2[%c0_15, %c1, %c0_16] : memref<2x16x128xf32, #tpu.memory_space<vmem>>, vector<2x1x128xf32>
    %39 = vector.shape_cast %38 : vector<2x1x128xf32> to vector<2x128xf32>
    %cst_17 = arith.constant dense<0.000000e+00> : vector<2x128xf32>
    %40 = tpu.matmul %34, %3, %cst_17 {dimension_numbers = #tpu.dot_dimension_numbers<[1], [0], [0], [1], [0, 0, 1, 1], [], []>} : vector<2x32xf32>, vector<32x128xf32>, vector<2x128xf32> -> vector<2x128xf32>
    %41 = arith.addf %39, %40 : vector<2x128xf32>
    %42 = vector.extract_strided_slice %41 {offsets = [0, 0], sizes = [2, 32], strides = [1, 1]} : vector<2x128xf32> to vector<2x32xf32>
    %43 = arith.negf %42 : vector<2x32xf32>
    %44 = math.exp %43 : vector<2x32xf32>
    %cst_18 = arith.constant 1.000000e+00 : f32
    %45 = vector.broadcast %cst_18 : f32 to vector<2x32xf32>
    %46 = arith.addf %45, %44 : vector<2x32xf32>
    %47 = arith.divf %45, %46 : vector<2x32xf32>
    %48 = vector.extract_strided_slice %41 {offsets = [0, 32], sizes = [2, 32], strides = [1, 1]} : vector<2x128xf32> to vector<2x32xf32>
    %49 = arith.negf %48 : vector<2x32xf32>
    %50 = math.exp %49 : vector<2x32xf32>
    %cst_19 = arith.constant 1.000000e+00 : f32
    %51 = vector.broadcast %cst_19 : f32 to vector<2x32xf32>
    %52 = arith.addf %51, %50 : vector<2x32xf32>
    %53 = arith.divf %51, %52 : vector<2x32xf32>
    %54 = vector.extract_strided_slice %41 {offsets = [0, 64], sizes = [2, 32], strides = [1, 1]} : vector<2x128xf32> to vector<2x32xf32>
    %55 = math.tanh %54 : vector<2x32xf32>
    %56 = vector.extract_strided_slice %41 {offsets = [0, 96], sizes = [2, 32], strides = [1, 1]} : vector<2x128xf32> to vector<2x32xf32>
    %57 = arith.negf %56 : vector<2x32xf32>
    %58 = math.exp %57 : vector<2x32xf32>
    %cst_20 = arith.constant 1.000000e+00 : f32
    %59 = vector.broadcast %cst_20 : f32 to vector<2x32xf32>
    %60 = arith.addf %59, %58 : vector<2x32xf32>
    %61 = arith.divf %59, %60 : vector<2x32xf32>
    %62 = arith.mulf %53, %32 : vector<2x32xf32>
    %63 = arith.mulf %47, %55 : vector<2x32xf32>
    %64 = arith.addf %62, %63 : vector<2x32xf32>
    %65 = math.tanh %64 : vector<2x32xf32>
    %66 = arith.mulf %61, %65 : vector<2x32xf32>
    %c0_21 = arith.constant 0 : index
    %c1_22 = arith.constant 1 : index
    %c0_23 = arith.constant 0 : index
    %67 = vector.load %arg6[%c0_21, %c1_22, %c0_23] : memref<2x16x32xf32, #tpu.memory_space<vmem>>, vector<2x1x32xf32>
    %68 = vector.shape_cast %67 : vector<2x1x32xf32> to vector<2x32xf32>
    %69 = vector.shape_cast %66 : vector<2x32xf32> to vector<2x1x32xf32>
    tpu.vector_store %arg6[%c0_21, %c1_22, %c0_23], %69 {strides = array<i32>} : memref<2x16x32xf32, #tpu.memory_space<vmem>>, vector<2x1x32xf32>,
    %c0_24 = arith.constant 0 : index
    %c2 = arith.constant 2 : index
    %c0_25 = arith.constant 0 : index
    %70 = vector.load %arg2[%c0_24, %c2, %c0_25] : memref<2x16x128xf32, #tpu.memory_space<vmem>>, vector<2x1x128xf32>
    %71 = vector.shape_cast %70 : vector<2x1x128xf32> to vector<2x128xf32>
    %cst_26 = arith.constant dense<0.000000e+00> : vector<2x128xf32>
    %72 = tpu.matmul %66, %3, %cst_26 {dimension_numbers = #tpu.dot_dimension_numbers<[1], [0], [0], [1], [0, 0, 1, 1], [], []>} : vector<2x32xf32>, vector<32x128xf32>, vector<2x128xf32> -> vector<2x128xf32>
    %73 = arith.addf %71, %72 : vector<2x128xf32>
    %74 = vector.extract_strided_slice %73 {offsets = [0, 0], sizes = [2, 32], strides = [1, 1]} : vector<2x128xf32> to vector<2x32xf32>
    %75 = arith.negf %74 : vector<2x32xf32>
    %76 = math.exp %75 : vector<2x32xf32>
    %cst_27 = arith.constant 1.000000e+00 : f32
    %77 = vector.broadcast %cst_27 : f32 to vector<2x32xf32>
    %78 = arith.addf %77, %76 : vector<2x32xf32>
    %79 = arith.divf %77, %78 : vector<2x32xf32>
    %80 = vector.extract_strided_slice %73 {offsets = [0, 32], sizes = [2, 32], strides = [1, 1]} : vector<2x128xf32> to vector<2x32xf32>
    %81 = arith.negf %80 : vector<2x32xf32>
    %82 = math.exp %81 : vector<2x32xf32>
    %cst_28 = arith.constant 1.000000e+00 : f32
    %83 = vector.broadcast %cst_28 : f32 to vector<2x32xf32>
    %84 = arith.addf %83, %82 : vector<2x32xf32>
    %85 = arith.divf %83, %84 : vector<2x32xf32>
    %86 = vector.extract_strided_slice %73 {offsets = [0, 64], sizes = [2, 32], strides = [1, 1]} : vector<2x128xf32> to vector<2x32xf32>
    %87 = math.tanh %86 : vector<2x32xf32>
    %88 = vector.extract_strided_slice %73 {offsets = [0, 96], sizes = [2, 32], strides = [1, 1]} : vector<2x128xf32> to vector<2x32xf32>
    %89 = arith.negf %88 : vector<2x32xf32>
    %90 = math.exp %89 : vector<2x32xf32>
    %cst_29 = arith.constant 1.000000e+00 : f32
    %91 = vector.broadcast %cst_29 : f32 to vector<2x32xf32>
    %92 = arith.addf %91, %90 : vector<2x32xf32>
    %93 = arith.divf %91, %92 : vector<2x32xf32>
    %94 = arith.mulf %85, %64 : vector<2x32xf32>
    %95 = arith.mulf %79, %87 : vector<2x32xf32>
    %96 = arith.addf %94, %95 : vector<2x32xf32>
    %97 = math.tanh %96 : vector<2x32xf32>
    %98 = arith.mulf %93, %97 : vector<2x32xf32>
    %c0_30 = arith.constant 0 : index
    %c2_31 = arith.constant 2 : index
    %c0_32 = arith.constant 0 : index
    %99 = vector.load %arg6[%c0_30, %c2_31, %c0_32] : memref<2x16x32xf32, #tpu.memory_space<vmem>>, vector<2x1x32xf32>
    %100 = vector.shape_cast %99 : vector<2x1x32xf32> to vector<2x32xf32>
    %101 = vector.shape_cast %98 : vector<2x32xf32> to vector<2x1x32xf32>
    tpu.vector_store %arg6[%c0_30, %c2_31, %c0_32], %101 {strides = array<i32>} : memref<2x16x32xf32, #tpu.memory_space<vmem>>, vector<2x1x32xf32>,
    %c0_33 = arith.constant 0 : index
    %c3 = arith.constant 3 : index
    %c0_34 = arith.constant 0 : index
    %102 = vector.load %arg2[%c0_33, %c3, %c0_34] : memref<2x16x128xf32, #tpu.memory_space<vmem>>, vector<2x1x128xf32>
    %103 = vector.shape_cast %102 : vector<2x1x128xf32> to vector<2x128xf32>
    %cst_35 = arith.constant dense<0.000000e+00> : vector<2x128xf32>
    %104 = tpu.matmul %98, %3, %cst_35 {dimension_numbers = #tpu.dot_dimension_numbers<[1], [0], [0], [1], [0, 0, 1, 1], [], []>} : vector<2x32xf32>, vector<32x128xf32>, vector<2x128xf32> -> vector<2x128xf32>
    %105 = arith.addf %103, %104 : vector<2x128xf32>
    %106 = vector.extract_strided_slice %105 {offsets = [0, 0], sizes = [2, 32], strides = [1, 1]} : vector<2x128xf32> to vector<2x32xf32>
    %107 = arith.negf %106 : vector<2x32xf32>
    %108 = math.exp %107 : vector<2x32xf32>
    %cst_36 = arith.constant 1.000000e+00 : f32
    %109 = vector.broadcast %cst_36 : f32 to vector<2x32xf32>
    %110 = arith.addf %109, %108 : vector<2x32xf32>
    %111 = arith.divf %109, %110 : vector<2x32xf32>
    %112 = vector.extract_strided_slice %105 {offsets = [0, 32], sizes = [2, 32], strides = [1, 1]} : vector<2x128xf32> to vector<2x32xf32>
    %113 = arith.negf %112 : vector<2x32xf32>
    %114 = math.exp %113 : vector<2x32xf32>
    %cst_37 = arith.constant 1.000000e+00 : f32
    %115 = vector.broadcast %cst_37 : f32 to vector<2x32xf32>
    %116 = arith.addf %115, %114 : vector<2x32xf32>
    %117 = arith.divf %115, %116 : vector<2x32xf32>
    %118 = vector.extract_strided_slice %105 {offsets = [0, 64], sizes = [2, 32], strides = [1, 1]} : vector<2x128xf32> to vector<2x32xf32>
    %119 = math.tanh %118 : vector<2x32xf32>
    %120 = vector.extract_strided_slice %105 {offsets = [0, 96], sizes = [2, 32], strides = [1, 1]} : vector<2x128xf32> to vector<2x32xf32>
    %121 = arith.negf %120 : vector<2x32xf32>
    %122 = math.exp %121 : vector<2x32xf32>
    %cst_38 = arith.constant 1.000000e+00 : f32
    %123 = vector.broadcast %cst_38 : f32 to vector<2x32xf32>
    %124 = arith.addf %123, %122 : vector<2x32xf32>
    %125 = arith.divf %123, %124 : vector<2x32xf32>
    %126 = arith.mulf %117, %96 : vector<2x32xf32>
    %127 = arith.mulf %111, %119 : vector<2x32xf32>
    %128 = arith.addf %126, %127 : vector<2x32xf32>
    %129 = math.tanh %128 : vector<2x32xf32>
    %130 = arith.mulf %125, %129 : vector<2x32xf32>
    %c0_39 = arith.constant 0 : index
    %c3_40 = arith.constant 3 : index
    %c0_41 = arith.constant 0 : index
    %131 = vector.load %arg6[%c0_39, %c3_40, %c0_41] : memref<2x16x32xf32, #tpu.memory_space<vmem>>, vector<2x1x32xf32>
    %132 = vector.shape_cast %131 : vector<2x1x32xf32> to vector<2x32xf32>
    %133 = vector.shape_cast %130 : vector<2x32xf32> to vector<2x1x32xf32>
    tpu.vector_store %arg6[%c0_39, %c3_40, %c0_41], %133 {strides = array<i32>} : memref<2x16x32xf32, #tpu.memory_space<vmem>>, vector<2x1x32xf32>,
    %c0_42 = arith.constant 0 : index
    %c4 = arith.constant 4 : index
    %c0_43 = arith.constant 0 : index
    %134 = vector.load %arg2[%c0_42, %c4, %c0_43] : memref<2x16x128xf32, #tpu.memory_space<vmem>>, vector<2x1x128xf32>
    %135 = vector.shape_cast %134 : vector<2x1x128xf32> to vector<2x128xf32>
    %cst_44 = arith.constant dense<0.000000e+00> : vector<2x128xf32>
    %136 = tpu.matmul %130, %3, %cst_44 {dimension_numbers = #tpu.dot_dimension_numbers<[1], [0], [0], [1], [0, 0, 1, 1], [], []>} : vector<2x32xf32>, vector<32x128xf32>, vector<2x128xf32> -> vector<2x128xf32>
    %137 = arith.addf %135, %136 : vector<2x128xf32>
    %138 = vector.extract_strided_slice %137 {offsets = [0, 0], sizes = [2, 32], strides = [1, 1]} : vector<2x128xf32> to vector<2x32xf32>
    %139 = arith.negf %138 : vector<2x32xf32>
    %140 = math.exp %139 : vector<2x32xf32>
    %cst_45 = arith.constant 1.000000e+00 : f32
    %141 = vector.broadcast %cst_45 : f32 to vector<2x32xf32>
    %142 = arith.addf %141, %140 : vector<2x32xf32>
    %143 = arith.divf %141, %142 : vector<2x32xf32>
    %144 = vector.extract_strided_slice %137 {offsets = [0, 32], sizes = [2, 32], strides = [1, 1]} : vector<2x128xf32> to vector<2x32xf32>
    %145 = arith.negf %144 : vector<2x32xf32>
    %146 = math.exp %145 : vector<2x32xf32>
    %cst_46 = arith.constant 1.000000e+00 : f32
    %147 = vector.broadcast %cst_46 : f32 to vector<2x32xf32>
    %148 = arith.addf %147, %146 : vector<2x32xf32>
    %149 = arith.divf %147, %148 : vector<2x32xf32>
    %150 = vector.extract_strided_slice %137 {offsets = [0, 64], sizes = [2, 32], strides = [1, 1]} : vector<2x128xf32> to vector<2x32xf32>
    %151 = math.tanh %150 : vector<2x32xf32>
    %152 = vector.extract_strided_slice %137 {offsets = [0, 96], sizes = [2, 32], strides = [1, 1]} : vector<2x128xf32> to vector<2x32xf32>
    %153 = arith.negf %152 : vector<2x32xf32>
    %154 = math.exp %153 : vector<2x32xf32>
    %cst_47 = arith.constant 1.000000e+00 : f32
    %155 = vector.broadcast %cst_47 : f32 to vector<2x32xf32>
    %156 = arith.addf %155, %154 : vector<2x32xf32>
    %157 = arith.divf %155, %156 : vector<2x32xf32>
    %158 = arith.mulf %149, %128 : vector<2x32xf32>
    %159 = arith.mulf %143, %151 : vector<2x32xf32>
    %160 = arith.addf %158, %159 : vector<2x32xf32>
    %161 = math.tanh %160 : vector<2x32xf32>
    %162 = arith.mulf %157, %161 : vector<2x32xf32>
    %c0_48 = arith.constant 0 : index
    %c4_49 = arith.constant 4 : index
    %c0_50 = arith.constant 0 : index
    %163 = vector.load %arg6[%c0_48, %c4_49, %c0_50] : memref<2x16x32xf32, #tpu.memory_space<vmem>>, vector<2x1x32xf32>
    %164 = vector.shape_cast %163 : vector<2x1x32xf32> to vector<2x32xf32>
    %165 = vector.shape_cast %162 : vector<2x32xf32> to vector<2x1x32xf32>
    tpu.vector_store %arg6[%c0_48, %c4_49, %c0_50], %165 {strides = array<i32>} : memref<2x16x32xf32, #tpu.memory_space<vmem>>, vector<2x1x32xf32>,
    %c0_51 = arith.constant 0 : index
    %c5 = arith.constant 5 : index
    %c0_52 = arith.constant 0 : index
    %166 = vector.load %arg2[%c0_51, %c5, %c0_52] : memref<2x16x128xf32, #tpu.memory_space<vmem>>, vector<2x1x128xf32>
    %167 = vector.shape_cast %166 : vector<2x1x128xf32> to vector<2x128xf32>
    %cst_53 = arith.constant dense<0.000000e+00> : vector<2x128xf32>
    %168 = tpu.matmul %162, %3, %cst_53 {dimension_numbers = #tpu.dot_dimension_numbers<[1], [0], [0], [1], [0, 0, 1, 1], [], []>} : vector<2x32xf32>, vector<32x128xf32>, vector<2x128xf32> -> vector<2x128xf32>
    %169 = arith.addf %167, %168 : vector<2x128xf32>
    %170 = vector.extract_strided_slice %169 {offsets = [0, 0], sizes = [2, 32], strides = [1, 1]} : vector<2x128xf32> to vector<2x32xf32>
    %171 = arith.negf %170 : vector<2x32xf32>
    %172 = math.exp %171 : vector<2x32xf32>
    %cst_54 = arith.constant 1.000000e+00 : f32
    %173 = vector.broadcast %cst_54 : f32 to vector<2x32xf32>
    %174 = arith.addf %173, %172 : vector<2x32xf32>
    %175 = arith.divf %173, %174 : vector<2x32xf32>
    %176 = vector.extract_strided_slice %169 {offsets = [0, 32], sizes = [2, 32], strides = [1, 1]} : vector<2x128xf32> to vector<2x32xf32>
    %177 = arith.negf %176 : vector<2x32xf32>
    %178 = math.exp %177 : vector<2x32xf32>
    %cst_55 = arith.constant 1.000000e+00 : f32
    %179 = vector.broadcast %cst_55 : f32 to vector<2x32xf32>
    %180 = arith.addf %179, %178 : vector<2x32xf32>
    %181 = arith.divf %179, %180 : vector<2x32xf32>
    %182 = vector.extract_strided_slice %169 {offsets = [0, 64], sizes = [2, 32], strides = [1, 1]} : vector<2x128xf32> to vector<2x32xf32>
    %183 = math.tanh %182 : vector<2x32xf32>
    %184 = vector.extract_strided_slice %169 {offsets = [0, 96], sizes = [2, 32], strides = [1, 1]} : vector<2x128xf32> to vector<2x32xf32>
    %185 = arith.negf %184 : vector<2x32xf32>
    %186 = math.exp %185 : vector<2x32xf32>
    %cst_56 = arith.constant 1.000000e+00 : f32
    %187 = vector.broadcast %cst_56 : f32 to vector<2x32xf32>
    %188 = arith.addf %187, %186 : vector<2x32xf32>
    %189 = arith.divf %187, %188 : vector<2x32xf32>
    %190 = arith.mulf %181, %160 : vector<2x32xf32>
    %191 = arith.mulf %175, %183 : vector<2x32xf32>
    %192 = arith.addf %190, %191 : vector<2x32xf32>
    %193 = math.tanh %192 : vector<2x32xf32>
    %194 = arith.mulf %189, %193 : vector<2x32xf32>
    %c0_57 = arith.constant 0 : index
    %c5_58 = arith.constant 5 : index
    %c0_59 = arith.constant 0 : index
    %195 = vector.load %arg6[%c0_57, %c5_58, %c0_59] : memref<2x16x32xf32, #tpu.memory_space<vmem>>, vector<2x1x32xf32>
    %196 = vector.shape_cast %195 : vector<2x1x32xf32> to vector<2x32xf32>
    %197 = vector.shape_cast %194 : vector<2x32xf32> to vector<2x1x32xf32>
    tpu.vector_store %arg6[%c0_57, %c5_58, %c0_59], %197 {strides = array<i32>} : memref<2x16x32xf32, #tpu.memory_space<vmem>>, vector<2x1x32xf32>,
    %c0_60 = arith.constant 0 : index
    %c6 = arith.constant 6 : index
    %c0_61 = arith.constant 0 : index
    %198 = vector.load %arg2[%c0_60, %c6, %c0_61] : memref<2x16x128xf32, #tpu.memory_space<vmem>>, vector<2x1x128xf32>
    %199 = vector.shape_cast %198 : vector<2x1x128xf32> to vector<2x128xf32>
    %cst_62 = arith.constant dense<0.000000e+00> : vector<2x128xf32>
    %200 = tpu.matmul %194, %3, %cst_62 {dimension_numbers = #tpu.dot_dimension_numbers<[1], [0], [0], [1], [0, 0, 1, 1], [], []>} : vector<2x32xf32>, vector<32x128xf32>, vector<2x128xf32> -> vector<2x128xf32>
    %201 = arith.addf %199, %200 : vector<2x128xf32>
    %202 = vector.extract_strided_slice %201 {offsets = [0, 0], sizes = [2, 32], strides = [1, 1]} : vector<2x128xf32> to vector<2x32xf32>
    %203 = arith.negf %202 : vector<2x32xf32>
    %204 = math.exp %203 : vector<2x32xf32>
    %cst_63 = arith.constant 1.000000e+00 : f32
    %205 = vector.broadcast %cst_63 : f32 to vector<2x32xf32>
    %206 = arith.addf %205, %204 : vector<2x32xf32>
    %207 = arith.divf %205, %206 : vector<2x32xf32>
    %208 = vector.extract_strided_slice %201 {offsets = [0, 32], sizes = [2, 32], strides = [1, 1]} : vector<2x128xf32> to vector<2x32xf32>
    %209 = arith.negf %208 : vector<2x32xf32>
    %210 = math.exp %209 : vector<2x32xf32>
    %cst_64 = arith.constant 1.000000e+00 : f32
    %211 = vector.broadcast %cst_64 : f32 to vector<2x32xf32>
    %212 = arith.addf %211, %210 : vector<2x32xf32>
    %213 = arith.divf %211, %212 : vector<2x32xf32>
    %214 = vector.extract_strided_slice %201 {offsets = [0, 64], sizes = [2, 32], strides = [1, 1]} : vector<2x128xf32> to vector<2x32xf32>
    %215 = math.tanh %214 : vector<2x32xf32>
    %216 = vector.extract_strided_slice %201 {offsets = [0, 96], sizes = [2, 32], strides = [1, 1]} : vector<2x128xf32> to vector<2x32xf32>
    %217 = arith.negf %216 : vector<2x32xf32>
    %218 = math.exp %217 : vector<2x32xf32>
    %cst_65 = arith.constant 1.000000e+00 : f32
    %219 = vector.broadcast %cst_65 : f32 to vector<2x32xf32>
    %220 = arith.addf %219, %218 : vector<2x32xf32>
    %221 = arith.divf %219, %220 : vector<2x32xf32>
    %222 = arith.mulf %213, %192 : vector<2x32xf32>
    %223 = arith.mulf %207, %215 : vector<2x32xf32>
    %224 = arith.addf %222, %223 : vector<2x32xf32>
    %225 = math.tanh %224 : vector<2x32xf32>
    %226 = arith.mulf %221, %225 : vector<2x32xf32>
    %c0_66 = arith.constant 0 : index
    %c6_67 = arith.constant 6 : index
    %c0_68 = arith.constant 0 : index
    %227 = vector.load %arg6[%c0_66, %c6_67, %c0_68] : memref<2x16x32xf32, #tpu.memory_space<vmem>>, vector<2x1x32xf32>
    %228 = vector.shape_cast %227 : vector<2x1x32xf32> to vector<2x32xf32>
    %229 = vector.shape_cast %226 : vector<2x32xf32> to vector<2x1x32xf32>
    tpu.vector_store %arg6[%c0_66, %c6_67, %c0_68], %229 {strides = array<i32>} : memref<2x16x32xf32, #tpu.memory_space<vmem>>, vector<2x1x32xf32>,
    %c0_69 = arith.constant 0 : index
    %c7 = arith.constant 7 : index
    %c0_70 = arith.constant 0 : index
    %230 = vector.load %arg2[%c0_69, %c7, %c0_70] : memref<2x16x128xf32, #tpu.memory_space<vmem>>, vector<2x1x128xf32>
    %231 = vector.shape_cast %230 : vector<2x1x128xf32> to vector<2x128xf32>
    %cst_71 = arith.constant dense<0.000000e+00> : vector<2x128xf32>
    %232 = tpu.matmul %226, %3, %cst_71 {dimension_numbers = #tpu.dot_dimension_numbers<[1], [0], [0], [1], [0, 0, 1, 1], [], []>} : vector<2x32xf32>, vector<32x128xf32>, vector<2x128xf32> -> vector<2x128xf32>
    %233 = arith.addf %231, %232 : vector<2x128xf32>
    %234 = vector.extract_strided_slice %233 {offsets = [0, 0], sizes = [2, 32], strides = [1, 1]} : vector<2x128xf32> to vector<2x32xf32>
    %235 = arith.negf %234 : vector<2x32xf32>
    %236 = math.exp %235 : vector<2x32xf32>
    %cst_72 = arith.constant 1.000000e+00 : f32
    %237 = vector.broadcast %cst_72 : f32 to vector<2x32xf32>
    %238 = arith.addf %237, %236 : vector<2x32xf32>
    %239 = arith.divf %237, %238 : vector<2x32xf32>
    %240 = vector.extract_strided_slice %233 {offsets = [0, 32], sizes = [2, 32], strides = [1, 1]} : vector<2x128xf32> to vector<2x32xf32>
    %241 = arith.negf %240 : vector<2x32xf32>
    %242 = math.exp %241 : vector<2x32xf32>
    %cst_73 = arith.constant 1.000000e+00 : f32
    %243 = vector.broadcast %cst_73 : f32 to vector<2x32xf32>
    %244 = arith.addf %243, %242 : vector<2x32xf32>
    %245 = arith.divf %243, %244 : vector<2x32xf32>
    %246 = vector.extract_strided_slice %233 {offsets = [0, 64], sizes = [2, 32], strides = [1, 1]} : vector<2x128xf32> to vector<2x32xf32>
    %247 = math.tanh %246 : vector<2x32xf32>
    %248 = vector.extract_strided_slice %233 {offsets = [0, 96], sizes = [2, 32], strides = [1, 1]} : vector<2x128xf32> to vector<2x32xf32>
    %249 = arith.negf %248 : vector<2x32xf32>
    %250 = math.exp %249 : vector<2x32xf32>
    %cst_74 = arith.constant 1.000000e+00 : f32
    %251 = vector.broadcast %cst_74 : f32 to vector<2x32xf32>
    %252 = arith.addf %251, %250 : vector<2x32xf32>
    %253 = arith.divf %251, %252 : vector<2x32xf32>
    %254 = arith.mulf %245, %224 : vector<2x32xf32>
    %255 = arith.mulf %239, %247 : vector<2x32xf32>
    %256 = arith.addf %254, %255 : vector<2x32xf32>
    %257 = math.tanh %256 : vector<2x32xf32>
    %258 = arith.mulf %253, %257 : vector<2x32xf32>
    %c0_75 = arith.constant 0 : index
    %c7_76 = arith.constant 7 : index
    %c0_77 = arith.constant 0 : index
    %259 = vector.load %arg6[%c0_75, %c7_76, %c0_77] : memref<2x16x32xf32, #tpu.memory_space<vmem>>, vector<2x1x32xf32>
    %260 = vector.shape_cast %259 : vector<2x1x32xf32> to vector<2x32xf32>
    %261 = vector.shape_cast %258 : vector<2x32xf32> to vector<2x1x32xf32>
    tpu.vector_store %arg6[%c0_75, %c7_76, %c0_77], %261 {strides = array<i32>} : memref<2x16x32xf32, #tpu.memory_space<vmem>>, vector<2x1x32xf32>,
    %c0_78 = arith.constant 0 : index
    %c8 = arith.constant 8 : index
    %c0_79 = arith.constant 0 : index
    %262 = vector.load %arg2[%c0_78, %c8, %c0_79] : memref<2x16x128xf32, #tpu.memory_space<vmem>>, vector<2x1x128xf32>
    %263 = vector.shape_cast %262 : vector<2x1x128xf32> to vector<2x128xf32>
    %cst_80 = arith.constant dense<0.000000e+00> : vector<2x128xf32>
    %264 = tpu.matmul %258, %3, %cst_80 {dimension_numbers = #tpu.dot_dimension_numbers<[1], [0], [0], [1], [0, 0, 1, 1], [], []>} : vector<2x32xf32>, vector<32x128xf32>, vector<2x128xf32> -> vector<2x128xf32>
    %265 = arith.addf %263, %264 : vector<2x128xf32>
    %266 = vector.extract_strided_slice %265 {offsets = [0, 0], sizes = [2, 32], strides = [1, 1]} : vector<2x128xf32> to vector<2x32xf32>
    %267 = arith.negf %266 : vector<2x32xf32>
    %268 = math.exp %267 : vector<2x32xf32>
    %cst_81 = arith.constant 1.000000e+00 : f32
    %269 = vector.broadcast %cst_81 : f32 to vector<2x32xf32>
    %270 = arith.addf %269, %268 : vector<2x32xf32>
    %271 = arith.divf %269, %270 : vector<2x32xf32>
    %272 = vector.extract_strided_slice %265 {offsets = [0, 32], sizes = [2, 32], strides = [1, 1]} : vector<2x128xf32> to vector<2x32xf32>
    %273 = arith.negf %272 : vector<2x32xf32>
    %274 = math.exp %273 : vector<2x32xf32>
    %cst_82 = arith.constant 1.000000e+00 : f32
    %275 = vector.broadcast %cst_82 : f32 to vector<2x32xf32>
    %276 = arith.addf %275, %274 : vector<2x32xf32>
    %277 = arith.divf %275, %276 : vector<2x32xf32>
    %278 = vector.extract_strided_slice %265 {offsets = [0, 64], sizes = [2, 32], strides = [1, 1]} : vector<2x128xf32> to vector<2x32xf32>
    %279 = math.tanh %278 : vector<2x32xf32>
    %280 = vector.extract_strided_slice %265 {offsets = [0, 96], sizes = [2, 32], strides = [1, 1]} : vector<2x128xf32> to vector<2x32xf32>
    %281 = arith.negf %280 : vector<2x32xf32>
    %282 = math.exp %281 : vector<2x32xf32>
    %cst_83 = arith.constant 1.000000e+00 : f32
    %283 = vector.broadcast %cst_83 : f32 to vector<2x32xf32>
    %284 = arith.addf %283, %282 : vector<2x32xf32>
    %285 = arith.divf %283, %284 : vector<2x32xf32>
    %286 = arith.mulf %277, %256 : vector<2x32xf32>
    %287 = arith.mulf %271, %279 : vector<2x32xf32>
    %288 = arith.addf %286, %287 : vector<2x32xf32>
    %289 = math.tanh %288 : vector<2x32xf32>
    %290 = arith.mulf %285, %289 : vector<2x32xf32>
    %c0_84 = arith.constant 0 : index
    %c8_85 = arith.constant 8 : index
    %c0_86 = arith.constant 0 : index
    %291 = vector.load %arg6[%c0_84, %c8_85, %c0_86] : memref<2x16x32xf32, #tpu.memory_space<vmem>>, vector<2x1x32xf32>
    %292 = vector.shape_cast %291 : vector<2x1x32xf32> to vector<2x32xf32>
    %293 = vector.shape_cast %290 : vector<2x32xf32> to vector<2x1x32xf32>
    tpu.vector_store %arg6[%c0_84, %c8_85, %c0_86], %293 {strides = array<i32>} : memref<2x16x32xf32, #tpu.memory_space<vmem>>, vector<2x1x32xf32>,
    %c0_87 = arith.constant 0 : index
    %c9 = arith.constant 9 : index
    %c0_88 = arith.constant 0 : index
    %294 = vector.load %arg2[%c0_87, %c9, %c0_88] : memref<2x16x128xf32, #tpu.memory_space<vmem>>, vector<2x1x128xf32>
    %295 = vector.shape_cast %294 : vector<2x1x128xf32> to vector<2x128xf32>
    %cst_89 = arith.constant dense<0.000000e+00> : vector<2x128xf32>
    %296 = tpu.matmul %290, %3, %cst_89 {dimension_numbers = #tpu.dot_dimension_numbers<[1], [0], [0], [1], [0, 0, 1, 1], [], []>} : vector<2x32xf32>, vector<32x128xf32>, vector<2x128xf32> -> vector<2x128xf32>
    %297 = arith.addf %295, %296 : vector<2x128xf32>
    %298 = vector.extract_strided_slice %297 {offsets = [0, 0], sizes = [2, 32], strides = [1, 1]} : vector<2x128xf32> to vector<2x32xf32>
    %299 = arith.negf %298 : vector<2x32xf32>
    %300 = math.exp %299 : vector<2x32xf32>
    %cst_90 = arith.constant 1.000000e+00 : f32
    %301 = vector.broadcast %cst_90 : f32 to vector<2x32xf32>
    %302 = arith.addf %301, %300 : vector<2x32xf32>
    %303 = arith.divf %301, %302 : vector<2x32xf32>
    %304 = vector.extract_strided_slice %297 {offsets = [0, 32], sizes = [2, 32], strides = [1, 1]} : vector<2x128xf32> to vector<2x32xf32>
    %305 = arith.negf %304 : vector<2x32xf32>
    %306 = math.exp %305 : vector<2x32xf32>
    %cst_91 = arith.constant 1.000000e+00 : f32
    %307 = vector.broadcast %cst_91 : f32 to vector<2x32xf32>
    %308 = arith.addf %307, %306 : vector<2x32xf32>
    %309 = arith.divf %307, %308 : vector<2x32xf32>
    %310 = vector.extract_strided_slice %297 {offsets = [0, 64], sizes = [2, 32], strides = [1, 1]} : vector<2x128xf32> to vector<2x32xf32>
    %311 = math.tanh %310 : vector<2x32xf32>
    %312 = vector.extract_strided_slice %297 {offsets = [0, 96], sizes = [2, 32], strides = [1, 1]} : vector<2x128xf32> to vector<2x32xf32>
    %313 = arith.negf %312 : vector<2x32xf32>
    %314 = math.exp %313 : vector<2x32xf32>
    %cst_92 = arith.constant 1.000000e+00 : f32
    %315 = vector.broadcast %cst_92 : f32 to vector<2x32xf32>
    %316 = arith.addf %315, %314 : vector<2x32xf32>
    %317 = arith.divf %315, %316 : vector<2x32xf32>
    %318 = arith.mulf %309, %288 : vector<2x32xf32>
    %319 = arith.mulf %303, %311 : vector<2x32xf32>
    %320 = arith.addf %318, %319 : vector<2x32xf32>
    %321 = math.tanh %320 : vector<2x32xf32>
    %322 = arith.mulf %317, %321 : vector<2x32xf32>
    %c0_93 = arith.constant 0 : index
    %c9_94 = arith.constant 9 : index
    %c0_95 = arith.constant 0 : index
    %323 = vector.load %arg6[%c0_93, %c9_94, %c0_95] : memref<2x16x32xf32, #tpu.memory_space<vmem>>, vector<2x1x32xf32>
    %324 = vector.shape_cast %323 : vector<2x1x32xf32> to vector<2x32xf32>
    %325 = vector.shape_cast %322 : vector<2x32xf32> to vector<2x1x32xf32>
    tpu.vector_store %arg6[%c0_93, %c9_94, %c0_95], %325 {strides = array<i32>} : memref<2x16x32xf32, #tpu.memory_space<vmem>>, vector<2x1x32xf32>,
    %c0_96 = arith.constant 0 : index
    %c10 = arith.constant 10 : index
    %c0_97 = arith.constant 0 : index
    %326 = vector.load %arg2[%c0_96, %c10, %c0_97] : memref<2x16x128xf32, #tpu.memory_space<vmem>>, vector<2x1x128xf32>
    %327 = vector.shape_cast %326 : vector<2x1x128xf32> to vector<2x128xf32>
    %cst_98 = arith.constant dense<0.000000e+00> : vector<2x128xf32>
    %328 = tpu.matmul %322, %3, %cst_98 {dimension_numbers = #tpu.dot_dimension_numbers<[1], [0], [0], [1], [0, 0, 1, 1], [], []>} : vector<2x32xf32>, vector<32x128xf32>, vector<2x128xf32> -> vector<2x128xf32>
    %329 = arith.addf %327, %328 : vector<2x128xf32>
    %330 = vector.extract_strided_slice %329 {offsets = [0, 0], sizes = [2, 32], strides = [1, 1]} : vector<2x128xf32> to vector<2x32xf32>
    %331 = arith.negf %330 : vector<2x32xf32>
    %332 = math.exp %331 : vector<2x32xf32>
    %cst_99 = arith.constant 1.000000e+00 : f32
    %333 = vector.broadcast %cst_99 : f32 to vector<2x32xf32>
    %334 = arith.addf %333, %332 : vector<2x32xf32>
    %335 = arith.divf %333, %334 : vector<2x32xf32>
    %336 = vector.extract_strided_slice %329 {offsets = [0, 32], sizes = [2, 32], strides = [1, 1]} : vector<2x128xf32> to vector<2x32xf32>
    %337 = arith.negf %336 : vector<2x32xf32>
    %338 = math.exp %337 : vector<2x32xf32>
    %cst_100 = arith.constant 1.000000e+00 : f32
    %339 = vector.broadcast %cst_100 : f32 to vector<2x32xf32>
    %340 = arith.addf %339, %338 : vector<2x32xf32>
    %341 = arith.divf %339, %340 : vector<2x32xf32>
    %342 = vector.extract_strided_slice %329 {offsets = [0, 64], sizes = [2, 32], strides = [1, 1]} : vector<2x128xf32> to vector<2x32xf32>
    %343 = math.tanh %342 : vector<2x32xf32>
    %344 = vector.extract_strided_slice %329 {offsets = [0, 96], sizes = [2, 32], strides = [1, 1]} : vector<2x128xf32> to vector<2x32xf32>
    %345 = arith.negf %344 : vector<2x32xf32>
    %346 = math.exp %345 : vector<2x32xf32>
    %cst_101 = arith.constant 1.000000e+00 : f32
    %347 = vector.broadcast %cst_101 : f32 to vector<2x32xf32>
    %348 = arith.addf %347, %346 : vector<2x32xf32>
    %349 = arith.divf %347, %348 : vector<2x32xf32>
    %350 = arith.mulf %341, %320 : vector<2x32xf32>
    %351 = arith.mulf %335, %343 : vector<2x32xf32>
    %352 = arith.addf %350, %351 : vector<2x32xf32>
    %353 = math.tanh %352 : vector<2x32xf32>
    %354 = arith.mulf %349, %353 : vector<2x32xf32>
    %c0_102 = arith.constant 0 : index
    %c10_103 = arith.constant 10 : index
    %c0_104 = arith.constant 0 : index
    %355 = vector.load %arg6[%c0_102, %c10_103, %c0_104] : memref<2x16x32xf32, #tpu.memory_space<vmem>>, vector<2x1x32xf32>
    %356 = vector.shape_cast %355 : vector<2x1x32xf32> to vector<2x32xf32>
    %357 = vector.shape_cast %354 : vector<2x32xf32> to vector<2x1x32xf32>
    tpu.vector_store %arg6[%c0_102, %c10_103, %c0_104], %357 {strides = array<i32>} : memref<2x16x32xf32, #tpu.memory_space<vmem>>, vector<2x1x32xf32>,
    %c0_105 = arith.constant 0 : index
    %c11 = arith.constant 11 : index
    %c0_106 = arith.constant 0 : index
    %358 = vector.load %arg2[%c0_105, %c11, %c0_106] : memref<2x16x128xf32, #tpu.memory_space<vmem>>, vector<2x1x128xf32>
    %359 = vector.shape_cast %358 : vector<2x1x128xf32> to vector<2x128xf32>
    %cst_107 = arith.constant dense<0.000000e+00> : vector<2x128xf32>
    %360 = tpu.matmul %354, %3, %cst_107 {dimension_numbers = #tpu.dot_dimension_numbers<[1], [0], [0], [1], [0, 0, 1, 1], [], []>} : vector<2x32xf32>, vector<32x128xf32>, vector<2x128xf32> -> vector<2x128xf32>
    %361 = arith.addf %359, %360 : vector<2x128xf32>
    %362 = vector.extract_strided_slice %361 {offsets = [0, 0], sizes = [2, 32], strides = [1, 1]} : vector<2x128xf32> to vector<2x32xf32>
    %363 = arith.negf %362 : vector<2x32xf32>
    %364 = math.exp %363 : vector<2x32xf32>
    %cst_108 = arith.constant 1.000000e+00 : f32
    %365 = vector.broadcast %cst_108 : f32 to vector<2x32xf32>
    %366 = arith.addf %365, %364 : vector<2x32xf32>
    %367 = arith.divf %365, %366 : vector<2x32xf32>
    %368 = vector.extract_strided_slice %361 {offsets = [0, 32], sizes = [2, 32], strides = [1, 1]} : vector<2x128xf32> to vector<2x32xf32>
    %369 = arith.negf %368 : vector<2x32xf32>
    %370 = math.exp %369 : vector<2x32xf32>
    %cst_109 = arith.constant 1.000000e+00 : f32
    %371 = vector.broadcast %cst_109 : f32 to vector<2x32xf32>
    %372 = arith.addf %371, %370 : vector<2x32xf32>
    %373 = arith.divf %371, %372 : vector<2x32xf32>
    %374 = vector.extract_strided_slice %361 {offsets = [0, 64], sizes = [2, 32], strides = [1, 1]} : vector<2x128xf32> to vector<2x32xf32>
    %375 = math.tanh %374 : vector<2x32xf32>
    %376 = vector.extract_strided_slice %361 {offsets = [0, 96], sizes = [2, 32], strides = [1, 1]} : vector<2x128xf32> to vector<2x32xf32>
    %377 = arith.negf %376 : vector<2x32xf32>
    %378 = math.exp %377 : vector<2x32xf32>
    %cst_110 = arith.constant 1.000000e+00 : f32
    %379 = vector.broadcast %cst_110 : f32 to vector<2x32xf32>
    %380 = arith.addf %379, %378 : vector<2x32xf32>
    %381 = arith.divf %379, %380 : vector<2x32xf32>
    %382 = arith.mulf %373, %352 : vector<2x32xf32>
    %383 = arith.mulf %367, %375 : vector<2x32xf32>
    %384 = arith.addf %382, %383 : vector<2x32xf32>
    %385 = math.tanh %384 : vector<2x32xf32>
    %386 = arith.mulf %381, %385 : vector<2x32xf32>
    %c0_111 = arith.constant 0 : index
    %c11_112 = arith.constant 11 : index
    %c0_113 = arith.constant 0 : index
    %387 = vector.load %arg6[%c0_111, %c11_112, %c0_113] : memref<2x16x32xf32, #tpu.memory_space<vmem>>, vector<2x1x32xf32>
    %388 = vector.shape_cast %387 : vector<2x1x32xf32> to vector<2x32xf32>
    %389 = vector.shape_cast %386 : vector<2x32xf32> to vector<2x1x32xf32>
    tpu.vector_store %arg6[%c0_111, %c11_112, %c0_113], %389 {strides = array<i32>} : memref<2x16x32xf32, #tpu.memory_space<vmem>>, vector<2x1x32xf32>,
    %c0_114 = arith.constant 0 : index
    %c12 = arith.constant 12 : index
    %c0_115 = arith.constant 0 : index
    %390 = vector.load %arg2[%c0_114, %c12, %c0_115] : memref<2x16x128xf32, #tpu.memory_space<vmem>>, vector<2x1x128xf32>
    %391 = vector.shape_cast %390 : vector<2x1x128xf32> to vector<2x128xf32>
    %cst_116 = arith.constant dense<0.000000e+00> : vector<2x128xf32>
    %392 = tpu.matmul %386, %3, %cst_116 {dimension_numbers = #tpu.dot_dimension_numbers<[1], [0], [0], [1], [0, 0, 1, 1], [], []>} : vector<2x32xf32>, vector<32x128xf32>, vector<2x128xf32> -> vector<2x128xf32>
    %393 = arith.addf %391, %392 : vector<2x128xf32>
    %394 = vector.extract_strided_slice %393 {offsets = [0, 0], sizes = [2, 32], strides = [1, 1]} : vector<2x128xf32> to vector<2x32xf32>
    %395 = arith.negf %394 : vector<2x32xf32>
    %396 = math.exp %395 : vector<2x32xf32>
    %cst_117 = arith.constant 1.000000e+00 : f32
    %397 = vector.broadcast %cst_117 : f32 to vector<2x32xf32>
    %398 = arith.addf %397, %396 : vector<2x32xf32>
    %399 = arith.divf %397, %398 : vector<2x32xf32>
    %400 = vector.extract_strided_slice %393 {offsets = [0, 32], sizes = [2, 32], strides = [1, 1]} : vector<2x128xf32> to vector<2x32xf32>
    %401 = arith.negf %400 : vector<2x32xf32>
    %402 = math.exp %401 : vector<2x32xf32>
    %cst_118 = arith.constant 1.000000e+00 : f32
    %403 = vector.broadcast %cst_118 : f32 to vector<2x32xf32>
    %404 = arith.addf %403, %402 : vector<2x32xf32>
    %405 = arith.divf %403, %404 : vector<2x32xf32>
    %406 = vector.extract_strided_slice %393 {offsets = [0, 64], sizes = [2, 32], strides = [1, 1]} : vector<2x128xf32> to vector<2x32xf32>
    %407 = math.tanh %406 : vector<2x32xf32>
    %408 = vector.extract_strided_slice %393 {offsets = [0, 96], sizes = [2, 32], strides = [1, 1]} : vector<2x128xf32> to vector<2x32xf32>
    %409 = arith.negf %408 : vector<2x32xf32>
    %410 = math.exp %409 : vector<2x32xf32>
    %cst_119 = arith.constant 1.000000e+00 : f32
    %411 = vector.broadcast %cst_119 : f32 to vector<2x32xf32>
    %412 = arith.addf %411, %410 : vector<2x32xf32>
    %413 = arith.divf %411, %412 : vector<2x32xf32>
    %414 = arith.mulf %405, %384 : vector<2x32xf32>
    %415 = arith.mulf %399, %407 : vector<2x32xf32>
    %416 = arith.addf %414, %415 : vector<2x32xf32>
    %417 = math.tanh %416 : vector<2x32xf32>
    %418 = arith.mulf %413, %417 : vector<2x32xf32>
    %c0_120 = arith.constant 0 : index
    %c12_121 = arith.constant 12 : index
    %c0_122 = arith.constant 0 : index
    %419 = vector.load %arg6[%c0_120, %c12_121, %c0_122] : memref<2x16x32xf32, #tpu.memory_space<vmem>>, vector<2x1x32xf32>
    %420 = vector.shape_cast %419 : vector<2x1x32xf32> to vector<2x32xf32>
    %421 = vector.shape_cast %418 : vector<2x32xf32> to vector<2x1x32xf32>
    tpu.vector_store %arg6[%c0_120, %c12_121, %c0_122], %421 {strides = array<i32>} : memref<2x16x32xf32, #tpu.memory_space<vmem>>, vector<2x1x32xf32>,
    %c0_123 = arith.constant 0 : index
    %c13 = arith.constant 13 : index
    %c0_124 = arith.constant 0 : index
    %422 = vector.load %arg2[%c0_123, %c13, %c0_124] : memref<2x16x128xf32, #tpu.memory_space<vmem>>, vector<2x1x128xf32>
    %423 = vector.shape_cast %422 : vector<2x1x128xf32> to vector<2x128xf32>
    %cst_125 = arith.constant dense<0.000000e+00> : vector<2x128xf32>
    %424 = tpu.matmul %418, %3, %cst_125 {dimension_numbers = #tpu.dot_dimension_numbers<[1], [0], [0], [1], [0, 0, 1, 1], [], []>} : vector<2x32xf32>, vector<32x128xf32>, vector<2x128xf32> -> vector<2x128xf32>
    %425 = arith.addf %423, %424 : vector<2x128xf32>
    %426 = vector.extract_strided_slice %425 {offsets = [0, 0], sizes = [2, 32], strides = [1, 1]} : vector<2x128xf32> to vector<2x32xf32>
    %427 = arith.negf %426 : vector<2x32xf32>
    %428 = math.exp %427 : vector<2x32xf32>
    %cst_126 = arith.constant 1.000000e+00 : f32
    %429 = vector.broadcast %cst_126 : f32 to vector<2x32xf32>
    %430 = arith.addf %429, %428 : vector<2x32xf32>
    %431 = arith.divf %429, %430 : vector<2x32xf32>
    %432 = vector.extract_strided_slice %425 {offsets = [0, 32], sizes = [2, 32], strides = [1, 1]} : vector<2x128xf32> to vector<2x32xf32>
    %433 = arith.negf %432 : vector<2x32xf32>
    %434 = math.exp %433 : vector<2x32xf32>
    %cst_127 = arith.constant 1.000000e+00 : f32
    %435 = vector.broadcast %cst_127 : f32 to vector<2x32xf32>
    %436 = arith.addf %435, %434 : vector<2x32xf32>
    %437 = arith.divf %435, %436 : vector<2x32xf32>
    %438 = vector.extract_strided_slice %425 {offsets = [0, 64], sizes = [2, 32], strides = [1, 1]} : vector<2x128xf32> to vector<2x32xf32>
    %439 = math.tanh %438 : vector<2x32xf32>
    %440 = vector.extract_strided_slice %425 {offsets = [0, 96], sizes = [2, 32], strides = [1, 1]} : vector<2x128xf32> to vector<2x32xf32>
    %441 = arith.negf %440 : vector<2x32xf32>
    %442 = math.exp %441 : vector<2x32xf32>
    %cst_128 = arith.constant 1.000000e+00 : f32
    %443 = vector.broadcast %cst_128 : f32 to vector<2x32xf32>
    %444 = arith.addf %443, %442 : vector<2x32xf32>
    %445 = arith.divf %443, %444 : vector<2x32xf32>
    %446 = arith.mulf %437, %416 : vector<2x32xf32>
    %447 = arith.mulf %431, %439 : vector<2x32xf32>
    %448 = arith.addf %446, %447 : vector<2x32xf32>
    %449 = math.tanh %448 : vector<2x32xf32>
    %450 = arith.mulf %445, %449 : vector<2x32xf32>
    %c0_129 = arith.constant 0 : index
    %c13_130 = arith.constant 13 : index
    %c0_131 = arith.constant 0 : index
    %451 = vector.load %arg6[%c0_129, %c13_130, %c0_131] : memref<2x16x32xf32, #tpu.memory_space<vmem>>, vector<2x1x32xf32>
    %452 = vector.shape_cast %451 : vector<2x1x32xf32> to vector<2x32xf32>
    %453 = vector.shape_cast %450 : vector<2x32xf32> to vector<2x1x32xf32>
    tpu.vector_store %arg6[%c0_129, %c13_130, %c0_131], %453 {strides = array<i32>} : memref<2x16x32xf32, #tpu.memory_space<vmem>>, vector<2x1x32xf32>,
    %c0_132 = arith.constant 0 : index
    %c14 = arith.constant 14 : index
    %c0_133 = arith.constant 0 : index
    %454 = vector.load %arg2[%c0_132, %c14, %c0_133] : memref<2x16x128xf32, #tpu.memory_space<vmem>>, vector<2x1x128xf32>
    %455 = vector.shape_cast %454 : vector<2x1x128xf32> to vector<2x128xf32>
    %cst_134 = arith.constant dense<0.000000e+00> : vector<2x128xf32>
    %456 = tpu.matmul %450, %3, %cst_134 {dimension_numbers = #tpu.dot_dimension_numbers<[1], [0], [0], [1], [0, 0, 1, 1], [], []>} : vector<2x32xf32>, vector<32x128xf32>, vector<2x128xf32> -> vector<2x128xf32>
    %457 = arith.addf %455, %456 : vector<2x128xf32>
    %458 = vector.extract_strided_slice %457 {offsets = [0, 0], sizes = [2, 32], strides = [1, 1]} : vector<2x128xf32> to vector<2x32xf32>
    %459 = arith.negf %458 : vector<2x32xf32>
    %460 = math.exp %459 : vector<2x32xf32>
    %cst_135 = arith.constant 1.000000e+00 : f32
    %461 = vector.broadcast %cst_135 : f32 to vector<2x32xf32>
    %462 = arith.addf %461, %460 : vector<2x32xf32>
    %463 = arith.divf %461, %462 : vector<2x32xf32>
    %464 = vector.extract_strided_slice %457 {offsets = [0, 32], sizes = [2, 32], strides = [1, 1]} : vector<2x128xf32> to vector<2x32xf32>
    %465 = arith.negf %464 : vector<2x32xf32>
    %466 = math.exp %465 : vector<2x32xf32>
    %cst_136 = arith.constant 1.000000e+00 : f32
    %467 = vector.broadcast %cst_136 : f32 to vector<2x32xf32>
    %468 = arith.addf %467, %466 : vector<2x32xf32>
    %469 = arith.divf %467, %468 : vector<2x32xf32>
    %470 = vector.extract_strided_slice %457 {offsets = [0, 64], sizes = [2, 32], strides = [1, 1]} : vector<2x128xf32> to vector<2x32xf32>
    %471 = math.tanh %470 : vector<2x32xf32>
    %472 = vector.extract_strided_slice %457 {offsets = [0, 96], sizes = [2, 32], strides = [1, 1]} : vector<2x128xf32> to vector<2x32xf32>
    %473 = arith.negf %472 : vector<2x32xf32>
    %474 = math.exp %473 : vector<2x32xf32>
    %cst_137 = arith.constant 1.000000e+00 : f32
    %475 = vector.broadcast %cst_137 : f32 to vector<2x32xf32>
    %476 = arith.addf %475, %474 : vector<2x32xf32>
    %477 = arith.divf %475, %476 : vector<2x32xf32>
    %478 = arith.mulf %469, %448 : vector<2x32xf32>
    %479 = arith.mulf %463, %471 : vector<2x32xf32>
    %480 = arith.addf %478, %479 : vector<2x32xf32>
    %481 = math.tanh %480 : vector<2x32xf32>
    %482 = arith.mulf %477, %481 : vector<2x32xf32>
    %c0_138 = arith.constant 0 : index
    %c14_139 = arith.constant 14 : index
    %c0_140 = arith.constant 0 : index
    %483 = vector.load %arg6[%c0_138, %c14_139, %c0_140] : memref<2x16x32xf32, #tpu.memory_space<vmem>>, vector<2x1x32xf32>
    %484 = vector.shape_cast %483 : vector<2x1x32xf32> to vector<2x32xf32>
    %485 = vector.shape_cast %482 : vector<2x32xf32> to vector<2x1x32xf32>
    tpu.vector_store %arg6[%c0_138, %c14_139, %c0_140], %485 {strides = array<i32>} : memref<2x16x32xf32, #tpu.memory_space<vmem>>, vector<2x1x32xf32>,
    %c0_141 = arith.constant 0 : index
    %c15 = arith.constant 15 : index
    %c0_142 = arith.constant 0 : index
    %486 = vector.load %arg2[%c0_141, %c15, %c0_142] : memref<2x16x128xf32, #tpu.memory_space<vmem>>, vector<2x1x128xf32>
    %487 = vector.shape_cast %486 : vector<2x1x128xf32> to vector<2x128xf32>
    %cst_143 = arith.constant dense<0.000000e+00> : vector<2x128xf32>
    %488 = tpu.matmul %482, %3, %cst_143 {dimension_numbers = #tpu.dot_dimension_numbers<[1], [0], [0], [1], [0, 0, 1, 1], [], []>} : vector<2x32xf32>, vector<32x128xf32>, vector<2x128xf32> -> vector<2x128xf32>
    %489 = arith.addf %487, %488 : vector<2x128xf32>
    %490 = vector.extract_strided_slice %489 {offsets = [0, 0], sizes = [2, 32], strides = [1, 1]} : vector<2x128xf32> to vector<2x32xf32>
    %491 = arith.negf %490 : vector<2x32xf32>
    %492 = math.exp %491 : vector<2x32xf32>
    %cst_144 = arith.constant 1.000000e+00 : f32
    %493 = vector.broadcast %cst_144 : f32 to vector<2x32xf32>
    %494 = arith.addf %493, %492 : vector<2x32xf32>
    %495 = arith.divf %493, %494 : vector<2x32xf32>
    %496 = vector.extract_strided_slice %489 {offsets = [0, 32], sizes = [2, 32], strides = [1, 1]} : vector<2x128xf32> to vector<2x32xf32>
    %497 = arith.negf %496 : vector<2x32xf32>
    %498 = math.exp %497 : vector<2x32xf32>
    %cst_145 = arith.constant 1.000000e+00 : f32
    %499 = vector.broadcast %cst_145 : f32 to vector<2x32xf32>
    %500 = arith.addf %499, %498 : vector<2x32xf32>
    %501 = arith.divf %499, %500 : vector<2x32xf32>
    %502 = vector.extract_strided_slice %489 {offsets = [0, 64], sizes = [2, 32], strides = [1, 1]} : vector<2x128xf32> to vector<2x32xf32>
    %503 = math.tanh %502 : vector<2x32xf32>
    %504 = vector.extract_strided_slice %489 {offsets = [0, 96], sizes = [2, 32], strides = [1, 1]} : vector<2x128xf32> to vector<2x32xf32>
    %505 = arith.negf %504 : vector<2x32xf32>
    %506 = math.exp %505 : vector<2x32xf32>
    %cst_146 = arith.constant 1.000000e+00 : f32
    %507 = vector.broadcast %cst_146 : f32 to vector<2x32xf32>
    %508 = arith.addf %507, %506 : vector<2x32xf32>
    %509 = arith.divf %507, %508 : vector<2x32xf32>
    %510 = arith.mulf %501, %480 : vector<2x32xf32>
    %511 = arith.mulf %495, %503 : vector<2x32xf32>
    %512 = arith.addf %510, %511 : vector<2x32xf32>
    %513 = math.tanh %512 : vector<2x32xf32>
    %514 = arith.mulf %509, %513 : vector<2x32xf32>
    %c0_147 = arith.constant 0 : index
    %c15_148 = arith.constant 15 : index
    %c0_149 = arith.constant 0 : index
    %515 = vector.load %arg6[%c0_147, %c15_148, %c0_149] : memref<2x16x32xf32, #tpu.memory_space<vmem>>, vector<2x1x32xf32>
    %516 = vector.shape_cast %515 : vector<2x1x32xf32> to vector<2x32xf32>
    %517 = vector.shape_cast %514 : vector<2x32xf32> to vector<2x1x32xf32>
    tpu.vector_store %arg6[%c0_147, %c15_148, %c0_149], %517 {strides = array<i32>} : memref<2x16x32xf32, #tpu.memory_space<vmem>>, vector<2x1x32xf32>,
    %c0_150 = arith.constant 0 : index
    %c0_151 = arith.constant 0 : index
    %518 = vector.load %arg9[%c0_150, %c0_151] : memref<2x32xf32, #tpu.memory_space<vmem>>, vector<2x32xf32>
    tpu.vector_store %arg9[%c0_150, %c0_151], %514 {strides = array<i32>} : memref<2x32xf32, #tpu.memory_space<vmem>>, vector<2x32xf32>,
    %c0_152 = arith.constant 0 : index
    %c0_153 = arith.constant 0 : index
    %519 = vector.load %arg10[%c0_152, %c0_153] : memref<2x32xf32, #tpu.memory_space<vmem>>, vector<2x32xf32>
    tpu.vector_store %arg10[%c0_152, %c0_153], %512 {strides = array<i32>} : memref<2x32xf32, #tpu.memory_space<vmem>>, vector<2x32xf32>,
    %c0_i32_154 = arith.constant 0 : i32
    %520 = arith.cmpi eq, %arg1, %c0_i32_154 : i32
    %521 = arith.extui %520 : i1 to i32
    %c0_i32_155 = arith.constant 0 : i32
    %522 = arith.cmpi ne, %521, %c0_i32_155 : i32
    scf.if %522 {
      %c0_156 = arith.constant 0 : index
      %c0_157 = arith.constant 0 : index
      %523 = vector.load %arg7[%c0_156, %c0_157] : memref<2x32xf32, #tpu.memory_space<vmem>>, vector<2x32xf32>
      tpu.vector_store %arg7[%c0_156, %c0_157], %514 {strides = array<i32>} : memref<2x32xf32, #tpu.memory_space<vmem>>, vector<2x32xf32>,
      %c0_158 = arith.constant 0 : index
      %c0_159 = arith.constant 0 : index
      %524 = vector.load %arg8[%c0_158, %c0_159] : memref<2x32xf32, #tpu.memory_space<vmem>>, vector<2x32xf32>
      tpu.vector_store %arg8[%c0_158, %c0_159], %512 {strides = array<i32>} : memref<2x32xf32, #tpu.memory_space<vmem>>, vector<2x32xf32>,
    } else {
    }
    return
  }
  func.func @transform_0(%arg0: i32, %arg1: i32) -> (i32, i32, i32) {
    %c0_i32 = arith.constant 0 : i32
    %c0_i32_0 = arith.constant 0 : i32
    return %arg0, %arg1, %c0_i32 : i32, i32, i32
  }
  func.func @transform_1(%arg0: i32, %arg1: i32) -> (i32, i32) {
    %c0_i32 = arith.constant 0 : i32
    %c0_i32_0 = arith.constant 0 : i32
    %c0_i32_1 = arith.constant 0 : i32
    return %c0_i32, %c0_i32_0 : i32, i32
  }
  func.func @transform_2(%arg0: i32, %arg1: i32) -> (i32, i32) {
    %c0_i32 = arith.constant 0 : i32
    %c0_i32_0 = arith.constant 0 : i32
    return %arg0, %c0_i32 : i32, i32
  }
  func.func @transform_3(%arg0: i32, %arg1: i32) -> (i32, i32) {
    %c0_i32 = arith.constant 0 : i32
    %c0_i32_0 = arith.constant 0 : i32
    return %arg0, %c0_i32 : i32, i32
  }
  func.func @transform_4(%arg0: i32, %arg1: i32) -> (i32, i32, i32) {
    %c0_i32 = arith.constant 0 : i32
    %c0_i32_0 = arith.constant 0 : i32
    return %arg0, %arg1, %c0_i32 : i32, i32, i32
  }
  func.func @transform_5(%arg0: i32, %arg1: i32) -> (i32, i32) {
    %c0_i32 = arith.constant 0 : i32
    %c0_i32_0 = arith.constant 0 : i32
    return %arg0, %c0_i32 : i32, i32
  }
  func.func @transform_6(%arg0: i32, %arg1: i32) -> (i32, i32) {
    %c0_i32 = arith.constant 0 : i32
    %c0_i32_0 = arith.constant 0 : i32
    return %arg0, %c0_i32 : i32, i32
  }
}

</mosaic_0001>

<llo_original>
// kernel: tpu_custom_call.1
$region0: #{tpu_custom_call.1}
  #allocation0 [shape = 'u32[]', space=smem, size = 0x4, offset = 0x4, fixed_abs, tag = 'smem constant byte address 0x4 - core index']
  #allocation1 [shape = 'u32[144,128]{1,0:T(1,128)}', space=vmem, size = 0x12000, scoped, tag = 'internal scratch']
  #allocation2 [shape = 'f32[2,32]{1,0:T(2,128)}', space=vmem, size = 0x400, scoped, tag = 'scratch operand']
  #allocation3 [shape = 'f32[2,32]{1,0:T(2,128)}', space=vmem, size = 0x400, scoped, tag = 'scratch operand']
  %s0 = inlined_call_operand.hbm [shape: f32[2,16,128], index: 0, kind: input, shape index: {}]
  %s1 = inlined_call_operand.hbm [shape: f32[32,128], index: 1, kind: input, shape index: {}]
  %s2 = inlined_call_operand.vmem [shape: f32[2,32], index: 2, kind: input, shape index: {}]
  %s3 = inlined_call_operand.vmem [shape: f32[2,32], index: 3, kind: input, shape index: {}]
  %s4 = inlined_call_operand.hbm [shape: f32[2,16,32], index: 4, kind: output, shape index: {0}]
  %s5 = inlined_call_operand.hbm [shape: f32[2,32], index: 5, kind: output, shape index: {1}]
  %s6 = inlined_call_operand.hbm [shape: f32[2,32], index: 6, kind: output, shape index: {2}]
  %7 = xla_tuple %s4, %s5, %s6
  %s8 = sld [smem:[#allocation0]]
  $region58: #{tpu_custom_call.1} parent=0
    _
  %s10 = ssub.s32 1, %s8
  %s11 = scalar_select 0, %s10, %s8
  $region1: #{tpu_custom_call.1} parent=0
    #allocation4 [shape = 'u8[16384]{0}', space=vmem, size = 0x4000, scoped, tag = 'input window, operand 0, single buffered']
    #allocation5 [shape = 's32[1]{0}', space=sflag, size = 0x4, scoped, tag = 'scoped memory for tpu_custom_call.1']
    #allocation6 [shape = 's32[1]{0}', space=sflag, size = 0x4, scoped, tag = 'scoped memory for tpu_custom_call.1']
    #allocation7 [shape = 'u8[16384]{0}', space=vmem, size = 0x4000, scoped, tag = 'input window, operand 1, single buffered']
    #allocation8 [shape = 's32[1]{0}', space=sflag, size = 0x4, scoped, tag = 'scoped memory for tpu_custom_call.1']
    #allocation9 [shape = 'u8[16384]{0}', space=vmem, size = 0x4000, scoped, tag = 'output window, operand 0, single buffered']
    #allocation10 [shape = 'u8[1024]{0}', space=vmem, size = 0x400, scoped, tag = 'output window, operand 1, single buffered']
    #allocation11 [shape = 's32[1]{0}', space=sflag, size = 0x4, scoped, tag = 'scoped memory for tpu_custom_call.1']
    #allocation12 [shape = 'u8[1024]{0}', space=vmem, size = 0x400, scoped, tag = 'output window, operand 2, single buffered']
    %12 = vsyncpa [#allocation5], 0
    %13 = vsyncpa [#allocation8], 0
    %14 = vsyncpa [#allocation6], 0
    %15 = vsyncpa [#allocation11], 0
    // Predicated region
    $region2: #{tpu_custom_call.1} parent=1 // pred_check
      _
    $region3: #{tpu_custom_call.1} parent=1 // pred_check_branch
      %17 = sbr.rel (0) target = $region5
    $region4: #{tpu_custom_call.1} parent=1 // pred_region
      %s19 = ssub.s32 512, 512
      %20 = vsyncadd [#allocation5], %s19
      %s21 = sshll.u32 [#allocation4], 4
      %s22 = int_to_ptr.vmem [resolvable:$true] %s21
      %27 = dma.hbm_to_vmem [thread:$0]  %s0, 512, %s22, [#allocation5], 128, 128, 8
    $region5: #{tpu_custom_call.1} parent=1 // pred_fallthru
      _
    // Predicated region
    $region6: #{tpu_custom_call.1} parent=1 // pred_check
      _
    $region7: #{tpu_custom_call.1} parent=1 // pred_check_branch
      %29 = sbr.rel (0) target = $region9
    $region8: #{tpu_custom_call.1} parent=1 // pred_region
      %s31 = ssub.s32 512, 512
      %32 = vsyncadd [#allocation8], %s31
      %s33 = sshll.u32 [#allocation7], 4
      %s34 = int_to_ptr.vmem [resolvable:$true] %s33
      %39 = dma.hbm_to_vmem [thread:$0]  %s1, 512, %s34, [#allocation8], 128, 128, 8
    $region9: #{tpu_custom_call.1} parent=1 // pred_fallthru
      _
    // Predicated region
    $region10: #{tpu_custom_call.1} parent=1 // pred_check
      _
    $region11: #{tpu_custom_call.1} parent=1 // pred_check_branch
      %41 = sbr.rel (0) target = $region13
    $region12: #{tpu_custom_call.1} parent=1 // pred_region
      _
    $region13: #{tpu_custom_call.1} parent=1 // pred_fallthru
      _
    // Predicated region
    $region14: #{tpu_custom_call.1} parent=1 // pred_check
      _
    $region15: #{tpu_custom_call.1} parent=1 // pred_check_branch
      %43 = sbr.rel (0) target = $region17
    $region16: #{tpu_custom_call.1} parent=1 // pred_region
      _
    $region17: #{tpu_custom_call.1} parent=1 // pred_fallthru
      _
    // Predicated region
    $region18: #{tpu_custom_call.1} parent=1 // pred_check
      _
    $region19: #{tpu_custom_call.1} parent=1 // pred_check_branch
      %45 = sbr.rel (0) target = $region21
    $region20: #{tpu_custom_call.1} parent=1 // pred_region
      %46 = dma.done [#allocation5], 512
    $region21: #{tpu_custom_call.1} parent=1 // pred_fallthru
      _
    // Predicated region
    $region22: #{tpu_custom_call.1} parent=1 // pred_check
      _
    $region23: #{tpu_custom_call.1} parent=1 // pred_check_branch
      %48 = sbr.rel (0) target = $region25
    $region24: #{tpu_custom_call.1} parent=1 // pred_region
      %49 = dma.done [#allocation8], 512
    $region25: #{tpu_custom_call.1} parent=1 // pred_fallthru
      _
    %p50 = scmp.eq.s32.totalorder 0, 0
    // Predicated region
    $region26: #{tpu_custom_call.1} parent=1 // pred_check
      %p51 = pneg %p50
    $region27: #{tpu_custom_call.1} parent=1 // pred_check_branch
      %53 = sbr.rel (%p51) target = $region29
    $region28: #{tpu_custom_call.1} parent=1 // pred_region
      %v54 = vld [vmem:[%s2] sm:$0x3]
      %vm55 = vcmask 254976
      %56 = vst.msk [vmem:[#allocation2] sm:$0x3] %vm55, %v54
      %v57 = vld [vmem:[%s3] sm:$0x3]
      %58 = vst.msk [vmem:[#allocation3] sm:$0x3] %vm55, %v57
    $region29: #{tpu_custom_call.1} parent=1 // pred_fallthru
      _
    %v59 = vld [vmem:[#allocation7] sm:$0xff]
    %v60 = vld [vmem:[#allocation7 + $0x8] sm:$0xff]
    %v61 = vld [vmem:[#allocation7 + $0x10] sm:$0xff]
    %v62 = vld [vmem:[#allocation7 + $0x18] sm:$0xff]
    %v63 = vld [vmem:[#allocation2] sm:$0x3]
    %v64 = vld [vmem:[#allocation3] sm:$0x3]
    %v65 = vld [vmem:[#allocation4] sm:$0x1]
    %v66 = vld [vmem:[#allocation4 + $0x10] sm:$0x1]
    %vm67 = vcmask 261120
    %v69 = vsel %vm67, %v63, 0
    %71 = vmatprep.subr.mxu0 0.0
    %72 = vmatpush1.msra.mxu0 %v59
    %73 = vmatprep.subr.mxu0 0.0
    %74 = vmatpush1.msra.mxu0 %v60
    %75 = vmatprep.subr.mxu0 0.0
    %76 = vmatpush1.msra.mxu0 %v61
    %77 = vmatprep.subr.mxu0 0.0
    %78 = vmatpush1.msra.mxu0 %v62
    %79 = vmatprep.subr.mxu0 0.0
    %80 = vmatpush1.msra.mxu0 0.0
    %81 = vmatprep.subr.mxu0 0.0
    %82 = vmatpush1.msra.mxu0 0.0
    %83 = vmatprep.subr.mxu0 0.0
    %84 = vmatpush1.msra.mxu0 0.0
    %85 = vmatprep.subr.mxu0 0.0
    %86 = vmatpush1.msra.mxu0 0.0
    %87 = vmatprep.subr.mxu0 0.0
    %88 = vmatpush1.msra.mxu0 0.0
    %89 = vmatprep.subr.mxu0 0.0
    %90 = vmatpush1.msra.mxu0 0.0
    %91 = vmatprep.subr.mxu0 0.0
    %92 = vmatpush1.msra.mxu0 0.0
    %93 = vmatprep.subr.mxu0 0.0
    %94 = vmatpush1.msra.mxu0 0.0
    %95 = vmatprep.subr.mxu0 0.0
    %96 = vmatpush1.msra.mxu0 0.0
    %97 = vmatprep.subr.mxu0 0.0
    %98 = vmatpush1.msra.mxu0 0.0
    %99 = vmatprep.subr.mxu0 0.0
    %100 = vmatpush1.msra.mxu0 0.0
    %101 = vmatprep.subr.mxu0 0.0
    %102 = vmatpush1.msra.mxu0 0.0
    %103 = vmatprep.subr.mxu0 0.0
    %104 = vmatpush1.msra.mxu0 0.0
    %105 = vmatprep.subr.mxu0 0.0
    %106 = vmatpush1.msra.mxu0 0.0
    %107 = vmatprep.subr.mxu0 0.0
    %108 = vmatpush1.msra.mxu0 0.0
    %109 = vmatprep.subr.mxu0 0.0
    %110 = vmatpush1.msra.mxu0 0.0
    %111 = vmatprep.subr.mxu0 0.0
    %112 = vmatpush1.msra.mxu0 0.0
    %113 = vmatprep.subr.mxu0 0.0
    %114 = vmatpush1.msra.mxu0 0.0
    %115 = vmatprep.subr.mxu0 0.0
    %116 = vmatpush1.msra.mxu0 0.0
    %117 = vmatprep.subr.mxu0 0.0
    %118 = vmatpush1.msra.mxu0 0.0
    %119 = vmatprep.subr.mxu0 0.0
    %120 = vmatpush1.msra.mxu0 0.0
    %121 = vmatprep.subr.mxu0 0.0
    %122 = vmatpush1.msra.mxu0 0.0
    %123 = vmatprep.subr.mxu0 0.0
    %124 = vmatpush1.msra.mxu0 0.0
    %125 = vmatprep.subr.mxu0 0.0
    %126 = vmatpush1.msra.mxu0 0.0
    %127 = vmatprep.subr.mxu0 0.0
    %128 = vmatpush1.msra.mxu0 0.0
    %129 = vmatprep.subr.mxu0 0.0
    %130 = vmatpush1.msra.mxu0 0.0
    %131 = vmatprep.subr.mxu0 0.0
    %132 = vmatpush1.msra.mxu0 0.0
    %133 = vmatprep.subr.mxu0 0.0
    %134 = vmatpush1.msra.mxu0 0.0
    %135 = vmatprep.mubr.f32.mxu0 0.0
    %136 = vmatmul.mubr.f32.gmra.mrb[0].mxu0 %v69
    %v137 = vpop.f32.mrb[0].mxu0
    %v138 = vadd.f32 0.0, %v137
    %v139 = vpop.f32.mrb[0].mxu0
    %140 = vdwg.mxu0
    %v142 = vrot.slane %v138, 1
    %v145 = vadd.f32 %v65, %v138
    %v146 = vadd.f32 %v66, %v142
    %v147 = vxor.u32 %v145, 2147483648
    %v148 = vxor.u32 %v146, 2147483648
    %v149 = vmul.f32 %v147, 1.442695
    %v150 = vpow.pop %v149
    %v151 = vmul.f32 %v148, 1.442695
    %v152 = vpow.pop %v151
    %v153 = vadd.f32 %v150, 1.0
    %v154 = vadd.f32 %v152, 1.0
    %v155 = vrcp.pop %v153
    %v156 = vmul.f32 1.0, %v155
    %v157 = vrcp.pop %v154
    %v158 = vmul.f32 1.0, %v157
    %v159 = vtanh.pop %v145
    %v160 = vtanh.pop %v146
    %v162 = vrot.slane %v64, 1
    %163 = vrot.lane.b32.xlu0 %v64, 32
    %v164 = vpop.permute.xlu0 %163
    %165 = vrot.lane.b32.xlu0 %v162, 32
    %v166 = vpop.permute.xlu0 %165
    %v169 = vmul.f32 %v156, %v164
    %v170 = vmul.f32 %v158, %v166
    %173 = vrot.lane.b32.xlu0 %v159, 64
    %v174 = vpop.permute.xlu0 %173
    %175 = vrot.lane.b32.xlu0 %v160, 64
    %v176 = vpop.permute.xlu0 %175
    %v179 = vmul.f32 %v156, %v174
    %v180 = vmul.f32 %v158, %v176
    %183 = vrot.lane.b32.xlu0 %v179, 32
    %v184 = vpop.permute.xlu0 %183
    %185 = vrot.lane.b32.xlu0 %v180, 32
    %v186 = vpop.permute.xlu0 %185
    %v189 = vadd.f32 %v169, %v184
    %v190 = vadd.f32 %v170, %v186
    %v191 = vtanh.pop %v189
    %v192 = vtanh.pop %v190
    %195 = vrot.lane.b32.xlu0 %v191, 64
    %v196 = vpop.permute.xlu0 %195
    %197 = vrot.lane.b32.xlu0 %v192, 64
    %v198 = vpop.permute.xlu0 %197
    %v201 = vmul.f32 %v156, %v196
    %v202 = vmul.f32 %v158, %v198
    %205 = vrot.lane.b32.xlu0 %v201, 32
    %v206 = vpop.permute.xlu0 %205
    %207 = vrot.lane.b32.xlu0 %v202, 32
    %v208 = vpop.permute.xlu0 %207
    %vm211 = vcmask 253952
    %212 = vst.msk [vmem:[#allocation9] sm:$0x1] %vm211, %v206
    %213 = vst.msk [vmem:[#allocation9 + $0x10] sm:$0x1] %vm211, %v208
    %v214 = vld [vmem:[#allocation4 + $0x1] sm:$0x1]
    %v215 = vld [vmem:[#allocation4 + $0x11] sm:$0x1]
    %v216 = vrot.slane %v202, 7
    %vm217 = vcmask 1041409
    %v218 = vsel %vm217, %v216, %v201
    %219 = vrot.lane.b32.xlu0 %v218, 32
    %v220 = vpop.permute.xlu0 %219
    %v221 = vsel %vm67, %v220, 0
    %223 = vmatprep.subr.mxu0 0.0
    %224 = vmatpush1.msra.mxu0 %v59
    %225 = vmatprep.subr.mxu0 0.0
    %226 = vmatpush1.msra.mxu0 %v60
    %227 = vmatprep.subr.mxu0 0.0
    %228 = vmatpush1.msra.mxu0 %v61
    %229 = vmatprep.subr.mxu0 0.0
    %230 = vmatpush1.msra.mxu0 %v62
    %231 = vmatprep.subr.mxu0 0.0
    %232 = vmatpush1.msra.mxu0 0.0
    %233 = vmatprep.subr.mxu0 0.0
    %234 = vmatpush1.msra.mxu0 0.0
    %235 = vmatprep.subr.mxu0 0.0
    %236 = vmatpush1.msra.mxu0 0.0
    %237 = vmatprep.subr.mxu0 0.0
    %238 = vmatpush1.msra.mxu0 0.0
    %239 = vmatprep.subr.mxu0 0.0
    %240 = vmatpush1.msra.mxu0 0.0
    %241 = vmatprep.subr.mxu0 0.0
    %242 = vmatpush1.msra.mxu0 0.0
    %243 = vmatprep.subr.mxu0 0.0
    %244 = vmatpush1.msra.mxu0 0.0
    %245 = vmatprep.subr.mxu0 0.0
    %246 = vmatpush1.msra.mxu0 0.0
    %247 = vmatprep.subr.mxu0 0.0
    %248 = vmatpush1.msra.mxu0 0.0
    %249 = vmatprep.subr.mxu0 0.0
    %250 = vmatpush1.msra.mxu0 0.0
    %251 = vmatprep.subr.mxu0 0.0
    %252 = vmatpush1.msra.mxu0 0.0
    %253 = vmatprep.subr.mxu0 0.0
    %254 = vmatpush1.msra.mxu0 0.0
    %255 = vmatprep.subr.mxu0 0.0
    %256 = vmatpush1.msra.mxu0 0.0
    %257 = vmatprep.subr.mxu0 0.0
    %258 = vmatpush1.msra.mxu0 0.0
    %259 = vmatprep.subr.mxu0 0.0
    %260 = vmatpush1.msra.mxu0 0.0
    %261 = vmatprep.subr.mxu0 0.0
    %262 = vmatpush1.msra.mxu0 0.0
    %263 = vmatprep.subr.mxu0 0.0
    %264 = vmatpush1.msra.mxu0 0.0
    %265 = vmatprep.subr.mxu0 0.0
    %266 = vmatpush1.msra.mxu0 0.0
    %267 = vmatprep.subr.mxu0 0.0
    %268 = vmatpush1.msra.mxu0 0.0
    %269 = vmatprep.subr.mxu0 0.0
    %270 = vmatpush1.msra.mxu0 0.0
    %271 = vmatprep.subr.mxu0 0.0
    %272 = vmatpush1.msra.mxu0 0.0
    %273 = vmatprep.subr.mxu0 0.0
    %274 = vmatpush1.msra.mxu0 0.0
    %275 = vmatprep.subr.mxu0 0.0
    %276 = vmatpush1.msra.mxu0 0.0
    %277 = vmatprep.subr.mxu0 0.0
    %278 = vmatpush1.msra.mxu0 0.0
    %279 = vmatprep.subr.mxu0 0.0
    %280 = vmatpush1.msra.mxu0 0.0
    %281 = vmatprep.subr.mxu0 0.0
    %282 = vmatpush1.msra.mxu0 0.0
    %283 = vmatprep.subr.mxu0 0.0
    %284 = vmatpush1.msra.mxu0 0.0
    %285 = vmatprep.subr.mxu0 0.0
    %286 = vmatpush1.msra.mxu0 0.0
    %287 = vmatprep.mubr.f32.mxu0 0.0
    %288 = vmatmul.mubr.f32.gmra.mrb[0].mxu0 %v221
    %v289 = vpop.f32.mrb[0].mxu0
    %v290 = vadd.f32 0.0, %v289
    %v291 = vpop.f32.mrb[0].mxu0
    %292 = vdwg.mxu0
    %v294 = vrot.slane %v290, 1
    %v297 = vadd.f32 %v214, %v290
    %v298 = vadd.f32 %v215, %v294
    %v299 = vxor.u32 %v297, 2147483648
    %v300 = vxor.u32 %v298, 2147483648
    %v301 = vmul.f32 %v299, 1.442695
    %v302 = vpow.pop %v301
    %v303 = vmul.f32 %v300, 1.442695
    %v304 = vpow.pop %v303
    %v305 = vadd.f32 %v302, 1.0
    %v306 = vadd.f32 %v304, 1.0
    %v307 = vrcp.pop %v305
    %v308 = vmul.f32 1.0, %v307
    %v309 = vrcp.pop %v306
    %v310 = vmul.f32 1.0, %v309
    %v311 = vtanh.pop %v297
    %v312 = vtanh.pop %v298
    %v313 = vmul.f32 %v308, %v189
    %v314 = vmul.f32 %v310, %v190
    %317 = vrot.lane.b32.xlu0 %v311, 64
    %v318 = vpop.permute.xlu0 %317
    %319 = vrot.lane.b32.xlu0 %v312, 64
    %v320 = vpop.permute.xlu0 %319
    %v323 = vmul.f32 %v308, %v318
    %v324 = vmul.f32 %v310, %v320
    %327 = vrot.lane.b32.xlu0 %v323, 32
    %v328 = vpop.permute.xlu0 %327
    %329 = vrot.lane.b32.xlu0 %v324, 32
    %v330 = vpop.permute.xlu0 %329
    %v333 = vadd.f32 %v313, %v328
    %v334 = vadd.f32 %v314, %v330
    %v335 = vtanh.pop %v333
    %v336 = vtanh.pop %v334
    %339 = vrot.lane.b32.xlu0 %v335, 64
    %v340 = vpop.permute.xlu0 %339
    %341 = vrot.lane.b32.xlu0 %v336, 64
    %v342 = vpop.permute.xlu0 %341
    %v345 = vmul.f32 %v308, %v340
    %v346 = vmul.f32 %v310, %v342
    %349 = vrot.lane.b32.xlu0 %v345, 32
    %v350 = vpop.permute.xlu0 %349
    %351 = vrot.lane.b32.xlu0 %v346, 32
    %v352 = vpop.permute.xlu0 %351
    %355 = vst.msk [vmem:[#allocation9 + $0x1] sm:$0x1] %vm211, %v350
    %356 = vst.msk [vmem:[#allocation9 + $0x11] sm:$0x1] %vm211, %v352
    %v357 = vld [vmem:[#allocation4 + $0x2] sm:$0x1]
    %v358 = vld [vmem:[#allocation4 + $0x12] sm:$0x1]
    %v359 = vrot.slane %v346, 7
    %v360 = vsel %vm217, %v359, %v345
    %361 = vrot.lane.b32.xlu0 %v360, 32
    %v362 = vpop.permute.xlu0 %361
    %v363 = vsel %vm67, %v362, 0
    %365 = vmatprep.subr.mxu0 0.0
    %366 = vmatpush1.msra.mxu0 %v59
    %367 = vmatprep.subr.mxu0 0.0
    %368 = vmatpush1.msra.mxu0 %v60
    %369 = vmatprep.subr.mxu0 0.0
    %370 = vmatpush1.msra.mxu0 %v61
    %371 = vmatprep.subr.mxu0 0.0
    %372 = vmatpush1.msra.mxu0 %v62
    %373 = vmatprep.subr.mxu0 0.0
    %374 = vmatpush1.msra.mxu0 0.0
    %375 = vmatprep.subr.mxu0 0.0
    %376 = vmatpush1.msra.mxu0 0.0
    %377 = vmatprep.subr.mxu0 0.0
    %378 = vmatpush1.msra.mxu0 0.0
    %379 = vmatprep.subr.mxu0 0.0
    %380 = vmatpush1.msra.mxu0 0.0
    %381 = vmatprep.subr.mxu0 0.0
    %382 = vmatpush1.msra.mxu0 0.0
    %383 = vmatprep.subr.mxu0 0.0
    %384 = vmatpush1.msra.mxu0 0.0
    %385 = vmatprep.subr.mxu0 0.0
    %386 = vmatpush1.msra.mxu0 0.0
    %387 = vmatprep.subr.mxu0 0.0
    %388 = vmatpush1.msra.mxu0 0.0
    %389 = vmatprep.subr.mxu0 0.0
    %390 = vmatpush1.msra.mxu0 0.0
    %391 = vmatprep.subr.mxu0 0.0
    %392 = vmatpush1.msra.mxu0 0.0
    %393 = vmatprep.subr.mxu0 0.0
    %394 = vmatpush1.msra.mxu0 0.0
    %395 = vmatprep.subr.mxu0 0.0
    %396 = vmatpush1.msra.mxu0 0.0
    %397 = vmatprep.subr.mxu0 0.0
    %398 = vmatpush1.msra.mxu0 0.0
    %399 = vmatprep.subr.mxu0 0.0
    %400 = vmatpush1.msra.mxu0 0.0
    %401 = vmatprep.subr.mxu0 0.0
    %402 = vmatpush1.msra.mxu0 0.0
    %403 = vmatprep.subr.mxu0 0.0
    %404 = vmatpush1.msra.mxu0 0.0
    %405 = vmatprep.subr.mxu0 0.0
    %406 = vmatpush1.msra.mxu0 0.0
    %407 = vmatprep.subr.mxu0 0.0
    %408 = vmatpush1.msra.mxu0 0.0
    %409 = vmatprep.subr.mxu0 0.0
    %410 = vmatpush1.msra.mxu0 0.0
    %411 = vmatprep.subr.mxu0 0.0
    %412 = vmatpush1.msra.mxu0 0.0
    %413 = vmatprep.subr.mxu0 0.0
    %414 = vmatpush1.msra.mxu0 0.0
    %415 = vmatprep.subr.mxu0 0.0
    %416 = vmatpush1.msra.mxu0 0.0
    %417 = vmatprep.subr.mxu0 0.0
    %418 = vmatpush1.msra.mxu0 0.0
    %419 = vmatprep.subr.mxu0 0.0
    %420 = vmatpush1.msra.mxu0 0.0
    %421 = vmatprep.subr.mxu0 0.0
    %422 = vmatpush1.msra.mxu0 0.0
    %423 = vmatprep.subr.mxu0 0.0
    %424 = vmatpush1.msra.mxu0 0.0
    %425 = vmatprep.subr.mxu0 0.0
    %426 = vmatpush1.msra.mxu0 0.0
    %427 = vmatprep.subr.mxu0 0.0
    %428 = vmatpush1.msra.mxu0 0.0
    %429 = vmatprep.mubr.f32.mxu0 0.0
    %430 = vmatmul.mubr.f32.gmra.mrb[0].mxu0 %v363
    %v431 = vpop.f32.mrb[0].mxu0
    %v432 = vadd.f32 0.0, %v431
    %v433 = vpop.f32.mrb[0].mxu0
    %434 = vdwg.mxu0
    %v436 = vrot.slane %v432, 1
    %v439 = vadd.f32 %v357, %v432
    %v440 = vadd.f32 %v358, %v436
    %v441 = vxor.u32 %v439, 2147483648
    %v442 = vxor.u32 %v440, 2147483648
    %v443 = vmul.f32 %v441, 1.442695
    %v444 = vpow.pop %v443
    %v445 = vmul.f32 %v442, 1.442695
    %v446 = vpow.pop %v445
    %v447 = vadd.f32 %v444, 1.0
    %v448 = vadd.f32 %v446, 1.0
    %v449 = vrcp.pop %v447
    %v450 = vmul.f32 1.0, %v449
    %v451 = vrcp.pop %v448
    %v452 = vmul.f32 1.0, %v451
    %v453 = vtanh.pop %v439
    %v454 = vtanh.pop %v440
    %v455 = vmul.f32 %v450, %v333
    %v456 = vmul.f32 %v452, %v334
    %459 = vrot.lane.b32.xlu0 %v453, 64
    %v460 = vpop.permute.xlu0 %459
    %461 = vrot.lane.b32.xlu0 %v454, 64
    %v462 = vpop.permute.xlu0 %461
    %v465 = vmul.f32 %v450, %v460
    %v466 = vmul.f32 %v452, %v462
    %469 = vrot.lane.b32.xlu0 %v465, 32
    %v470 = vpop.permute.xlu0 %469
    %471 = vrot.lane.b32.xlu0 %v466, 32
    %v472 = vpop.permute.xlu0 %471
    %v475 = vadd.f32 %v455, %v470
    %v476 = vadd.f32 %v456, %v472
    %v477 = vtanh.pop %v475
    %v478 = vtanh.pop %v476
    %481 = vrot.lane.b32.xlu0 %v477, 64
    %v482 = vpop.permute.xlu0 %481
    %483 = vrot.lane.b32.xlu0 %v478, 64
    %v484 = vpop.permute.xlu0 %483
    %v487 = vmul.f32 %v450, %v482
    %v488 = vmul.f32 %v452, %v484
    %491 = vrot.lane.b32.xlu0 %v487, 32
    %v492 = vpop.permute.xlu0 %491
    %493 = vrot.lane.b32.xlu0 %v488, 32
    %v494 = vpop.permute.xlu0 %493
    %497 = vst.msk [vmem:[#allocation9 + $0x2] sm:$0x1] %vm211, %v492
    %498 = vst.msk [vmem:[#allocation9 + $0x12] sm:$0x1] %vm211, %v494
    %v499 = vld [vmem:[#allocation4 + $0x3] sm:$0x1]
    %v500 = vld [vmem:[#allocation4 + $0x13] sm:$0x1]
    %v501 = vrot.slane %v488, 7
    %v502 = vsel %vm217, %v501, %v487
    %503 = vrot.lane.b32.xlu0 %v502, 32
    %v504 = vpop.permute.xlu0 %503
    %v505 = vsel %vm67, %v504, 0
    %507 = vmatprep.subr.mxu0 0.0
    %508 = vmatpush1.msra.mxu0 %v59
    %509 = vmatprep.subr.mxu0 0.0
    %510 = vmatpush1.msra.mxu0 %v60
    %511 = vmatprep.subr.mxu0 0.0
    %512 = vmatpush1.msra.mxu0 %v61
    %513 = vmatprep.subr.mxu0 0.0
    %514 = vmatpush1.msra.mxu0 %v62
    %515 = vmatprep.subr.mxu0 0.0
    %516 = vmatpush1.msra.mxu0 0.0
    %517 = vmatprep.subr.mxu0 0.0
    %518 = vmatpush1.msra.mxu0 0.0
    %519 = vmatprep.subr.mxu0 0.0
    %520 = vmatpush1.msra.mxu0 0.0
    %521 = vmatprep.subr.mxu0 0.0
    %522 = vmatpush1.msra.mxu0 0.0
    %523 = vmatprep.subr.mxu0 0.0
    %524 = vmatpush1.msra.mxu0 0.0
    %525 = vmatprep.subr.mxu0 0.0
    %526 = vmatpush1.msra.mxu0 0.0
    %527 = vmatprep.subr.mxu0 0.0
    %528 = vmatpush1.msra.mxu0 0.0
    %529 = vmatprep.subr.mxu0 0.0
    %530 = vmatpush1.msra.mxu0 0.0
    %531 = vmatprep.subr.mxu0 0.0
    %532 = vmatpush1.msra.mxu0 0.0
    %533 = vmatprep.subr.mxu0 0.0
    %534 = vmatpush1.msra.mxu0 0.0
    %535 = vmatprep.subr.mxu0 0.0
    %536 = vmatpush1.msra.mxu0 0.0
    %537 = vmatprep.subr.mxu0 0.0
    %538 = vmatpush1.msra.mxu0 0.0
    %539 = vmatprep.subr.mxu0 0.0
    %540 = vmatpush1.msra.mxu0 0.0
    %541 = vmatprep.subr.mxu0 0.0
    %542 = vmatpush1.msra.mxu0 0.0
    %543 = vmatprep.subr.mxu0 0.0
    %544 = vmatpush1.msra.mxu0 0.0
    %545 = vmatprep.subr.mxu0 0.0
    %546 = vmatpush1.msra.mxu0 0.0
    %547 = vmatprep.subr.mxu0 0.0
    %548 = vmatpush1.msra.mxu0 0.0
    %549 = vmatprep.subr.mxu0 0.0
    %550 = vmatpush1.msra.mxu0 0.0
    %551 = vmatprep.subr.mxu0 0.0
    %552 = vmatpush1.msra.mxu0 0.0
    %553 = vmatprep.subr.mxu0 0.0
    %554 = vmatpush1.msra.mxu0 0.0
    %555 = vmatprep.subr.mxu0 0.0
    %556 = vmatpush1.msra.mxu0 0.0
    %557 = vmatprep.subr.mxu0 0.0
    %558 = vmatpush1.msra.mxu0 0.0
    %559 = vmatprep.subr.mxu0 0.0
    %560 = vmatpush1.msra.mxu0 0.0
    %561 = vmatprep.subr.mxu0 0.0
    %562 = vmatpush1.msra.mxu0 0.0
    %563 = vmatprep.subr.mxu0 0.0
    %564 = vmatpush1.msra.mxu0 0.0
    %565 = vmatprep.subr.mxu0 0.0
    %566 = vmatpush1.msra.mxu0 0.0
    %567 = vmatprep.subr.mxu0 0.0
    %568 = vmatpush1.msra.mxu0 0.0
    %569 = vmatprep.subr.mxu0 0.0
    %570 = vmatpush1.msra.mxu0 0.0
    %571 = vmatprep.mubr.f32.mxu0 0.0
    %572 = vmatmul.mubr.f32.gmra.mrb[0].mxu0 %v505
    %v573 = vpop.f32.mrb[0].mxu0
    %v574 = vadd.f32 0.0, %v573
    %v575 = vpop.f32.mrb[0].mxu0
    %576 = vdwg.mxu0
    %v578 = vrot.slane %v574, 1
    %v581 = vadd.f32 %v499, %v574
    %v582 = vadd.f32 %v500, %v578
    %v583 = vxor.u32 %v581, 2147483648
    %v584 = vxor.u32 %v582, 2147483648
    %v585 = vmul.f32 %v583, 1.442695
    %v586 = vpow.pop %v585
    %v587 = vmul.f32 %v584, 1.442695
    %v588 = vpow.pop %v587
    %v589 = vadd.f32 %v586, 1.0
    %v590 = vadd.f32 %v588, 1.0
    %v591 = vrcp.pop %v589
    %v592 = vmul.f32 1.0, %v591
    %v593 = vrcp.pop %v590
    %v594 = vmul.f32 1.0, %v593
    %v595 = vtanh.pop %v581
    %v596 = vtanh.pop %v582
    %v597 = vmul.f32 %v592, %v475
    %v598 = vmul.f32 %v594, %v476
    %601 = vrot.lane.b32.xlu0 %v595, 64
    %v602 = vpop.permute.xlu0 %601
    %603 = vrot.lane.b32.xlu0 %v596, 64
    %v604 = vpop.permute.xlu0 %603
    %v607 = vmul.f32 %v592, %v602
    %v608 = vmul.f32 %v594, %v604
    %611 = vrot.lane.b32.xlu0 %v607, 32
    %v612 = vpop.permute.xlu0 %611
    %613 = vrot.lane.b32.xlu0 %v608, 32
    %v614 = vpop.permute.xlu0 %613
    %v617 = vadd.f32 %v597, %v612
    %v618 = vadd.f32 %v598, %v614
    %v619 = vtanh.pop %v617
    %v620 = vtanh.pop %v618
    %623 = vrot.lane.b32.xlu0 %v619, 64
    %v624 = vpop.permute.xlu0 %623
    %625 = vrot.lane.b32.xlu0 %v620, 64
    %v626 = vpop.permute.xlu0 %625
    %v629 = vmul.f32 %v592, %v624
    %v630 = vmul.f32 %v594, %v626
    %633 = vrot.lane.b32.xlu0 %v629, 32
    %v634 = vpop.permute.xlu0 %633
    %635 = vrot.lane.b32.xlu0 %v630, 32
    %v636 = vpop.permute.xlu0 %635
    %639 = vst.msk [vmem:[#allocation9 + $0x3] sm:$0x1] %vm211, %v634
    %640 = vst.msk [vmem:[#allocation9 + $0x13] sm:$0x1] %vm211, %v636
    %v641 = vld [vmem:[#allocation4 + $0x4] sm:$0x1]
    %v642 = vld [vmem:[#allocation4 + $0x14] sm:$0x1]
    %v643 = vrot.slane %v630, 7
    %v644 = vsel %vm217, %v643, %v629
    %645 = vrot.lane.b32.xlu0 %v644, 32
    %v646 = vpop.permute.xlu0 %645
    %v647 = vsel %vm67, %v646, 0
    %649 = vmatprep.subr.mxu0 0.0
    %650 = vmatpush1.msra.mxu0 %v59
    %651 = vmatprep.subr.mxu0 0.0
    %652 = vmatpush1.msra.mxu0 %v60
    %653 = vmatprep.subr.mxu0 0.0
    %654 = vmatpush1.msra.mxu0 %v61
    %655 = vmatprep.subr.mxu0 0.0
    %656 = vmatpush1.msra.mxu0 %v62
    %657 = vmatprep.subr.mxu0 0.0
    %658 = vmatpush1.msra.mxu0 0.0
    %659 = vmatprep.subr.mxu0 0.0
    %660 = vmatpush1.msra.mxu0 0.0
    %661 = vmatprep.subr.mxu0 0.0
    %662 = vmatpush1.msra.mxu0 0.0
    %663 = vmatprep.subr.mxu0 0.0
    %664 = vmatpush1.msra.mxu0 0.0
    %665 = vmatprep.subr.mxu0 0.0
    %666 = vmatpush1.msra.mxu0 0.0
    %667 = vmatprep.subr.mxu0 0.0
    %668 = vmatpush1.msra.mxu0 0.0
    %669 = vmatprep.subr.mxu0 0.0
    %670 = vmatpush1.msra.mxu0 0.0
    %671 = vmatprep.subr.mxu0 0.0
    %672 = vmatpush1.msra.mxu0 0.0
    %673 = vmatprep.subr.mxu0 0.0
    %674 = vmatpush1.msra.mxu0 0.0
    %675 = vmatprep.subr.mxu0 0.0
    %676 = vmatpush1.msra.mxu0 0.0
    %677 = vmatprep.subr.mxu0 0.0
    %678 = vmatpush1.msra.mxu0 0.0
    %679 = vmatprep.subr.mxu0 0.0
    %680 = vmatpush1.msra.mxu0 0.0
    %681 = vmatprep.subr.mxu0 0.0
    %682 = vmatpush1.msra.mxu0 0.0
    %683 = vmatprep.subr.mxu0 0.0
    %684 = vmatpush1.msra.mxu0 0.0
    %685 = vmatprep.subr.mxu0 0.0
    %686 = vmatpush1.msra.mxu0 0.0
    %687 = vmatprep.subr.mxu0 0.0
    %688 = vmatpush1.msra.mxu0 0.0
    %689 = vmatprep.subr.mxu0 0.0
    %690 = vmatpush1.msra.mxu0 0.0
    %691 = vmatprep.subr.mxu0 0.0
    %692 = vmatpush1.msra.mxu0 0.0
    %693 = vmatprep.subr.mxu0 0.0
    %694 = vmatpush1.msra.mxu0 0.0
    %695 = vmatprep.subr.mxu0 0.0
    %696 = vmatpush1.msra.mxu0 0.0
    %697 = vmatprep.subr.mxu0 0.0
    %698 = vmatpush1.msra.mxu0 0.0
    %699 = vmatprep.subr.mxu0 0.0
    %700 = vmatpush1.msra.mxu0 0.0
    %701 = vmatprep.subr.mxu0 0.0
    %702 = vmatpush1.msra.mxu0 0.0
    %703 = vmatprep.subr.mxu0 0.0
    %704 = vmatpush1.msra.mxu0 0.0
    %705 = vmatprep.subr.mxu0 0.0
    %706 = vmatpush1.msra.mxu0 0.0
    %707 = vmatprep.subr.mxu0 0.0
    %708 = vmatpush1.msra.mxu0 0.0
    %709 = vmatprep.subr.mxu0 0.0
    %710 = vmatpush1.msra.mxu0 0.0
    %711 = vmatprep.subr.mxu0 0.0
    %712 = vmatpush1.msra.mxu0 0.0
    %713 = vmatprep.mubr.f32.mxu0 0.0
    %714 = vmatmul.mubr.f32.gmra.mrb[0].mxu0 %v647
    %v715 = vpop.f32.mrb[0].mxu0
    %v716 = vadd.f32 0.0, %v715
    %v717 = vpop.f32.mrb[0].mxu0
    %718 = vdwg.mxu0
    %v720 = vrot.slane %v716, 1
    %v723 = vadd.f32 %v641, %v716
    %v724 = vadd.f32 %v642, %v720
    %v725 = vxor.u32 %v723, 2147483648
    %v726 = vxor.u32 %v724, 2147483648
    %v727 = vmul.f32 %v725, 1.442695
    %v728 = vpow.pop %v727
    %v729 = vmul.f32 %v726, 1.442695
    %v730 = vpow.pop %v729
    %v731 = vadd.f32 %v728, 1.0
    %v732 = vadd.f32 %v730, 1.0
    %v733 = vrcp.pop %v731
    %v734 = vmul.f32 1.0, %v733
    %v735 = vrcp.pop %v732
    %v736 = vmul.f32 1.0, %v735
    %v737 = vtanh.pop %v723
    %v738 = vtanh.pop %v724
    %v739 = vmul.f32 %v734, %v617
    %v740 = vmul.f32 %v736, %v618
    %743 = vrot.lane.b32.xlu0 %v737, 64
    %v744 = vpop.permute.xlu0 %743
    %745 = vrot.lane.b32.xlu0 %v738, 64
    %v746 = vpop.permute.xlu0 %745
    %v749 = vmul.f32 %v734, %v744
    %v750 = vmul.f32 %v736, %v746
    %753 = vrot.lane.b32.xlu0 %v749, 32
    %v754 = vpop.permute.xlu0 %753
    %755 = vrot.lane.b32.xlu0 %v750, 32
    %v756 = vpop.permute.xlu0 %755
    %v759 = vadd.f32 %v739, %v754
    %v760 = vadd.f32 %v740, %v756
    %v761 = vtanh.pop %v759
    %v762 = vtanh.pop %v760
    %765 = vrot.lane.b32.xlu0 %v761, 64
    %v766 = vpop.permute.xlu0 %765
    %767 = vrot.lane.b32.xlu0 %v762, 64
    %v768 = vpop.permute.xlu0 %767
    %v771 = vmul.f32 %v734, %v766
    %v772 = vmul.f32 %v736, %v768
    %775 = vrot.lane.b32.xlu0 %v771, 32
    %v776 = vpop.permute.xlu0 %775
    %777 = vrot.lane.b32.xlu0 %v772, 32
    %v778 = vpop.permute.xlu0 %777
    %781 = vst.msk [vmem:[#allocation9 + $0x4] sm:$0x1] %vm211, %v776
    %782 = vst.msk [vmem:[#allocation9 + $0x14] sm:$0x1] %vm211, %v778
    %v783 = vld [vmem:[#allocation4 + $0x5] sm:$0x1]
    %v784 = vld [vmem:[#allocation4 + $0x15] sm:$0x1]
    %v785 = vrot.slane %v772, 7
    %v786 = vsel %vm217, %v785, %v771
    %787 = vrot.lane.b32.xlu0 %v786, 32
    %v788 = vpop.permute.xlu0 %787
    %v789 = vsel %vm67, %v788, 0
    %791 = vmatprep.subr.mxu0 0.0
    %792 = vmatpush1.msra.mxu0 %v59
    %793 = vmatprep.subr.mxu0 0.0
    %794 = vmatpush1.msra.mxu0 %v60
    %795 = vmatprep.subr.mxu0 0.0
    %796 = vmatpush1.msra.mxu0 %v61
    %797 = vmatprep.subr.mxu0 0.0
    %798 = vmatpush1.msra.mxu0 %v62
    %799 = vmatprep.subr.mxu0 0.0
    %800 = vmatpush1.msra.mxu0 0.0
    %801 = vmatprep.subr.mxu0 0.0
    %802 = vmatpush1.msra.mxu0 0.0
    %803 = vmatprep.subr.mxu0 0.0
    %804 = vmatpush1.msra.mxu0 0.0
    %805 = vmatprep.subr.mxu0 0.0
    %806 = vmatpush1.msra.mxu0 0.0
    %807 = vmatprep.subr.mxu0 0.0
    %808 = vmatpush1.msra.mxu0 0.0
    %809 = vmatprep.subr.mxu0 0.0
    %810 = vmatpush1.msra.mxu0 0.0
    %811 = vmatprep.subr.mxu0 0.0
    %812 = vmatpush1.msra.mxu0 0.0
    %813 = vmatprep.subr.mxu0 0.0
    %814 = vmatpush1.msra.mxu0 0.0
    %815 = vmatprep.subr.mxu0 0.0
    %816 = vmatpush1.msra.mxu0 0.0
    %817 = vmatprep.subr.mxu0 0.0
    %818 = vmatpush1.msra.mxu0 0.0
    %819 = vmatprep.subr.mxu0 0.0
    %820 = vmatpush1.msra.mxu0 0.0
    %821 = vmatprep.subr.mxu0 0.0
    %822 = vmatpush1.msra.mxu0 0.0
    %823 = vmatprep.subr.mxu0 0.0
    %824 = vmatpush1.msra.mxu0 0.0
    %825 = vmatprep.subr.mxu0 0.0
    %826 = vmatpush1.msra.mxu0 0.0
    %827 = vmatprep.subr.mxu0 0.0
    %828 = vmatpush1.msra.mxu0 0.0
    %829 = vmatprep.subr.mxu0 0.0
    %830 = vmatpush1.msra.mxu0 0.0
    %831 = vmatprep.subr.mxu0 0.0
    %832 = vmatpush1.msra.mxu0 0.0
    %833 = vmatprep.subr.mxu0 0.0
    %834 = vmatpush1.msra.mxu0 0.0
    %835 = vmatprep.subr.mxu0 0.0
    %836 = vmatpush1.msra.mxu0 0.0
    %837 = vmatprep.subr.mxu0 0.0
    %838 = vmatpush1.msra.mxu0 0.0
    %839 = vmatprep.subr.mxu0 0.0
    %840 = vmatpush1.msra.mxu0 0.0
    %841 = vmatprep.subr.mxu0 0.0
    %842 = vmatpush1.msra.mxu0 0.0
    %843 = vmatprep.subr.mxu0 0.0
    %844 = vmatpush1.msra.mxu0 0.0
    %845 = vmatprep.subr.mxu0 0.0
    %846 = vmatpush1.msra.mxu0 0.0
    %847 = vmatprep.subr.mxu0 0.0
    %848 = vmatpush1.msra.mxu0 0.0
    %849 = vmatprep.subr.mxu0 0.0
    %850 = vmatpush1.msra.mxu0 0.0
    %851 = vmatprep.subr.mxu0 0.0
    %852 = vmatpush1.msra.mxu0 0.0
    %853 = vmatprep.subr.mxu0 0.0
    %854 = vmatpush1.msra.mxu0 0.0
    %855 = vmatprep.mubr.f32.mxu0 0.0
    %856 = vmatmul.mubr.f32.gmra.mrb[0].mxu0 %v789
    %v857 = vpop.f32.mrb[0].mxu0
    %v858 = vadd.f32 0.0, %v857
    %v859 = vpop.f32.mrb[0].mxu0
    %860 = vdwg.mxu0
    %v862 = vrot.slane %v858, 1
    %v865 = vadd.f32 %v783, %v858
    %v866 = vadd.f32 %v784, %v862
    %v867 = vxor.u32 %v865, 2147483648
    %v868 = vxor.u32 %v866, 2147483648
    %v869 = vmul.f32 %v867, 1.442695
    %v870 = vpow.pop %v869
    %v871 = vmul.f32 %v868, 1.442695
    %v872 = vpow.pop %v871
    %v873 = vadd.f32 %v870, 1.0
    %v874 = vadd.f32 %v872, 1.0
    %v875 = vrcp.pop %v873
    %v876 = vmul.f32 1.0, %v875
    %v877 = vrcp.pop %v874
    %v878 = vmul.f32 1.0, %v877
    %v879 = vtanh.pop %v865
    %v880 = vtanh.pop %v866
    %v881 = vmul.f32 %v876, %v759
    %v882 = vmul.f32 %v878, %v760
    %885 = vrot.lane.b32.xlu0 %v879, 64
    %v886 = vpop.permute.xlu0 %885
    %887 = vrot.lane.b32.xlu0 %v880, 64
    %v888 = vpop.permute.xlu0 %887
    %v891 = vmul.f32 %v876, %v886
    %v892 = vmul.f32 %v878, %v888
    %895 = vrot.lane.b32.xlu0 %v891, 32
    %v896 = vpop.permute.xlu0 %895
    %897 = vrot.lane.b32.xlu0 %v892, 32
    %v898 = vpop.permute.xlu0 %897
    %v901 = vadd.f32 %v881, %v896
    %v902 = vadd.f32 %v882, %v898
    %v903 = vtanh.pop %v901
    %v904 = vtanh.pop %v902
    %907 = vrot.lane.b32.xlu0 %v903, 64
    %v908 = vpop.permute.xlu0 %907
    %909 = vrot.lane.b32.xlu0 %v904, 64
    %v910 = vpop.permute.xlu0 %909
    %v913 = vmul.f32 %v876, %v908
    %v914 = vmul.f32 %v878, %v910
    %917 = vrot.lane.b32.xlu0 %v913, 32
    %v918 = vpop.permute.xlu0 %917
    %919 = vrot.lane.b32.xlu0 %v914, 32
    %v920 = vpop.permute.xlu0 %919
    %923 = vst.msk [vmem:[#allocation9 + $0x5] sm:$0x1] %vm211, %v918
    %924 = vst.msk [vmem:[#allocation9 + $0x15] sm:$0x1] %vm211, %v920
    %v925 = vld [vmem:[#allocation4 + $0x6] sm:$0x1]
    %v926 = vld [vmem:[#allocation4 + $0x16] sm:$0x1]
    %v927 = vrot.slane %v914, 7
    %v928 = vsel %vm217, %v927, %v913
    %929 = vrot.lane.b32.xlu0 %v928, 32
    %v930 = vpop.permute.xlu0 %929
    %v931 = vsel %vm67, %v930, 0
    %933 = vmatprep.subr.mxu0 0.0
    %934 = vmatpush1.msra.mxu0 %v59
    %935 = vmatprep.subr.mxu0 0.0
    %936 = vmatpush1.msra.mxu0 %v60
    %937 = vmatprep.subr.mxu0 0.0
    %938 = vmatpush1.msra.mxu0 %v61
    %939 = vmatprep.subr.mxu0 0.0
    %940 = vmatpush1.msra.mxu0 %v62
    %941 = vmatprep.subr.mxu0 0.0
    %942 = vmatpush1.msra.mxu0 0.0
    %943 = vmatprep.subr.mxu0 0.0
    %944 = vmatpush1.msra.mxu0 0.0
    %945 = vmatprep.subr.mxu0 0.0
    %946 = vmatpush1.msra.mxu0 0.0
    %947 = vmatprep.subr.mxu0 0.0
    %948 = vmatpush1.msra.mxu0 0.0
    %949 = vmatprep.subr.mxu0 0.0
    %950 = vmatpush1.msra.mxu0 0.0
    %951 = vmatprep.subr.mxu0 0.0
    %952 = vmatpush1.msra.mxu0 0.0
    %953 = vmatprep.subr.mxu0 0.0
    %954 = vmatpush1.msra.mxu0 0.0
    %955 = vmatprep.subr.mxu0 0.0
    %956 = vmatpush1.msra.mxu0 0.0
    %957 = vmatprep.subr.mxu0 0.0
    %958 = vmatpush1.msra.mxu0 0.0
    %959 = vmatprep.subr.mxu0 0.0
    %960 = vmatpush1.msra.mxu0 0.0
    %961 = vmatprep.subr.mxu0 0.0
    %962 = vmatpush1.msra.mxu0 0.0
    %963 = vmatprep.subr.mxu0 0.0
    %964 = vmatpush1.msra.mxu0 0.0
    %965 = vmatprep.subr.mxu0 0.0
    %966 = vmatpush1.msra.mxu0 0.0
    %967 = vmatprep.subr.mxu0 0.0
    %968 = vmatpush1.msra.mxu0 0.0
    %969 = vmatprep.subr.mxu0 0.0
    %970 = vmatpush1.msra.mxu0 0.0
    %971 = vmatprep.subr.mxu0 0.0
    %972 = vmatpush1.msra.mxu0 0.0
    %973 = vmatprep.subr.mxu0 0.0
    %974 = vmatpush1.msra.mxu0 0.0
    %975 = vmatprep.subr.mxu0 0.0
    %976 = vmatpush1.msra.mxu0 0.0
    %977 = vmatprep.subr.mxu0 0.0
    %978 = vmatpush1.msra.mxu0 0.0
    %979 = vmatprep.subr.mxu0 0.0
    %980 = vmatpush1.msra.mxu0 0.0
    %981 = vmatprep.subr.mxu0 0.0
    %982 = vmatpush1.msra.mxu0 0.0
    %983 = vmatprep.subr.mxu0 0.0
    %984 = vmatpush1.msra.mxu0 0.0
    %985 = vmatprep.subr.mxu0 0.0
    %986 = vmatpush1.msra.mxu0 0.0
    %987 = vmatprep.subr.mxu0 0.0
    %988 = vmatpush1.msra.mxu0 0.0
    %989 = vmatprep.subr.mxu0 0.0
    %990 = vmatpush1.msra.mxu0 0.0
    %991 = vmatprep.subr.mxu0 0.0
    %992 = vmatpush1.msra.mxu0 0.0
    %993 = vmatprep.subr.mxu0 0.0
    %994 = vmatpush1.msra.mxu0 0.0
    %995 = vmatprep.subr.mxu0 0.0
    %996 = vmatpush1.msra.mxu0 0.0
    %997 = vmatprep.mubr.f32.mxu0 0.0
    %998 = vmatmul.mubr.f32.gmra.mrb[0].mxu0 %v931
    %v999 = vpop.f32.mrb[0].mxu0
    %v1000 = vadd.f32 0.0, %v999
    %v1001 = vpop.f32.mrb[0].mxu0
    %1002 = vdwg.mxu0
    %v1004 = vrot.slane %v1000, 1
    %v1007 = vadd.f32 %v925, %v1000
    %v1008 = vadd.f32 %v926, %v1004
    %v1009 = vxor.u32 %v1007, 2147483648
    %v1010 = vxor.u32 %v1008, 2147483648
    %v1011 = vmul.f32 %v1009, 1.442695
    %v1012 = vpow.pop %v1011
    %v1013 = vmul.f32 %v1010, 1.442695
    %v1014 = vpow.pop %v1013
    %v1015 = vadd.f32 %v1012, 1.0
    %v1016 = vadd.f32 %v1014, 1.0
    %v1017 = vrcp.pop %v1015
    %v1018 = vmul.f32 1.0, %v1017
    %v1019 = vrcp.pop %v1016
    %v1020 = vmul.f32 1.0, %v1019
    %v1021 = vtanh.pop %v1007
    %v1022 = vtanh.pop %v1008
    %v1023 = vmul.f32 %v1018, %v901
    %v1024 = vmul.f32 %v1020, %v902
    %1027 = vrot.lane.b32.xlu0 %v1021, 64
    %v1028 = vpop.permute.xlu0 %1027
    %1029 = vrot.lane.b32.xlu0 %v1022, 64
    %v1030 = vpop.permute.xlu0 %1029
    %v1033 = vmul.f32 %v1018, %v1028
    %v1034 = vmul.f32 %v1020, %v1030
    %1037 = vrot.lane.b32.xlu0 %v1033, 32
    %v1038 = vpop.permute.xlu0 %1037
    %1039 = vrot.lane.b32.xlu0 %v1034, 32
    %v1040 = vpop.permute.xlu0 %1039
    %v1043 = vadd.f32 %v1023, %v1038
    %v1044 = vadd.f32 %v1024, %v1040
    %v1045 = vtanh.pop %v1043
    %v1046 = vtanh.pop %v1044
    %1049 = vrot.lane.b32.xlu0 %v1045, 64
    %v1050 = vpop.permute.xlu0 %1049
    %1051 = vrot.lane.b32.xlu0 %v1046, 64
    %v1052 = vpop.permute.xlu0 %1051
    %v1055 = vmul.f32 %v1018, %v1050
    %v1056 = vmul.f32 %v1020, %v1052
    %1059 = vrot.lane.b32.xlu0 %v1055, 32
    %v1060 = vpop.permute.xlu0 %1059
    %1061 = vrot.lane.b32.xlu0 %v1056, 32
    %v1062 = vpop.permute.xlu0 %1061
    %1065 = vst.msk [vmem:[#allocation9 + $0x6] sm:$0x1] %vm211, %v1060
    %1066 = vst.msk [vmem:[#allocation9 + $0x16] sm:$0x1] %vm211, %v1062
    %v1067 = vld [vmem:[#allocation4 + $0x7] sm:$0x1]
    %v1068 = vld [vmem:[#allocation4 + $0x17] sm:$0x1]
    %v1069 = vrot.slane %v1056, 7
    %v1070 = vsel %vm217, %v1069, %v1055
    %1071 = vrot.lane.b32.xlu0 %v1070, 32
    %v1072 = vpop.permute.xlu0 %1071
    %v1073 = vsel %vm67, %v1072, 0
    %1075 = vmatprep.subr.mxu0 0.0
    %1076 = vmatpush1.msra.mxu0 %v59
    %1077 = vmatprep.subr.mxu0 0.0
    %1078 = vmatpush1.msra.mxu0 %v60
    %1079 = vmatprep.subr.mxu0 0.0
    %1080 = vmatpush1.msra.mxu0 %v61
    %1081 = vmatprep.subr.mxu0 0.0
    %1082 = vmatpush1.msra.mxu0 %v62
    %1083 = vmatprep.subr.mxu0 0.0
    %1084 = vmatpush1.msra.mxu0 0.0
    %1085 = vmatprep.subr.mxu0 0.0
    %1086 = vmatpush1.msra.mxu0 0.0
    %1087 = vmatprep.subr.mxu0 0.0
    %1088 = vmatpush1.msra.mxu0 0.0
    %1089 = vmatprep.subr.mxu0 0.0
    %1090 = vmatpush1.msra.mxu0 0.0
    %1091 = vmatprep.subr.mxu0 0.0
    %1092 = vmatpush1.msra.mxu0 0.0
    %1093 = vmatprep.subr.mxu0 0.0
    %1094 = vmatpush1.msra.mxu0 0.0
    %1095 = vmatprep.subr.mxu0 0.0
    %1096 = vmatpush1.msra.mxu0 0.0
    %1097 = vmatprep.subr.mxu0 0.0
    %1098 = vmatpush1.msra.mxu0 0.0
    %1099 = vmatprep.subr.mxu0 0.0
    %1100 = vmatpush1.msra.mxu0 0.0
    %1101 = vmatprep.subr.mxu0 0.0
    %1102 = vmatpush1.msra.mxu0 0.0
    %1103 = vmatprep.subr.mxu0 0.0
    %1104 = vmatpush1.msra.mxu0 0.0
    %1105 = vmatprep.subr.mxu0 0.0
    %1106 = vmatpush1.msra.mxu0 0.0
    %1107 = vmatprep.subr.mxu0 0.0
    %1108 = vmatpush1.msra.mxu0 0.0
    %1109 = vmatprep.subr.mxu0 0.0
    %1110 = vmatpush1.msra.mxu0 0.0
    %1111 = vmatprep.subr.mxu0 0.0
    %1112 = vmatpush1.msra.mxu0 0.0
    %1113 = vmatprep.subr.mxu0 0.0
    %1114 = vmatpush1.msra.mxu0 0.0
    %1115 = vmatprep.subr.mxu0 0.0
    %1116 = vmatpush1.msra.mxu0 0.0
    %1117 = vmatprep.subr.mxu0 0.0
    %1118 = vmatpush1.msra.mxu0 0.0
    %1119 = vmatprep.subr.mxu0 0.0
    %1120 = vmatpush1.msra.mxu0 0.0
    %1121 = vmatprep.subr.mxu0 0.0
    %1122 = vmatpush1.msra.mxu0 0.0
    %1123 = vmatprep.subr.mxu0 0.0
    %1124 = vmatpush1.msra.mxu0 0.0
    %1125 = vmatprep.subr.mxu0 0.0
    %1126 = vmatpush1.msra.mxu0 0.0
    %1127 = vmatprep.subr.mxu0 0.0
    %1128 = vmatpush1.msra.mxu0 0.0
    %1129 = vmatprep.subr.mxu0 0.0
    %1130 = vmatpush1.msra.mxu0 0.0
    %1131 = vmatprep.subr.mxu0 0.0
    %1132 = vmatpush1.msra.mxu0 0.0
    %1133 = vmatprep.subr.mxu0 0.0
    %1134 = vmatpush1.msra.mxu0 0.0
    %1135 = vmatprep.subr.mxu0 0.0
    %1136 = vmatpush1.msra.mxu0 0.0
    %1137 = vmatprep.subr.mxu0 0.0
    %1138 = vmatpush1.msra.mxu0 0.0
    %1139 = vmatprep.mubr.f32.mxu0 0.0
    %1140 = vmatmul.mubr.f32.gmra.mrb[0].mxu0 %v1073
    %v1141 = vpop.f32.mrb[0].mxu0
    %v1142 = vadd.f32 0.0, %v1141
    %v1143 = vpop.f32.mrb[0].mxu0
    %1144 = vdwg.mxu0
    %v1146 = vrot.slane %v1142, 1
    %v1149 = vadd.f32 %v1067, %v1142
    %v1150 = vadd.f32 %v1068, %v1146
    %v1151 = vxor.u32 %v1149, 2147483648
    %v1152 = vxor.u32 %v1150, 2147483648
    %v1153 = vmul.f32 %v1151, 1.442695
    %v1154 = vpow.pop %v1153
    %v1155 = vmul.f32 %v1152, 1.442695
    %v1156 = vpow.pop %v1155
    %v1157 = vadd.f32 %v1154, 1.0
    %v1158 = vadd.f32 %v1156, 1.0
    %v1159 = vrcp.pop %v1157
    %v1160 = vmul.f32 1.0, %v1159
    %v1161 = vrcp.pop %v1158
    %v1162 = vmul.f32 1.0, %v1161
    %v1163 = vtanh.pop %v1149
    %v1164 = vtanh.pop %v1150
    %v1165 = vmul.f32 %v1160, %v1043
    %v1166 = vmul.f32 %v1162, %v1044
    %1169 = vrot.lane.b32.xlu0 %v1163, 64
    %v1170 = vpop.permute.xlu0 %1169
    %1171 = vrot.lane.b32.xlu0 %v1164, 64
    %v1172 = vpop.permute.xlu0 %1171
    %v1175 = vmul.f32 %v1160, %v1170
    %v1176 = vmul.f32 %v1162, %v1172
    %1179 = vrot.lane.b32.xlu0 %v1175, 32
    %v1180 = vpop.permute.xlu0 %1179
    %1181 = vrot.lane.b32.xlu0 %v1176, 32
    %v1182 = vpop.permute.xlu0 %1181
    %v1185 = vadd.f32 %v1165, %v1180
    %v1186 = vadd.f32 %v1166, %v1182
    %v1187 = vtanh.pop %v1185
    %v1188 = vtanh.pop %v1186
    %1191 = vrot.lane.b32.xlu0 %v1187, 64
    %v1192 = vpop.permute.xlu0 %1191
    %1193 = vrot.lane.b32.xlu0 %v1188, 64
    %v1194 = vpop.permute.xlu0 %1193
    %v1197 = vmul.f32 %v1160, %v1192
    %v1198 = vmul.f32 %v1162, %v1194
    %1201 = vrot.lane.b32.xlu0 %v1197, 32
    %v1202 = vpop.permute.xlu0 %1201
    %1203 = vrot.lane.b32.xlu0 %v1198, 32
    %v1204 = vpop.permute.xlu0 %1203
    %1207 = vst.msk [vmem:[#allocation9 + $0x7] sm:$0x1] %vm211, %v1202
    %1208 = vst.msk [vmem:[#allocation9 + $0x17] sm:$0x1] %vm211, %v1204
    %v1209 = vld [vmem:[#allocation4 + $0x8] sm:$0x1]
    %v1210 = vld [vmem:[#allocation4 + $0x18] sm:$0x1]
    %v1211 = vrot.slane %v1198, 7
    %v1212 = vsel %vm217, %v1211, %v1197
    %1213 = vrot.lane.b32.xlu0 %v1212, 32
    %v1214 = vpop.permute.xlu0 %1213
    %v1215 = vsel %vm67, %v1214, 0
    %1217 = vmatprep.subr.mxu0 0.0
    %1218 = vmatpush1.msra.mxu0 %v59
    %1219 = vmatprep.subr.mxu0 0.0
    %1220 = vmatpush1.msra.mxu0 %v60
    %1221 = vmatprep.subr.mxu0 0.0
    %1222 = vmatpush1.msra.mxu0 %v61
    %1223 = vmatprep.subr.mxu0 0.0
    %1224 = vmatpush1.msra.mxu0 %v62
    %1225 = vmatprep.subr.mxu0 0.0
    %1226 = vmatpush1.msra.mxu0 0.0
    %1227 = vmatprep.subr.mxu0 0.0
    %1228 = vmatpush1.msra.mxu0 0.0
    %1229 = vmatprep.subr.mxu0 0.0
    %1230 = vmatpush1.msra.mxu0 0.0
    %1231 = vmatprep.subr.mxu0 0.0
    %1232 = vmatpush1.msra.mxu0 0.0
    %1233 = vmatprep.subr.mxu0 0.0
    %1234 = vmatpush1.msra.mxu0 0.0
    %1235 = vmatprep.subr.mxu0 0.0
    %1236 = vmatpush1.msra.mxu0 0.0
    %1237 = vmatprep.subr.mxu0 0.0
    %1238 = vmatpush1.msra.mxu0 0.0
    %1239 = vmatprep.subr.mxu0 0.0
    %1240 = vmatpush1.msra.mxu0 0.0
    %1241 = vmatprep.subr.mxu0 0.0
    %1242 = vmatpush1.msra.mxu0 0.0
    %1243 = vmatprep.subr.mxu0 0.0
    %1244 = vmatpush1.msra.mxu0 0.0
    %1245 = vmatprep.subr.mxu0 0.0
    %1246 = vmatpush1.msra.mxu0 0.0
    %1247 = vmatprep.subr.mxu0 0.0
    %1248 = vmatpush1.msra.mxu0 0.0
    %1249 = vmatprep.subr.mxu0 0.0
    %1250 = vmatpush1.msra.mxu0 0.0
    %1251 = vmatprep.subr.mxu0 0.0
    %1252 = vmatpush1.msra.mxu0 0.0
    %1253 = vmatprep.subr.mxu0 0.0
    %1254 = vmatpush1.msra.mxu0 0.0
    %1255 = vmatprep.subr.mxu0 0.0
    %1256 = vmatpush1.msra.mxu0 0.0
    %1257 = vmatprep.subr.mxu0 0.0
    %1258 = vmatpush1.msra.mxu0 0.0
    %1259 = vmatprep.subr.mxu0 0.0
    %1260 = vmatpush1.msra.mxu0 0.0
    %1261 = vmatprep.subr.mxu0 0.0
    %1262 = vmatpush1.msra.mxu0 0.0
    %1263 = vmatprep.subr.mxu0 0.0
    %1264 = vmatpush1.msra.mxu0 0.0
    %1265 = vmatprep.subr.mxu0 0.0
    %1266 = vmatpush1.msra.mxu0 0.0
    %1267 = vmatprep.subr.mxu0 0.0
    %1268 = vmatpush1.msra.mxu0 0.0
    %1269 = vmatprep.subr.mxu0 0.0
    %1270 = vmatpush1.msra.mxu0 0.0
    %1271 = vmatprep.subr.mxu0 0.0
    %1272 = vmatpush1.msra.mxu0 0.0
    %1273 = vmatprep.subr.mxu0 0.0
    %1274 = vmatpush1.msra.mxu0 0.0
    %1275 = vmatprep.subr.mxu0 0.0
    %1276 = vmatpush1.msra.mxu0 0.0
    %1277 = vmatprep.subr.mxu0 0.0
    %1278 = vmatpush1.msra.mxu0 0.0
    %1279 = vmatprep.subr.mxu0 0.0
    %1280 = vmatpush1.msra.mxu0 0.0
    %1281 = vmatprep.mubr.f32.mxu0 0.0
    %1282 = vmatmul.mubr.f32.gmra.mrb[0].mxu0 %v1215
    %v1283 = vpop.f32.mrb[0].mxu0
    %v1284 = vadd.f32 0.0, %v1283
    %v1285 = vpop.f32.mrb[0].mxu0
    %1286 = vdwg.mxu0
    %v1288 = vrot.slane %v1284, 1
    %v1291 = vadd.f32 %v1209, %v1284
    %v1292 = vadd.f32 %v1210, %v1288
    %v1293 = vxor.u32 %v1291, 2147483648
    %v1294 = vxor.u32 %v1292, 2147483648
    %v1295 = vmul.f32 %v1293, 1.442695
    %v1296 = vpow.pop %v1295
    %v1297 = vmul.f32 %v1294, 1.442695
    %v1298 = vpow.pop %v1297
    %v1299 = vadd.f32 %v1296, 1.0
    %v1300 = vadd.f32 %v1298, 1.0
    %v1301 = vrcp.pop %v1299
    %v1302 = vmul.f32 1.0, %v1301
    %v1303 = vrcp.pop %v1300
    %v1304 = vmul.f32 1.0, %v1303
    %v1305 = vtanh.pop %v1291
    %v1306 = vtanh.pop %v1292
    %v1307 = vmul.f32 %v1302, %v1185
    %v1308 = vmul.f32 %v1304, %v1186
    %1311 = vrot.lane.b32.xlu0 %v1305, 64
    %v1312 = vpop.permute.xlu0 %1311
    %1313 = vrot.lane.b32.xlu0 %v1306, 64
    %v1314 = vpop.permute.xlu0 %1313
    %v1317 = vmul.f32 %v1302, %v1312
    %v1318 = vmul.f32 %v1304, %v1314
    %1321 = vrot.lane.b32.xlu0 %v1317, 32
    %v1322 = vpop.permute.xlu0 %1321
    %1323 = vrot.lane.b32.xlu0 %v1318, 32
    %v1324 = vpop.permute.xlu0 %1323
    %v1327 = vadd.f32 %v1307, %v1322
    %v1328 = vadd.f32 %v1308, %v1324
    %v1329 = vtanh.pop %v1327
    %v1330 = vtanh.pop %v1328
    %1333 = vrot.lane.b32.xlu0 %v1329, 64
    %v1334 = vpop.permute.xlu0 %1333
    %1335 = vrot.lane.b32.xlu0 %v1330, 64
    %v1336 = vpop.permute.xlu0 %1335
    %v1339 = vmul.f32 %v1302, %v1334
    %v1340 = vmul.f32 %v1304, %v1336
    %1343 = vrot.lane.b32.xlu0 %v1339, 32
    %v1344 = vpop.permute.xlu0 %1343
    %1345 = vrot.lane.b32.xlu0 %v1340, 32
    %v1346 = vpop.permute.xlu0 %1345
    %1349 = vst.msk [vmem:[#allocation9 + $0x8] sm:$0x1] %vm211, %v1344
    %1350 = vst.msk [vmem:[#allocation9 + $0x18] sm:$0x1] %vm211, %v1346
    %v1351 = vld [vmem:[#allocation4 + $0x9] sm:$0x1]
    %v1352 = vld [vmem:[#allocation4 + $0x19] sm:$0x1]
    %v1353 = vrot.slane %v1340, 7
    %v1354 = vsel %vm217, %v1353, %v1339
    %1355 = vrot.lane.b32.xlu0 %v1354, 32
    %v1356 = vpop.permute.xlu0 %1355
    %v1357 = vsel %vm67, %v1356, 0
    %1359 = vmatprep.subr.mxu0 0.0
    %1360 = vmatpush1.msra.mxu0 %v59
    %1361 = vmatprep.subr.mxu0 0.0
    %1362 = vmatpush1.msra.mxu0 %v60
    %1363 = vmatprep.subr.mxu0 0.0
    %1364 = vmatpush1.msra.mxu0 %v61
    %1365 = vmatprep.subr.mxu0 0.0
    %1366 = vmatpush1.msra.mxu0 %v62
    %1367 = vmatprep.subr.mxu0 0.0
    %1368 = vmatpush1.msra.mxu0 0.0
    %1369 = vmatprep.subr.mxu0 0.0
    %1370 = vmatpush1.msra.mxu0 0.0
    %1371 = vmatprep.subr.mxu0 0.0
    %1372 = vmatpush1.msra.mxu0 0.0
    %1373 = vmatprep.subr.mxu0 0.0
    %1374 = vmatpush1.msra.mxu0 0.0
    %1375 = vmatprep.subr.mxu0 0.0
    %1376 = vmatpush1.msra.mxu0 0.0
    %1377 = vmatprep.subr.mxu0 0.0
    %1378 = vmatpush1.msra.mxu0 0.0
    %1379 = vmatprep.subr.mxu0 0.0
    %1380 = vmatpush1.msra.mxu0 0.0
    %1381 = vmatprep.subr.mxu0 0.0
    %1382 = vmatpush1.msra.mxu0 0.0
    %1383 = vmatprep.subr.mxu0 0.0
    %1384 = vmatpush1.msra.mxu0 0.0
    %1385 = vmatprep.subr.mxu0 0.0
    %1386 = vmatpush1.msra.mxu0 0.0
    %1387 = vmatprep.subr.mxu0 0.0
    %1388 = vmatpush1.msra.mxu0 0.0
    %1389 = vmatprep.subr.mxu0 0.0
    %1390 = vmatpush1.msra.mxu0 0.0
    %1391 = vmatprep.subr.mxu0 0.0
    %1392 = vmatpush1.msra.mxu0 0.0
    %1393 = vmatprep.subr.mxu0 0.0
    %1394 = vmatpush1.msra.mxu0 0.0
    %1395 = vmatprep.subr.mxu0 0.0
    %1396 = vmatpush1.msra.mxu0 0.0
    %1397 = vmatprep.subr.mxu0 0.0
    %1398 = vmatpush1.msra.mxu0 0.0
    %1399 = vmatprep.subr.mxu0 0.0
    %1400 = vmatpush1.msra.mxu0 0.0
    %1401 = vmatprep.subr.mxu0 0.0
    %1402 = vmatpush1.msra.mxu0 0.0
    %1403 = vmatprep.subr.mxu0 0.0
    %1404 = vmatpush1.msra.mxu0 0.0
    %1405 = vmatprep.subr.mxu0 0.0
    %1406 = vmatpush1.msra.mxu0 0.0
    %1407 = vmatprep.subr.mxu0 0.0
    %1408 = vmatpush1.msra.mxu0 0.0
    %1409 = vmatprep.subr.mxu0 0.0
    %1410 = vmatpush1.msra.mxu0 0.0
    %1411 = vmatprep.subr.mxu0 0.0
    %1412 = vmatpush1.msra.mxu0 0.0
    %1413 = vmatprep.subr.mxu0 0.0
    %1414 = vmatpush1.msra.mxu0 0.0
    %1415 = vmatprep.subr.mxu0 0.0
    %1416 = vmatpush1.msra.mxu0 0.0
    %1417 = vmatprep.subr.mxu0 0.0
    %1418 = vmatpush1.msra.mxu0 0.0
    %1419 = vmatprep.subr.mxu0 0.0
    %1420 = vmatpush1.msra.mxu0 0.0
    %1421 = vmatprep.subr.mxu0 0.0
    %1422 = vmatpush1.msra.mxu0 0.0
    %1423 = vmatprep.mubr.f32.mxu0 0.0
    %1424 = vmatmul.mubr.f32.gmra.mrb[0].mxu0 %v1357
    %v1425 = vpop.f32.mrb[0].mxu0
    %v1426 = vadd.f32 0.0, %v1425
    %v1427 = vpop.f32.mrb[0].mxu0
    %1428 = vdwg.mxu0
    %v1430 = vrot.slane %v1426, 1
    %v1433 = vadd.f32 %v1351, %v1426
    %v1434 = vadd.f32 %v1352, %v1430
    %v1435 = vxor.u32 %v1433, 2147483648
    %v1436 = vxor.u32 %v1434, 2147483648
    %v1437 = vmul.f32 %v1435, 1.442695
    %v1438 = vpow.pop %v1437
    %v1439 = vmul.f32 %v1436, 1.442695
    %v1440 = vpow.pop %v1439
    %v1441 = vadd.f32 %v1438, 1.0
    %v1442 = vadd.f32 %v1440, 1.0
    %v1443 = vrcp.pop %v1441
    %v1444 = vmul.f32 1.0, %v1443
    %v1445 = vrcp.pop %v1442
    %v1446 = vmul.f32 1.0, %v1445
    %v1447 = vtanh.pop %v1433
    %v1448 = vtanh.pop %v1434
    %v1449 = vmul.f32 %v1444, %v1327
    %v1450 = vmul.f32 %v1446, %v1328
    %1453 = vrot.lane.b32.xlu0 %v1447, 64
    %v1454 = vpop.permute.xlu0 %1453
    %1455 = vrot.lane.b32.xlu0 %v1448, 64
    %v1456 = vpop.permute.xlu0 %1455
    %v1459 = vmul.f32 %v1444, %v1454
    %v1460 = vmul.f32 %v1446, %v1456
    %1463 = vrot.lane.b32.xlu0 %v1459, 32
    %v1464 = vpop.permute.xlu0 %1463
    %1465 = vrot.lane.b32.xlu0 %v1460, 32
    %v1466 = vpop.permute.xlu0 %1465
    %v1469 = vadd.f32 %v1449, %v1464
    %v1470 = vadd.f32 %v1450, %v1466
    %v1471 = vtanh.pop %v1469
    %v1472 = vtanh.pop %v1470
    %1475 = vrot.lane.b32.xlu0 %v1471, 64
    %v1476 = vpop.permute.xlu0 %1475
    %1477 = vrot.lane.b32.xlu0 %v1472, 64
    %v1478 = vpop.permute.xlu0 %1477
    %v1481 = vmul.f32 %v1444, %v1476
    %v1482 = vmul.f32 %v1446, %v1478
    %1485 = vrot.lane.b32.xlu0 %v1481, 32
    %v1486 = vpop.permute.xlu0 %1485
    %1487 = vrot.lane.b32.xlu0 %v1482, 32
    %v1488 = vpop.permute.xlu0 %1487
    %1491 = vst.msk [vmem:[#allocation9 + $0x9] sm:$0x1] %vm211, %v1486
    %1492 = vst.msk [vmem:[#allocation9 + $0x19] sm:$0x1] %vm211, %v1488
    %v1493 = vld [vmem:[#allocation4 + $0xa] sm:$0x1]
    %v1494 = vld [vmem:[#allocation4 + $0x1a] sm:$0x1]
    %v1495 = vrot.slane %v1482, 7
    %v1496 = vsel %vm217, %v1495, %v1481
    %1497 = vrot.lane.b32.xlu0 %v1496, 32
    %v1498 = vpop.permute.xlu0 %1497
    %v1499 = vsel %vm67, %v1498, 0
    %1501 = vmatprep.subr.mxu0 0.0
    %1502 = vmatpush1.msra.mxu0 %v59
    %1503 = vmatprep.subr.mxu0 0.0
    %1504 = vmatpush1.msra.mxu0 %v60
    %1505 = vmatprep.subr.mxu0 0.0
    %1506 = vmatpush1.msra.mxu0 %v61
    %1507 = vmatprep.subr.mxu0 0.0
    %1508 = vmatpush1.msra.mxu0 %v62
    %1509 = vmatprep.subr.mxu0 0.0
    %1510 = vmatpush1.msra.mxu0 0.0
    %1511 = vmatprep.subr.mxu0 0.0
    %1512 = vmatpush1.msra.mxu0 0.0
    %1513 = vmatprep.subr.mxu0 0.0
    %1514 = vmatpush1.msra.mxu0 0.0
    %1515 = vmatprep.subr.mxu0 0.0
    %1516 = vmatpush1.msra.mxu0 0.0
    %1517 = vmatprep.subr.mxu0 0.0
    %1518 = vmatpush1.msra.mxu0 0.0
    %1519 = vmatprep.subr.mxu0 0.0
    %1520 = vmatpush1.msra.mxu0 0.0
    %1521 = vmatprep.subr.mxu0 0.0
    %1522 = vmatpush1.msra.mxu0 0.0
    %1523 = vmatprep.subr.mxu0 0.0
    %1524 = vmatpush1.msra.mxu0 0.0
    %1525 = vmatprep.subr.mxu0 0.0
    %1526 = vmatpush1.msra.mxu0 0.0
    %1527 = vmatprep.subr.mxu0 0.0
    %1528 = vmatpush1.msra.mxu0 0.0
    %1529 = vmatprep.subr.mxu0 0.0
    %1530 = vmatpush1.msra.mxu0 0.0
    %1531 = vmatprep.subr.mxu0 0.0
    %1532 = vmatpush1.msra.mxu0 0.0
    %1533 = vmatprep.subr.mxu0 0.0
    %1534 = vmatpush1.msra.mxu0 0.0
    %1535 = vmatprep.subr.mxu0 0.0
    %1536 = vmatpush1.msra.mxu0 0.0
    %1537 = vmatprep.subr.mxu0 0.0
    %1538 = vmatpush1.msra.mxu0 0.0
    %1539 = vmatprep.subr.mxu0 0.0
    %1540 = vmatpush1.msra.mxu0 0.0
    %1541 = vmatprep.subr.mxu0 0.0
    %1542 = vmatpush1.msra.mxu0 0.0
    %1543 = vmatprep.subr.mxu0 0.0
    %1544 = vmatpush1.msra.mxu0 0.0
    %1545 = vmatprep.subr.mxu0 0.0
    %1546 = vmatpush1.msra.mxu0 0.0
    %1547 = vmatprep.subr.mxu0 0.0
    %1548 = vmatpush1.msra.mxu0 0.0
    %1549 = vmatprep.subr.mxu0 0.0
    %1550 = vmatpush1.msra.mxu0 0.0
    %1551 = vmatprep.subr.mxu0 0.0
    %1552 = vmatpush1.msra.mxu0 0.0
    %1553 = vmatprep.subr.mxu0 0.0
    %1554 = vmatpush1.msra.mxu0 0.0
    %1555 = vmatprep.subr.mxu0 0.0
    %1556 = vmatpush1.msra.mxu0 0.0
    %1557 = vmatprep.subr.mxu0 0.0
    %1558 = vmatpush1.msra.mxu0 0.0
    %1559 = vmatprep.subr.mxu0 0.0
    %1560 = vmatpush1.msra.mxu0 0.0
    %1561 = vmatprep.subr.mxu0 0.0
    %1562 = vmatpush1.msra.mxu0 0.0
    %1563 = vmatprep.subr.mxu0 0.0
    %1564 = vmatpush1.msra.mxu0 0.0
    %1565 = vmatprep.mubr.f32.mxu0 0.0
    %1566 = vmatmul.mubr.f32.gmra.mrb[0].mxu0 %v1499
    %v1567 = vpop.f32.mrb[0].mxu0
    %v1568 = vadd.f32 0.0, %v1567
    %v1569 = vpop.f32.mrb[0].mxu0
    %1570 = vdwg.mxu0
    %v1572 = vrot.slane %v1568, 1
    %v1575 = vadd.f32 %v1493, %v1568
    %v1576 = vadd.f32 %v1494, %v1572
    %v1577 = vxor.u32 %v1575, 2147483648
    %v1578 = vxor.u32 %v1576, 2147483648
    %v1579 = vmul.f32 %v1577, 1.442695
    %v1580 = vpow.pop %v1579
    %v1581 = vmul.f32 %v1578, 1.442695
    %v1582 = vpow.pop %v1581
    %v1583 = vadd.f32 %v1580, 1.0
    %v1584 = vadd.f32 %v1582, 1.0
    %v1585 = vrcp.pop %v1583
    %v1586 = vmul.f32 1.0, %v1585
    %v1587 = vrcp.pop %v1584
    %v1588 = vmul.f32 1.0, %v1587
    %v1589 = vtanh.pop %v1575
    %v1590 = vtanh.pop %v1576
    %v1591 = vmul.f32 %v1586, %v1469
    %v1592 = vmul.f32 %v1588, %v1470
    %1595 = vrot.lane.b32.xlu0 %v1589, 64
    %v1596 = vpop.permute.xlu0 %1595
    %1597 = vrot.lane.b32.xlu0 %v1590, 64
    %v1598 = vpop.permute.xlu0 %1597
    %v1601 = vmul.f32 %v1586, %v1596
    %v1602 = vmul.f32 %v1588, %v1598
    %1605 = vrot.lane.b32.xlu0 %v1601, 32
    %v1606 = vpop.permute.xlu0 %1605
    %1607 = vrot.lane.b32.xlu0 %v1602, 32
    %v1608 = vpop.permute.xlu0 %1607
    %v1611 = vadd.f32 %v1591, %v1606
    %v1612 = vadd.f32 %v1592, %v1608
    %v1613 = vtanh.pop %v1611
    %v1614 = vtanh.pop %v1612
    %1617 = vrot.lane.b32.xlu0 %v1613, 64
    %v1618 = vpop.permute.xlu0 %1617
    %1619 = vrot.lane.b32.xlu0 %v1614, 64
    %v1620 = vpop.permute.xlu0 %1619
    %v1623 = vmul.f32 %v1586, %v1618
    %v1624 = vmul.f32 %v1588, %v1620
    %1627 = vrot.lane.b32.xlu0 %v1623, 32
    %v1628 = vpop.permute.xlu0 %1627
    %1629 = vrot.lane.b32.xlu0 %v1624, 32
    %v1630 = vpop.permute.xlu0 %1629
    %1633 = vst.msk [vmem:[#allocation9 + $0xa] sm:$0x1] %vm211, %v1628
    %1634 = vst.msk [vmem:[#allocation9 + $0x1a] sm:$0x1] %vm211, %v1630
    %v1635 = vld [vmem:[#allocation4 + $0xb] sm:$0x1]
    %v1636 = vld [vmem:[#allocation4 + $0x1b] sm:$0x1]
    %v1637 = vrot.slane %v1624, 7
    %v1638 = vsel %vm217, %v1637, %v1623
    %1639 = vrot.lane.b32.xlu0 %v1638, 32
    %v1640 = vpop.permute.xlu0 %1639
    %v1641 = vsel %vm67, %v1640, 0
    %1643 = vmatprep.subr.mxu0 0.0
    %1644 = vmatpush1.msra.mxu0 %v59
    %1645 = vmatprep.subr.mxu0 0.0
    %1646 = vmatpush1.msra.mxu0 %v60
    %1647 = vmatprep.subr.mxu0 0.0
    %1648 = vmatpush1.msra.mxu0 %v61
    %1649 = vmatprep.subr.mxu0 0.0
    %1650 = vmatpush1.msra.mxu0 %v62
    %1651 = vmatprep.subr.mxu0 0.0
    %1652 = vmatpush1.msra.mxu0 0.0
    %1653 = vmatprep.subr.mxu0 0.0
    %1654 = vmatpush1.msra.mxu0 0.0
    %1655 = vmatprep.subr.mxu0 0.0
    %1656 = vmatpush1.msra.mxu0 0.0
    %1657 = vmatprep.subr.mxu0 0.0
    %1658 = vmatpush1.msra.mxu0 0.0
    %1659 = vmatprep.subr.mxu0 0.0
    %1660 = vmatpush1.msra.mxu0 0.0
    %1661 = vmatprep.subr.mxu0 0.0
    %1662 = vmatpush1.msra.mxu0 0.0
    %1663 = vmatprep.subr.mxu0 0.0
    %1664 = vmatpush1.msra.mxu0 0.0
    %1665 = vmatprep.subr.mxu0 0.0
    %1666 = vmatpush1.msra.mxu0 0.0
    %1667 = vmatprep.subr.mxu0 0.0
    %1668 = vmatpush1.msra.mxu0 0.0
    %1669 = vmatprep.subr.mxu0 0.0
    %1670 = vmatpush1.msra.mxu0 0.0
    %1671 = vmatprep.subr.mxu0 0.0
    %1672 = vmatpush1.msra.mxu0 0.0
    %1673 = vmatprep.subr.mxu0 0.0
    %1674 = vmatpush1.msra.mxu0 0.0
    %1675 = vmatprep.subr.mxu0 0.0
    %1676 = vmatpush1.msra.mxu0 0.0
    %1677 = vmatprep.subr.mxu0 0.0
    %1678 = vmatpush1.msra.mxu0 0.0
    %1679 = vmatprep.subr.mxu0 0.0
    %1680 = vmatpush1.msra.mxu0 0.0
    %1681 = vmatprep.subr.mxu0 0.0
    %1682 = vmatpush1.msra.mxu0 0.0
    %1683 = vmatprep.subr.mxu0 0.0
    %1684 = vmatpush1.msra.mxu0 0.0
    %1685 = vmatprep.subr.mxu0 0.0
    %1686 = vmatpush1.msra.mxu0 0.0
    %1687 = vmatprep.subr.mxu0 0.0
    %1688 = vmatpush1.msra.mxu0 0.0
    %1689 = vmatprep.subr.mxu0 0.0
    %1690 = vmatpush1.msra.mxu0 0.0
    %1691 = vmatprep.subr.mxu0 0.0
    %1692 = vmatpush1.msra.mxu0 0.0
    %1693 = vmatprep.subr.mxu0 0.0
    %1694 = vmatpush1.msra.mxu0 0.0
    %1695 = vmatprep.subr.mxu0 0.0
    %1696 = vmatpush1.msra.mxu0 0.0
    %1697 = vmatprep.subr.mxu0 0.0
    %1698 = vmatpush1.msra.mxu0 0.0
    %1699 = vmatprep.subr.mxu0 0.0
    %1700 = vmatpush1.msra.mxu0 0.0
    %1701 = vmatprep.subr.mxu0 0.0
    %1702 = vmatpush1.msra.mxu0 0.0
    %1703 = vmatprep.subr.mxu0 0.0
    %1704 = vmatpush1.msra.mxu0 0.0
    %1705 = vmatprep.subr.mxu0 0.0
    %1706 = vmatpush1.msra.mxu0 0.0
    %1707 = vmatprep.mubr.f32.mxu0 0.0
    %1708 = vmatmul.mubr.f32.gmra.mrb[0].mxu0 %v1641
    %v1709 = vpop.f32.mrb[0].mxu0
    %v1710 = vadd.f32 0.0, %v1709
    %v1711 = vpop.f32.mrb[0].mxu0
    %1712 = vdwg.mxu0
    %v1714 = vrot.slane %v1710, 1
    %v1717 = vadd.f32 %v1635, %v1710
    %v1718 = vadd.f32 %v1636, %v1714
    %v1719 = vxor.u32 %v1717, 2147483648
    %v1720 = vxor.u32 %v1718, 2147483648
    %v1721 = vmul.f32 %v1719, 1.442695
    %v1722 = vpow.pop %v1721
    %v1723 = vmul.f32 %v1720, 1.442695
    %v1724 = vpow.pop %v1723
    %v1725 = vadd.f32 %v1722, 1.0
    %v1726 = vadd.f32 %v1724, 1.0
    %v1727 = vrcp.pop %v1725
    %v1728 = vmul.f32 1.0, %v1727
    %v1729 = vrcp.pop %v1726
    %v1730 = vmul.f32 1.0, %v1729
    %v1731 = vtanh.pop %v1717
    %v1732 = vtanh.pop %v1718
    %v1733 = vmul.f32 %v1728, %v1611
    %v1734 = vmul.f32 %v1730, %v1612
    %1737 = vrot.lane.b32.xlu0 %v1731, 64
    %v1738 = vpop.permute.xlu0 %1737
    %1739 = vrot.lane.b32.xlu0 %v1732, 64
    %v1740 = vpop.permute.xlu0 %1739
    %v1743 = vmul.f32 %v1728, %v1738
    %v1744 = vmul.f32 %v1730, %v1740
    %1747 = vrot.lane.b32.xlu0 %v1743, 32
    %v1748 = vpop.permute.xlu0 %1747
    %1749 = vrot.lane.b32.xlu0 %v1744, 32
    %v1750 = vpop.permute.xlu0 %1749
    %v1753 = vadd.f32 %v1733, %v1748
    %v1754 = vadd.f32 %v1734, %v1750
    %v1755 = vtanh.pop %v1753
    %v1756 = vtanh.pop %v1754
    %1759 = vrot.lane.b32.xlu0 %v1755, 64
    %v1760 = vpop.permute.xlu0 %1759
    %1761 = vrot.lane.b32.xlu0 %v1756, 64
    %v1762 = vpop.permute.xlu0 %1761
    %v1765 = vmul.f32 %v1728, %v1760
    %v1766 = vmul.f32 %v1730, %v1762
    %1769 = vrot.lane.b32.xlu0 %v1765, 32
    %v1770 = vpop.permute.xlu0 %1769
    %1771 = vrot.lane.b32.xlu0 %v1766, 32
    %v1772 = vpop.permute.xlu0 %1771
    %1775 = vst.msk [vmem:[#allocation9 + $0xb] sm:$0x1] %vm211, %v1770
    %1776 = vst.msk [vmem:[#allocation9 + $0x1b] sm:$0x1] %vm211, %v1772
    %v1777 = vld [vmem:[#allocation4 + $0xc] sm:$0x1]
    %v1778 = vld [vmem:[#allocation4 + $0x1c] sm:$0x1]
    %v1779 = vrot.slane %v1766, 7
    %v1780 = vsel %vm217, %v1779, %v1765
    %1781 = vrot.lane.b32.xlu0 %v1780, 32
    %v1782 = vpop.permute.xlu0 %1781
    %v1783 = vsel %vm67, %v1782, 0
    %1785 = vmatprep.subr.mxu0 0.0
    %1786 = vmatpush1.msra.mxu0 %v59
    %1787 = vmatprep.subr.mxu0 0.0
    %1788 = vmatpush1.msra.mxu0 %v60
    %1789 = vmatprep.subr.mxu0 0.0
    %1790 = vmatpush1.msra.mxu0 %v61
    %1791 = vmatprep.subr.mxu0 0.0
    %1792 = vmatpush1.msra.mxu0 %v62
    %1793 = vmatprep.subr.mxu0 0.0
    %1794 = vmatpush1.msra.mxu0 0.0
    %1795 = vmatprep.subr.mxu0 0.0
    %1796 = vmatpush1.msra.mxu0 0.0
    %1797 = vmatprep.subr.mxu0 0.0
    %1798 = vmatpush1.msra.mxu0 0.0
    %1799 = vmatprep.subr.mxu0 0.0
    %1800 = vmatpush1.msra.mxu0 0.0
    %1801 = vmatprep.subr.mxu0 0.0
    %1802 = vmatpush1.msra.mxu0 0.0
    %1803 = vmatprep.subr.mxu0 0.0
    %1804 = vmatpush1.msra.mxu0 0.0
    %1805 = vmatprep.subr.mxu0 0.0
    %1806 = vmatpush1.msra.mxu0 0.0
    %1807 = vmatprep.subr.mxu0 0.0
    %1808 = vmatpush1.msra.mxu0 0.0
    %1809 = vmatprep.subr.mxu0 0.0
    %1810 = vmatpush1.msra.mxu0 0.0
    %1811 = vmatprep.subr.mxu0 0.0
    %1812 = vmatpush1.msra.mxu0 0.0
    %1813 = vmatprep.subr.mxu0 0.0
    %1814 = vmatpush1.msra.mxu0 0.0
    %1815 = vmatprep.subr.mxu0 0.0
    %1816 = vmatpush1.msra.mxu0 0.0
    %1817 = vmatprep.subr.mxu0 0.0
    %1818 = vmatpush1.msra.mxu0 0.0
    %1819 = vmatprep.subr.mxu0 0.0
    %1820 = vmatpush1.msra.mxu0 0.0
    %1821 = vmatprep.subr.mxu0 0.0
    %1822 = vmatpush1.msra.mxu0 0.0
    %1823 = vmatprep.subr.mxu0 0.0
    %1824 = vmatpush1.msra.mxu0 0.0
    %1825 = vmatprep.subr.mxu0 0.0
    %1826 = vmatpush1.msra.mxu0 0.0
    %1827 = vmatprep.subr.mxu0 0.0
    %1828 = vmatpush1.msra.mxu0 0.0
    %1829 = vmatprep.subr.mxu0 0.0
    %1830 = vmatpush1.msra.mxu0 0.0
    %1831 = vmatprep.subr.mxu0 0.0
    %1832 = vmatpush1.msra.mxu0 0.0
    %1833 = vmatprep.subr.mxu0 0.0
    %1834 = vmatpush1.msra.mxu0 0.0
    %1835 = vmatprep.subr.mxu0 0.0
    %1836 = vmatpush1.msra.mxu0 0.0
    %1837 = vmatprep.subr.mxu0 0.0
    %1838 = vmatpush1.msra.mxu0 0.0
    %1839 = vmatprep.subr.mxu0 0.0
    %1840 = vmatpush1.msra.mxu0 0.0
    %1841 = vmatprep.subr.mxu0 0.0
    %1842 = vmatpush1.msra.mxu0 0.0
    %1843 = vmatprep.subr.mxu0 0.0
    %1844 = vmatpush1.msra.mxu0 0.0
    %1845 = vmatprep.subr.mxu0 0.0
    %1846 = vmatpush1.msra.mxu0 0.0
    %1847 = vmatprep.subr.mxu0 0.0
    %1848 = vmatpush1.msra.mxu0 0.0
    %1849 = vmatprep.mubr.f32.mxu0 0.0
    %1850 = vmatmul.mubr.f32.gmra.mrb[0].mxu0 %v1783
    %v1851 = vpop.f32.mrb[0].mxu0
    %v1852 = vadd.f32 0.0, %v1851
    %v1853 = vpop.f32.mrb[0].mxu0
    %1854 = vdwg.mxu0
    %v1856 = vrot.slane %v1852, 1
    %v1859 = vadd.f32 %v1777, %v1852
    %v1860 = vadd.f32 %v1778, %v1856
    %v1861 = vxor.u32 %v1859, 2147483648
    %v1862 = vxor.u32 %v1860, 2147483648
    %v1863 = vmul.f32 %v1861, 1.442695
    %v1864 = vpow.pop %v1863
    %v1865 = vmul.f32 %v1862, 1.442695
    %v1866 = vpow.pop %v1865
    %v1867 = vadd.f32 %v1864, 1.0
    %v1868 = vadd.f32 %v1866, 1.0
    %v1869 = vrcp.pop %v1867
    %v1870 = vmul.f32 1.0, %v1869
    %v1871 = vrcp.pop %v1868
    %v1872 = vmul.f32 1.0, %v1871
    %v1873 = vtanh.pop %v1859
    %v1874 = vtanh.pop %v1860
    %v1875 = vmul.f32 %v1870, %v1753
    %v1876 = vmul.f32 %v1872, %v1754
    %1879 = vrot.lane.b32.xlu0 %v1873, 64
    %v1880 = vpop.permute.xlu0 %1879
    %1881 = vrot.lane.b32.xlu0 %v1874, 64
    %v1882 = vpop.permute.xlu0 %1881
    %v1885 = vmul.f32 %v1870, %v1880
    %v1886 = vmul.f32 %v1872, %v1882
    %1889 = vrot.lane.b32.xlu0 %v1885, 32
    %v1890 = vpop.permute.xlu0 %1889
    %1891 = vrot.lane.b32.xlu0 %v1886, 32
    %v1892 = vpop.permute.xlu0 %1891
    %v1895 = vadd.f32 %v1875, %v1890
    %v1896 = vadd.f32 %v1876, %v1892
    %v1897 = vtanh.pop %v1895
    %v1898 = vtanh.pop %v1896
    %1901 = vrot.lane.b32.xlu0 %v1897, 64
    %v1902 = vpop.permute.xlu0 %1901
    %1903 = vrot.lane.b32.xlu0 %v1898, 64
    %v1904 = vpop.permute.xlu0 %1903
    %v1907 = vmul.f32 %v1870, %v1902
    %v1908 = vmul.f32 %v1872, %v1904
    %1911 = vrot.lane.b32.xlu0 %v1907, 32
    %v1912 = vpop.permute.xlu0 %1911
    %1913 = vrot.lane.b32.xlu0 %v1908, 32
    %v1914 = vpop.permute.xlu0 %1913
    %1917 = vst.msk [vmem:[#allocation9 + $0xc] sm:$0x1] %vm211, %v1912
    %1918 = vst.msk [vmem:[#allocation9 + $0x1c] sm:$0x1] %vm211, %v1914
    %v1919 = vld [vmem:[#allocation4 + $0xd] sm:$0x1]
    %v1920 = vld [vmem:[#allocation4 + $0x1d] sm:$0x1]
    %v1921 = vrot.slane %v1908, 7
    %v1922 = vsel %vm217, %v1921, %v1907
    %1923 = vrot.lane.b32.xlu0 %v1922, 32
    %v1924 = vpop.permute.xlu0 %1923
    %v1925 = vsel %vm67, %v1924, 0
    %1927 = vmatprep.subr.mxu0 0.0
    %1928 = vmatpush1.msra.mxu0 %v59
    %1929 = vmatprep.subr.mxu0 0.0
    %1930 = vmatpush1.msra.mxu0 %v60
    %1931 = vmatprep.subr.mxu0 0.0
    %1932 = vmatpush1.msra.mxu0 %v61
    %1933 = vmatprep.subr.mxu0 0.0
    %1934 = vmatpush1.msra.mxu0 %v62
    %1935 = vmatprep.subr.mxu0 0.0
    %1936 = vmatpush1.msra.mxu0 0.0
    %1937 = vmatprep.subr.mxu0 0.0
    %1938 = vmatpush1.msra.mxu0 0.0
    %1939 = vmatprep.subr.mxu0 0.0
    %1940 = vmatpush1.msra.mxu0 0.0
    %1941 = vmatprep.subr.mxu0 0.0
    %1942 = vmatpush1.msra.mxu0 0.0
    %1943 = vmatprep.subr.mxu0 0.0
    %1944 = vmatpush1.msra.mxu0 0.0
    %1945 = vmatprep.subr.mxu0 0.0
    %1946 = vmatpush1.msra.mxu0 0.0
    %1947 = vmatprep.subr.mxu0 0.0
    %1948 = vmatpush1.msra.mxu0 0.0
    %1949 = vmatprep.subr.mxu0 0.0
    %1950 = vmatpush1.msra.mxu0 0.0
    %1951 = vmatprep.subr.mxu0 0.0
    %1952 = vmatpush1.msra.mxu0 0.0
    %1953 = vmatprep.subr.mxu0 0.0
    %1954 = vmatpush1.msra.mxu0 0.0
    %1955 = vmatprep.subr.mxu0 0.0
    %1956 = vmatpush1.msra.mxu0 0.0
    %1957 = vmatprep.subr.mxu0 0.0
    %1958 = vmatpush1.msra.mxu0 0.0
    %1959 = vmatprep.subr.mxu0 0.0
    %1960 = vmatpush1.msra.mxu0 0.0
    %1961 = vmatprep.subr.mxu0 0.0
    %1962 = vmatpush1.msra.mxu0 0.0
    %1963 = vmatprep.subr.mxu0 0.0
    %1964 = vmatpush1.msra.mxu0 0.0
    %1965 = vmatprep.subr.mxu0 0.0
    %1966 = vmatpush1.msra.mxu0 0.0
    %1967 = vmatprep.subr.mxu0 0.0
    %1968 = vmatpush1.msra.mxu0 0.0
    %1969 = vmatprep.subr.mxu0 0.0
    %1970 = vmatpush1.msra.mxu0 0.0
    %1971 = vmatprep.subr.mxu0 0.0
    %1972 = vmatpush1.msra.mxu0 0.0
    %1973 = vmatprep.subr.mxu0 0.0
    %1974 = vmatpush1.msra.mxu0 0.0
    %1975 = vmatprep.subr.mxu0 0.0
    %1976 = vmatpush1.msra.mxu0 0.0
    %1977 = vmatprep.subr.mxu0 0.0
    %1978 = vmatpush1.msra.mxu0 0.0
    %1979 = vmatprep.subr.mxu0 0.0
    %1980 = vmatpush1.msra.mxu0 0.0
    %1981 = vmatprep.subr.mxu0 0.0
    %1982 = vmatpush1.msra.mxu0 0.0
    %1983 = vmatprep.subr.mxu0 0.0
    %1984 = vmatpush1.msra.mxu0 0.0
    %1985 = vmatprep.subr.mxu0 0.0
    %1986 = vmatpush1.msra.mxu0 0.0
    %1987 = vmatprep.subr.mxu0 0.0
    %1988 = vmatpush1.msra.mxu0 0.0
    %1989 = vmatprep.subr.mxu0 0.0
    %1990 = vmatpush1.msra.mxu0 0.0
    %1991 = vmatprep.mubr.f32.mxu0 0.0
    %1992 = vmatmul.mubr.f32.gmra.mrb[0].mxu0 %v1925
    %v1993 = vpop.f32.mrb[0].mxu0
    %v1994 = vadd.f32 0.0, %v1993
    %v1995 = vpop.f32.mrb[0].mxu0
    %1996 = vdwg.mxu0
    %v1998 = vrot.slane %v1994, 1
    %v2001 = vadd.f32 %v1919, %v1994
    %v2002 = vadd.f32 %v1920, %v1998
    %v2003 = vxor.u32 %v2001, 2147483648
    %v2004 = vxor.u32 %v2002, 2147483648
    %v2005 = vmul.f32 %v2003, 1.442695
    %v2006 = vpow.pop %v2005
    %v2007 = vmul.f32 %v2004, 1.442695
    %v2008 = vpow.pop %v2007
    %v2009 = vadd.f32 %v2006, 1.0
    %v2010 = vadd.f32 %v2008, 1.0
    %v2011 = vrcp.pop %v2009
    %v2012 = vmul.f32 1.0, %v2011
    %v2013 = vrcp.pop %v2010
    %v2014 = vmul.f32 1.0, %v2013
    %v2015 = vtanh.pop %v2001
    %v2016 = vtanh.pop %v2002
    %v2017 = vmul.f32 %v2012, %v1895
    %v2018 = vmul.f32 %v2014, %v1896
    %2021 = vrot.lane.b32.xlu0 %v2015, 64
    %v2022 = vpop.permute.xlu0 %2021
    %2023 = vrot.lane.b32.xlu0 %v2016, 64
    %v2024 = vpop.permute.xlu0 %2023
    %v2027 = vmul.f32 %v2012, %v2022
    %v2028 = vmul.f32 %v2014, %v2024
    %2031 = vrot.lane.b32.xlu0 %v2027, 32
    %v2032 = vpop.permute.xlu0 %2031
    %2033 = vrot.lane.b32.xlu0 %v2028, 32
    %v2034 = vpop.permute.xlu0 %2033
    %v2037 = vadd.f32 %v2017, %v2032
    %v2038 = vadd.f32 %v2018, %v2034
    %v2039 = vtanh.pop %v2037
    %v2040 = vtanh.pop %v2038
    %2043 = vrot.lane.b32.xlu0 %v2039, 64
    %v2044 = vpop.permute.xlu0 %2043
    %2045 = vrot.lane.b32.xlu0 %v2040, 64
    %v2046 = vpop.permute.xlu0 %2045
    %v2049 = vmul.f32 %v2012, %v2044
    %v2050 = vmul.f32 %v2014, %v2046
    %2053 = vrot.lane.b32.xlu0 %v2049, 32
    %v2054 = vpop.permute.xlu0 %2053
    %2055 = vrot.lane.b32.xlu0 %v2050, 32
    %v2056 = vpop.permute.xlu0 %2055
    %2059 = vst.msk [vmem:[#allocation9 + $0xd] sm:$0x1] %vm211, %v2054
    %2060 = vst.msk [vmem:[#allocation9 + $0x1d] sm:$0x1] %vm211, %v2056
    %v2061 = vld [vmem:[#allocation4 + $0xe] sm:$0x1]
    %v2062 = vld [vmem:[#allocation4 + $0x1e] sm:$0x1]
    %v2063 = vrot.slane %v2050, 7
    %v2064 = vsel %vm217, %v2063, %v2049
    %2065 = vrot.lane.b32.xlu0 %v2064, 32
    %v2066 = vpop.permute.xlu0 %2065
    %v2067 = vsel %vm67, %v2066, 0
    %2069 = vmatprep.subr.mxu0 0.0
    %2070 = vmatpush1.msra.mxu0 %v59
    %2071 = vmatprep.subr.mxu0 0.0
    %2072 = vmatpush1.msra.mxu0 %v60
    %2073 = vmatprep.subr.mxu0 0.0
    %2074 = vmatpush1.msra.mxu0 %v61
    %2075 = vmatprep.subr.mxu0 0.0
    %2076 = vmatpush1.msra.mxu0 %v62
    %2077 = vmatprep.subr.mxu0 0.0
    %2078 = vmatpush1.msra.mxu0 0.0
    %2079 = vmatprep.subr.mxu0 0.0
    %2080 = vmatpush1.msra.mxu0 0.0
    %2081 = vmatprep.subr.mxu0 0.0
    %2082 = vmatpush1.msra.mxu0 0.0
    %2083 = vmatprep.subr.mxu0 0.0
    %2084 = vmatpush1.msra.mxu0 0.0
    %2085 = vmatprep.subr.mxu0 0.0
    %2086 = vmatpush1.msra.mxu0 0.0
    %2087 = vmatprep.subr.mxu0 0.0
    %2088 = vmatpush1.msra.mxu0 0.0
    %2089 = vmatprep.subr.mxu0 0.0
    %2090 = vmatpush1.msra.mxu0 0.0
    %2091 = vmatprep.subr.mxu0 0.0
    %2092 = vmatpush1.msra.mxu0 0.0
    %2093 = vmatprep.subr.mxu0 0.0
    %2094 = vmatpush1.msra.mxu0 0.0
    %2095 = vmatprep.subr.mxu0 0.0
    %2096 = vmatpush1.msra.mxu0 0.0
    %2097 = vmatprep.subr.mxu0 0.0
    %2098 = vmatpush1.msra.mxu0 0.0
    %2099 = vmatprep.subr.mxu0 0.0
    %2100 = vmatpush1.msra.mxu0 0.0
    %2101 = vmatprep.subr.mxu0 0.0
    %2102 = vmatpush1.msra.mxu0 0.0
    %2103 = vmatprep.subr.mxu0 0.0
    %2104 = vmatpush1.msra.mxu0 0.0
    %2105 = vmatprep.subr.mxu0 0.0
    %2106 = vmatpush1.msra.mxu0 0.0
    %2107 = vmatprep.subr.mxu0 0.0
    %2108 = vmatpush1.msra.mxu0 0.0
    %2109 = vmatprep.subr.mxu0 0.0
    %2110 = vmatpush1.msra.mxu0 0.0
    %2111 = vmatprep.subr.mxu0 0.0
    %2112 = vmatpush1.msra.mxu0 0.0
    %2113 = vmatprep.subr.mxu0 0.0
    %2114 = vmatpush1.msra.mxu0 0.0
    %2115 = vmatprep.subr.mxu0 0.0
    %2116 = vmatpush1.msra.mxu0 0.0
    %2117 = vmatprep.subr.mxu0 0.0
    %2118 = vmatpush1.msra.mxu0 0.0
    %2119 = vmatprep.subr.mxu0 0.0
    %2120 = vmatpush1.msra.mxu0 0.0
    %2121 = vmatprep.subr.mxu0 0.0
    %2122 = vmatpush1.msra.mxu0 0.0
    %2123 = vmatprep.subr.mxu0 0.0
    %2124 = vmatpush1.msra.mxu0 0.0
    %2125 = vmatprep.subr.mxu0 0.0
    %2126 = vmatpush1.msra.mxu0 0.0
    %2127 = vmatprep.subr.mxu0 0.0
    %2128 = vmatpush1.msra.mxu0 0.0
    %2129 = vmatprep.subr.mxu0 0.0
    %2130 = vmatpush1.msra.mxu0 0.0
    %2131 = vmatprep.subr.mxu0 0.0
    %2132 = vmatpush1.msra.mxu0 0.0
    %2133 = vmatprep.mubr.f32.mxu0 0.0
    %2134 = vmatmul.mubr.f32.gmra.mrb[0].mxu0 %v2067
    %v2135 = vpop.f32.mrb[0].mxu0
    %v2136 = vadd.f32 0.0, %v2135
    %v2137 = vpop.f32.mrb[0].mxu0
    %2138 = vdwg.mxu0
    %v2140 = vrot.slane %v2136, 1
    %v2143 = vadd.f32 %v2061, %v2136
    %v2144 = vadd.f32 %v2062, %v2140
    %v2145 = vxor.u32 %v2143, 2147483648
    %v2146 = vxor.u32 %v2144, 2147483648
    %v2147 = vmul.f32 %v2145, 1.442695
    %v2148 = vpow.pop %v2147
    %v2149 = vmul.f32 %v2146, 1.442695
    %v2150 = vpow.pop %v2149
    %v2151 = vadd.f32 %v2148, 1.0
    %v2152 = vadd.f32 %v2150, 1.0
    %v2153 = vrcp.pop %v2151
    %v2154 = vmul.f32 1.0, %v2153
    %v2155 = vrcp.pop %v2152
    %v2156 = vmul.f32 1.0, %v2155
    %v2157 = vtanh.pop %v2143
    %v2158 = vtanh.pop %v2144
    %v2159 = vmul.f32 %v2154, %v2037
    %v2160 = vmul.f32 %v2156, %v2038
    %2163 = vrot.lane.b32.xlu0 %v2157, 64
    %v2164 = vpop.permute.xlu0 %2163
    %2165 = vrot.lane.b32.xlu0 %v2158, 64
    %v2166 = vpop.permute.xlu0 %2165
    %v2169 = vmul.f32 %v2154, %v2164
    %v2170 = vmul.f32 %v2156, %v2166
    %2173 = vrot.lane.b32.xlu0 %v2169, 32
    %v2174 = vpop.permute.xlu0 %2173
    %2175 = vrot.lane.b32.xlu0 %v2170, 32
    %v2176 = vpop.permute.xlu0 %2175
    %v2179 = vadd.f32 %v2159, %v2174
    %v2180 = vadd.f32 %v2160, %v2176
    %v2181 = vtanh.pop %v2179
    %v2182 = vtanh.pop %v2180
    %2185 = vrot.lane.b32.xlu0 %v2181, 64
    %v2186 = vpop.permute.xlu0 %2185
    %2187 = vrot.lane.b32.xlu0 %v2182, 64
    %v2188 = vpop.permute.xlu0 %2187
    %v2191 = vmul.f32 %v2154, %v2186
    %v2192 = vmul.f32 %v2156, %v2188
    %2195 = vrot.lane.b32.xlu0 %v2191, 32
    %v2196 = vpop.permute.xlu0 %2195
    %2197 = vrot.lane.b32.xlu0 %v2192, 32
    %v2198 = vpop.permute.xlu0 %2197
    %2201 = vst.msk [vmem:[#allocation9 + $0xe] sm:$0x1] %vm211, %v2196
    %2202 = vst.msk [vmem:[#allocation9 + $0x1e] sm:$0x1] %vm211, %v2198
    %v2203 = vld [vmem:[#allocation4 + $0xf] sm:$0x1]
    %v2204 = vld [vmem:[#allocation4 + $0x1f] sm:$0x1]
    %v2205 = vrot.slane %v2192, 7
    %v2206 = vsel %vm217, %v2205, %v2191
    %2207 = vrot.lane.b32.xlu0 %v2206, 32
    %v2208 = vpop.permute.xlu0 %2207
    %v2209 = vsel %vm67, %v2208, 0
    %2211 = vmatprep.subr.mxu0 0.0
    %2212 = vmatpush1.msra.mxu0 %v59
    %2213 = vmatprep.subr.mxu0 0.0
    %2214 = vmatpush1.msra.mxu0 %v60
    %2215 = vmatprep.subr.mxu0 0.0
    %2216 = vmatpush1.msra.mxu0 %v61
    %2217 = vmatprep.subr.mxu0 0.0
    %2218 = vmatpush1.msra.mxu0 %v62
    %2219 = vmatprep.subr.mxu0 0.0
    %2220 = vmatpush1.msra.mxu0 0.0
    %2221 = vmatprep.subr.mxu0 0.0
    %2222 = vmatpush1.msra.mxu0 0.0
    %2223 = vmatprep.subr.mxu0 0.0
    %2224 = vmatpush1.msra.mxu0 0.0
    %2225 = vmatprep.subr.mxu0 0.0
    %2226 = vmatpush1.msra.mxu0 0.0
    %2227 = vmatprep.subr.mxu0 0.0
    %2228 = vmatpush1.msra.mxu0 0.0
    %2229 = vmatprep.subr.mxu0 0.0
    %2230 = vmatpush1.msra.mxu0 0.0
    %2231 = vmatprep.subr.mxu0 0.0
    %2232 = vmatpush1.msra.mxu0 0.0
    %2233 = vmatprep.subr.mxu0 0.0
    %2234 = vmatpush1.msra.mxu0 0.0
    %2235 = vmatprep.subr.mxu0 0.0
    %2236 = vmatpush1.msra.mxu0 0.0
    %2237 = vmatprep.subr.mxu0 0.0
    %2238 = vmatpush1.msra.mxu0 0.0
    %2239 = vmatprep.subr.mxu0 0.0
    %2240 = vmatpush1.msra.mxu0 0.0
    %2241 = vmatprep.subr.mxu0 0.0
    %2242 = vmatpush1.msra.mxu0 0.0
    %2243 = vmatprep.subr.mxu0 0.0
    %2244 = vmatpush1.msra.mxu0 0.0
    %2245 = vmatprep.subr.mxu0 0.0
    %2246 = vmatpush1.msra.mxu0 0.0
    %2247 = vmatprep.subr.mxu0 0.0
    %2248 = vmatpush1.msra.mxu0 0.0
    %2249 = vmatprep.subr.mxu0 0.0
    %2250 = vmatpush1.msra.mxu0 0.0
    %2251 = vmatprep.subr.mxu0 0.0
    %2252 = vmatpush1.msra.mxu0 0.0
    %2253 = vmatprep.subr.mxu0 0.0
    %2254 = vmatpush1.msra.mxu0 0.0
    %2255 = vmatprep.subr.mxu0 0.0
    %2256 = vmatpush1.msra.mxu0 0.0
    %2257 = vmatprep.subr.mxu0 0.0
    %2258 = vmatpush1.msra.mxu0 0.0
    %2259 = vmatprep.subr.mxu0 0.0
    %2260 = vmatpush1.msra.mxu0 0.0
    %2261 = vmatprep.subr.mxu0 0.0
    %2262 = vmatpush1.msra.mxu0 0.0
    %2263 = vmatprep.subr.mxu0 0.0
    %2264 = vmatpush1.msra.mxu0 0.0
    %2265 = vmatprep.subr.mxu0 0.0
    %2266 = vmatpush1.msra.mxu0 0.0
    %2267 = vmatprep.subr.mxu0 0.0
    %2268 = vmatpush1.msra.mxu0 0.0
    %2269 = vmatprep.subr.mxu0 0.0
    %2270 = vmatpush1.msra.mxu0 0.0
    %2271 = vmatprep.subr.mxu0 0.0
    %2272 = vmatpush1.msra.mxu0 0.0
    %2273 = vmatprep.subr.mxu0 0.0
    %2274 = vmatpush1.msra.mxu0 0.0
    %2275 = vmatprep.mubr.f32.mxu0 0.0
    %2276 = vmatmul.mubr.f32.gmra.mrb[0].mxu0 %v2209
    %v2277 = vpop.f32.mrb[0].mxu0
    %v2278 = vadd.f32 0.0, %v2277
    %v2279 = vpop.f32.mrb[0].mxu0
    %2280 = vdwg.mxu0
    %v2282 = vrot.slane %v2278, 1
    %v2285 = vadd.f32 %v2203, %v2278
    %v2286 = vadd.f32 %v2204, %v2282
    %v2287 = vxor.u32 %v2285, 2147483648
    %v2288 = vxor.u32 %v2286, 2147483648
    %v2289 = vmul.f32 %v2287, 1.442695
    %v2290 = vpow.pop %v2289
    %v2291 = vmul.f32 %v2288, 1.442695
    %v2292 = vpow.pop %v2291
    %v2293 = vadd.f32 %v2290, 1.0
    %v2294 = vadd.f32 %v2292, 1.0
    %v2295 = vrcp.pop %v2293
    %v2296 = vmul.f32 1.0, %v2295
    %v2297 = vrcp.pop %v2294
    %v2298 = vmul.f32 1.0, %v2297
    %v2299 = vtanh.pop %v2285
    %v2300 = vtanh.pop %v2286
    %v2301 = vmul.f32 %v2296, %v2179
    %v2302 = vmul.f32 %v2298, %v2180
    %2305 = vrot.lane.b32.xlu0 %v2299, 64
    %v2306 = vpop.permute.xlu0 %2305
    %2307 = vrot.lane.b32.xlu0 %v2300, 64
    %v2308 = vpop.permute.xlu0 %2307
    %v2311 = vmul.f32 %v2296, %v2306
    %v2312 = vmul.f32 %v2298, %v2308
    %2315 = vrot.lane.b32.xlu0 %v2311, 32
    %v2316 = vpop.permute.xlu0 %2315
    %2317 = vrot.lane.b32.xlu0 %v2312, 32
    %v2318 = vpop.permute.xlu0 %2317
    %v2321 = vadd.f32 %v2301, %v2316
    %v2322 = vadd.f32 %v2302, %v2318
    %v2323 = vtanh.pop %v2321
    %v2324 = vtanh.pop %v2322
    %2327 = vrot.lane.b32.xlu0 %v2323, 64
    %v2328 = vpop.permute.xlu0 %2327
    %2329 = vrot.lane.b32.xlu0 %v2324, 64
    %v2330 = vpop.permute.xlu0 %2329
    %v2333 = vmul.f32 %v2296, %v2328
    %v2334 = vmul.f32 %v2298, %v2330
    %2337 = vrot.lane.b32.xlu0 %v2333, 32
    %v2338 = vpop.permute.xlu0 %2337
    %2339 = vrot.lane.b32.xlu0 %v2334, 32
    %v2340 = vpop.permute.xlu0 %2339
    %2343 = vst.msk [vmem:[#allocation9 + $0xf] sm:$0x1] %vm211, %v2338
    %2344 = vst.msk [vmem:[#allocation9 + $0x1f] sm:$0x1] %vm211, %v2340
    %v2345 = vrot.slane %v2334, 7
    %v2346 = vsel %vm217, %v2345, %v2333
    %2347 = vrot.lane.b32.xlu0 %v2346, 32
    %v2348 = vpop.permute.xlu0 %2347
    %vm2350 = vcmask 254976
    %2351 = vst.msk [vmem:[#allocation2] sm:$0x3] %vm2350, %v2348
    %v2354 = vrot.slane %v2322, 7
    %v2355 = vsel %vm217, %v2354, %v2321
    %2356 = vrot.lane.b32.xlu0 %v2355, 96
    %v2357 = vpop.permute.xlu0 %2356
    %2359 = vst.msk [vmem:[#allocation3] sm:$0x3] %vm2350, %v2357
    // Predicated region
    $region30: #{tpu_custom_call.1} parent=1 // pred_check
      %p2360 = pneg %p50
    $region31: #{tpu_custom_call.1} parent=1 // pred_check_branch
      %2362 = sbr.rel (%p2360) target = $region33
    $region32: #{tpu_custom_call.1} parent=1 // pred_region
      %2363 = vst.msk [vmem:[#allocation10] sm:$0x3] %vm2350, %v2348
      %2364 = vst.msk [vmem:[#allocation12] sm:$0x3] %vm2350, %v2357
    $region33: #{tpu_custom_call.1} parent=1 // pred_fallthru
      _
    // Predicated region
    $region34: #{tpu_custom_call.1} parent=1 // pred_check
      _
    $region35: #{tpu_custom_call.1} parent=1 // pred_check_branch
      %2366 = sbr.rel (0) target = $region37
    $region36: #{tpu_custom_call.1} parent=1 // pred_region
      %s2368 = ssub.s32 512, 512
      %2369 = vsyncadd [#allocation6], %s2368
      %s2370 = sshll.u32 [#allocation9], 4
      %s2371 = int_to_ptr.vmem [resolvable:$true] %s2370
      %2376 = dma.vmem_to_hbm [thread:$0]  %s2371, 512, %s4, [#allocation6], 128, 128, 8
    $region37: #{tpu_custom_call.1} parent=1 // pred_fallthru
      _
    // Predicated region
    $region38: #{tpu_custom_call.1} parent=1 // pred_check
      _
    $region39: #{tpu_custom_call.1} parent=1 // pred_check_branch
      %2378 = sbr.rel (0) target = $region41
    $region40: #{tpu_custom_call.1} parent=1 // pred_region
      %s2380 = ssub.s32 32, 32
      %2381 = vsyncadd [#allocation11], %s2380
      %s2383 = sshll.u32 [#allocation10], 4
      %s2384 = int_to_ptr.vmem [resolvable:$true] %s2383
      %2386 = dma.vmem_to_hbm [thread:$0]  %s2384, 32, %s5, [#allocation11]
    $region41: #{tpu_custom_call.1} parent=1 // pred_fallthru
      _
    // Predicated region
    $region42: #{tpu_custom_call.1} parent=1 // pred_check
      _
    $region43: #{tpu_custom_call.1} parent=1 // pred_check_branch
      %2388 = sbr.rel (0) target = $region45
    $region44: #{tpu_custom_call.1} parent=1 // pred_region
      %s2390 = ssub.s32 32, 32
      %2391 = vsyncadd [#allocation11], %s2390
      %s2393 = sshll.u32 [#allocation12], 4
      %s2394 = int_to_ptr.vmem [resolvable:$true] %s2393
      %2396 = dma.vmem_to_hbm [thread:$0]  %s2394, 32, %s6, [#allocation11]
    $region45: #{tpu_custom_call.1} parent=1 // pred_fallthru
      _
    // Predicated region
    $region46: #{tpu_custom_call.1} parent=1 // pred_check
      _
    $region47: #{tpu_custom_call.1} parent=1 // pred_check_branch
      %2398 = sbr.rel (0) target = $region49
    $region48: #{tpu_custom_call.1} parent=1 // pred_region
      %2399 = dma.done [#allocation6], 512
    $region49: #{tpu_custom_call.1} parent=1 // pred_fallthru
      _
    // Predicated region
    $region50: #{tpu_custom_call.1} parent=1 // pred_check
      _
    $region51: #{tpu_custom_call.1} parent=1 // pred_check_branch
      %2401 = sbr.rel (0) target = $region53
    $region52: #{tpu_custom_call.1} parent=1 // pred_region
      %2402 = dma.done [#allocation11], 32
    $region53: #{tpu_custom_call.1} parent=1 // pred_fallthru
      _
    // Predicated region
    $region54: #{tpu_custom_call.1} parent=1 // pred_check
      _
    $region55: #{tpu_custom_call.1} parent=1 // pred_check_branch
      %2404 = sbr.rel (0) target = $region57
    $region56: #{tpu_custom_call.1} parent=1 // pred_region
      %2405 = dma.done [#allocation11], 32
    $region57: #{tpu_custom_call.1} parent=1 // pred_fallthru
      _
    %2406 = vsyncpa [#allocation5], 1
    %2407 = vsyncpa [#allocation8], 1
    %2408 = vsyncpa [#allocation6], 1
    %2409 = vsyncpa [#allocation11], 1

</llo_original>
